<compile_context>
chip_gen: v7x
topology: tpu7x:2x2x1
jax: 0.10.0
libtpu: 0.0.40
codegen_flags: <defaults>
</compile_context>

<pallas_src>
import jax
import jax.numpy as jnp
from jax.experimental import pallas as pl
from jax.experimental.pallas import tpu as pltpu

EMB_DIM = 50      # embedding_dim of nn.Embedding / LSTM input size
HID = 50          # LSTM hidden size
GP = 128          # per-gate lane padding (lane-tile aligned gate slices)
NGATE = 4         # gates i, f, g, o (torch order)


def _sigmoid(x):
    # Exact identity sigmoid(x) = 0.5*(tanh(x/2)+1); tanh goes to the EUP slot.
    return 0.5 * (jnp.tanh(0.5 * x) + 1.0)


def _make_ranking_kernel(T, BB):
    """T: sequence length; BB: padded batch rows per grid block (multiple of 8)."""
    R = 3 * BB  # query / pos-doc / neg-doc rows stacked along sublanes

    def kernel(emb_ref, wih_ref, whh_ref, b_ref, hw_ref, lb_ref, out_ref):
        # emb_ref: (T*R, D)  rows ordered t-major, within a step [q ; pos ; neg]
        # wih_ref: (D, 4*GP) padded W_ih^T; whh_ref: (GP, 4*GP) padded W_hh^T
        # b_ref:   (1, 4*GP) padded (b_ih + b_hh)
        # hw_ref:  (GP, 2) head weights (col0 = query half, col1 = doc half)
        # lb_ref:  (1, 1) head bias;  out_ref: (BB, 1)
        whh = whh_ref[...]

        # Hoisted input projection + bias: one MXU op for all timesteps and all three
        # sequences, off the recurrence critical path.
        xw = (jnp.dot(emb_ref[...], wih_ref[...],
                      preferred_element_type=jnp.float32)
              + b_ref[...])                                   # (T*R, 4*GP)

        h = jnp.zeros((R, GP), jnp.float32)
        c = jnp.zeros((R, GP), jnp.float32)
        hsum = jnp.zeros((R, GP), jnp.float32)

        # Small static T -> unrolled python loop; LLO schedules across steps.
        # TODO(synk): switch to lax.fori_loop(..., unroll=True) if T grows large.
        for t in range(T):
            # t*R is a multiple of 8 (BB % 8 == 0) -> sublane-tile-aligned slice.
            gates = xw[t * R:(t + 1) * R, :] + jnp.dot(
                h, whh, preferred_element_type=jnp.float32)   # (R, 4*GP)
            # Gate slices are whole lane tiles (GP == 128).
            i = _sigmoid(gates[:, 0 * GP:1 * GP])
            f = _sigmoid(gates[:, 1 * GP:2 * GP])
            g = jnp.tanh(gates[:, 2 * GP:3 * GP])
            o = _sigmoid(gates[:, 3 * GP:4 * GP])
            c = f * c + i * g
            h = o * jnp.tanh(c)
            hsum = hsum + h
        hmean = hsum * (1.0 / T)      # padded hidden lanes [HID:GP] stay exactly 0

        # Pairwise head: one (R, GP) @ (GP, 2) MXU op; the query projection (col 0)
        # is computed once and reused for both scores.
        proj = jnp.dot(hmean, hw_ref[...], preferred_element_type=jnp.float32)
        lb = lb_ref[...]                              # (1, 1), broadcasts
        q_s = proj[0 * BB:1 * BB, 0:1]                # query @ W[:, :HID]
        p_s = proj[1 * BB:2 * BB, 1:2]                # pos   @ W[:, HID:]
        n_s = proj[2 * BB:3 * BB, 1:2]                # neg   @ W[:, HID:]
        pos_score = jnp.maximum(q_s + p_s + lb, 0.0)
        neg_score = jnp.maximum(q_s + n_s + lb, 0.0)
        out_ref[...] = pos_score - neg_score

    return kernel


def _round_up(x, m):
    return (x + m - 1) // m * m


def _pick_batch_block(b_pad):
    # Capped at 64 so the hoisted xw (T*3BB, 512) stays comfortably inside VMEM
    # even on v7x (64 MiB) and leaves headroom for input double-buffering.
    for bb in (64, 32, 16, 8):
        if b_pad % bb == 0:
            return bb
    return b_pad


@jax.jit
def ranking_model_forward(params, qry_tokens, pos_doc_tokens, neg_doc_tokens):
    # --- glue: embedding lookup (gather) stays in plain JAX ---
    emb_tbl = params["embedding"]
    q_emb = jnp.take(emb_tbl, qry_tokens, axis=0)        # (B, T, D)
    p_emb = jnp.take(emb_tbl, pos_doc_tokens, axis=0)    # (B, T, D)
    n_emb = jnp.take(emb_tbl, neg_doc_tokens, axis=0)    # (B, T, D)

    B, T, D = q_emb.shape
    # Stacked kernel requires query/doc sequences padded to the same length.
    assert p_emb.shape[1] == T and n_emb.shape[1] == T

    b_pad = _round_up(B, 8)
    BB = _pick_batch_block(b_pad)
    nb = b_pad // BB
    R = 3 * BB

    # Wrapper-side layout plumbing (XLA): pad batch to a multiple of 8, make time the
    # leading axis, interleave q/pos/neg per batch block -> each grid step gets one
    # contiguous (T*3BB, D) slab and the kernel does zero relayouts.
    def prep(e):
        e = jnp.pad(e, ((0, b_pad - B), (0, 0), (0, 0)))
        return e.reshape(nb, BB, T, D).transpose(0, 2, 1, 3)   # (nb, T, BB, D)

    stacked = jnp.concatenate([prep(q_emb), prep(p_emb), prep(n_emb)], axis=2)
    stacked = stacked.reshape(nb, T * R, D)                    # (nb, T*3BB, D)

    out = pl.pallas_call(
        _make_ranking_kernel(T, BB),
        out_shape=jax.ShapeDtypeStruct((b_pad, 1), jnp.float32),
        grid=(nb,),
        in_specs=[
            pl.BlockSpec((None, T * R, D), lambda b: (b, 0, 0)),   # stacked sequences
            pl.BlockSpec((D, NGATE * GP), lambda b: (0, 0)),       # W_ih^T (padded)
            pl.BlockSpec((GP, NGATE * GP), lambda b: (0, 0)),      # W_hh^T (padded)
            pl.BlockSpec((1, NGATE * GP), lambda b: (0, 0)),       # gate bias (padded)
            pl.BlockSpec((GP, 2), lambda b: (0, 0)),               # head weight
            pl.BlockSpec((1, 1), lambda b: (0, 0)),                # head bias
        ],
        out_specs=pl.BlockSpec((BB, 1), lambda b: (b, 0)),
        compiler_params=pltpu.CompilerParams(
            dimension_semantics=("parallel",)),     # batch grid -> megacore on v7x
    )(stacked, params["wih"], params["whh"], params["bias"],
      params["head_w"], params["head_b"])
    return out[:B]


def init_params(key, vocab_size, pad_idx=1):
    """Raw parameters with the shapes nn.Embedding / nn.LSTM / nn.Linear imply."""
    ks = jax.random.split(key, 6)
    emb = jax.random.normal(ks[0], (vocab_size, EMB_DIM), jnp.float32)
    emb = emb.at[pad_idx].set(0.0)                        # padding_idx row is zero

    bound = 1.0 / jnp.sqrt(HID)
    w_ih = jax.random.uniform(ks[1], (4 * HID, EMB_DIM), jnp.float32, -bound, bound)
    w_hh = jax.random.uniform(ks[2], (4 * HID, HID), jnp.float32, -bound, bound)
    b_ih = jax.random.uniform(ks[3], (4 * HID,), jnp.float32, -bound, bound)
    b_hh = jax.random.uniform(ks[4], (4 * HID,), jnp.float32, -bound, bound)

    lin_bound = 1.0 / jnp.sqrt(2 * HID)
    lin_w = jax.random.uniform(ks[5], (1, 2 * HID), jnp.float32, -lin_bound, lin_bound)
    lin_b = jnp.array([0.01], jnp.float32)

    return {"embedding": emb, "w_ih": w_ih, "w_hh": w_hh,
            "b_ih": b_ih, "b_hh": b_hh, "lin_w": lin_w, "lin_b": lin_b}


def pack_params(raw):
    """Repack into the lane-aligned layout the kernel consumes (gate width 50 -> 128)."""
    b = raw["b_ih"] + raw["b_hh"]
    wih = jnp.zeros((EMB_DIM, NGATE * GP), jnp.float32)
    whh = jnp.zeros((GP, NGATE * GP), jnp.float32)
    bias = jnp.zeros((1, NGATE * GP), jnp.float32)
    for k in range(NGATE):                                # torch gate order: i, f, g, o
        wih = wih.at[:, k * GP:k * GP + HID].set(
            raw["w_ih"][k * HID:(k + 1) * HID, :].T)
        whh = whh.at[:HID, k * GP:k * GP + HID].set(
            raw["w_hh"][k * HID:(k + 1) * HID, :].T)
        bias = bias.at[0, k * GP:k * GP + HID].set(b[k * HID:(k + 1) * HID])
    head_w = jnp.zeros((GP, 2), jnp.float32)
    head_w = head_w.at[:HID, 0].set(raw["lin_w"][0, :HID])    # query half
    head_w = head_w.at[:HID, 1].set(raw["lin_w"][0, HID:])    # doc half
    return {"embedding": raw["embedding"], "wih": wih, "whh": whh, "bias": bias,
            "head_w": head_w, "head_b": raw["lin_b"].reshape(1, 1)}


def _reference_forward(raw, q_tok, p_tok, n_tok):
    """Pure-JAX reference replicating the torch module (no Pallas, raw weights)."""
    emb_tbl = raw["embedding"]
    w_ih, w_hh = raw["w_ih"], raw["w_hh"]
    b = raw["b_ih"] + raw["b_hh"]

    def lstm_mean(emb):
        B, T, _ = emb.shape
        h = jnp.zeros((B, HID)); c = jnp.zeros((B, HID)); hs = jnp.zeros((B, HID))
        for t in range(T):
            g = emb[:, t, :] @ w_ih.T + h @ w_hh.T + b
            i = jax.nn.sigmoid(g[:, :HID]); f = jax.nn.sigmoid(g[:, HID:2 * HID])
            gg = jnp.tanh(g[:, 2 * HID:3 * HID]); o = jax.nn.sigmoid(g[:, 3 * HID:])
            c = f * c + i * gg
            h = o * jnp.tanh(c)
            hs = hs + h
        return hs / T

    oq = lstm_mean(jnp.take(emb_tbl, q_tok, axis=0))
    op = lstm_mean(jnp.take(emb_tbl, p_tok, axis=0))
    on = lstm_mean(jnp.take(emb_tbl, n_tok, axis=0))
    lin_w, lin_b = raw["lin_w"], raw["lin_b"]
    ps = jax.nn.relu(jnp.concatenate([oq, op], 1) @ lin_w.T + lin_b)
    ns = jax.nn.relu(jnp.concatenate([oq, on], 1) @ lin_w.T + lin_b)
    return ps - ns


if __name__ == "__main__":
    key = jax.random.PRNGKey(0)
    k_param, k_q, k_p, k_n = jax.random.split(key, 4)

    vocab_size = 20
    B, Tq, Td = 2, 8, 8

    raw = init_params(k_param, vocab_size, pad_idx=1)
    params = pack_params(raw)

    qry_tokens = jax.random.randint(k_q, (B, Tq), 0, vocab_size, dtype=jnp.int32)
    pos_doc_tokens = jax.random.randint(k_p, (B, Td), 0, vocab_size, dtype=jnp.int32)
    neg_doc_tokens = jax.random.randint(k_n, (B, Td), 0, vocab_size, dtype=jnp.int32)

    diff = ranking_model_forward(params, qry_tokens, pos_doc_tokens, neg_doc_tokens)
    diff = jax.block_until_ready(diff)

    ref = _reference_forward(raw, qry_tokens, pos_doc_tokens, neg_doc_tokens)
    assert diff.shape == (B, 1), diff.shape
    assert jnp.allclose(diff, ref, atol=1e-4, rtol=1e-4), (diff, ref)

    print("KERNEL_OK")
</pallas_src>

<mosaic_0001>
module attributes {stable_mosaic.version = 11 : i64} {
  func.func @kernel(%arg0: i32, %arg1: memref<1x192x50xf32, #tpu.memory_space<vmem>>, %arg2: memref<50x512xf32, #tpu.memory_space<vmem>>, %arg3: memref<128x512xf32, #tpu.memory_space<vmem>>, %arg4: memref<1x512xf32, #tpu.memory_space<vmem>>, %arg5: memref<128x2xf32, #tpu.memory_space<vmem>>, %arg6: memref<1x1xf32, #tpu.memory_space<vmem>>, %arg7: memref<8x1xf32, #tpu.memory_space<vmem>>) attributes {dimension_semantics = [#tpu.dimension_semantics<parallel>], iteration_bounds = array<i64: 1>, scalar_prefetch = 0 : i64, scratch_operands = 0 : i64, tpu.core_type = #tpu.core_type<tc>, window_params = [{transform_indices = @transform_0, window_bounds = array<i64: 1, 192, 50>}, {pipeline_mode = #tpu.pipeline_mode<synchronous>, transform_indices = @transform_1, window_bounds = array<i64: 50, 512>}, {pipeline_mode = #tpu.pipeline_mode<synchronous>, transform_indices = @transform_2, window_bounds = array<i64: 128, 512>}, {pipeline_mode = #tpu.pipeline_mode<synchronous>, transform_indices = @transform_3, window_bounds = array<i64: 1, 512>}, {pipeline_mode = #tpu.pipeline_mode<synchronous>, transform_indices = @transform_4, window_bounds = array<i64: 128, 2>}, {pipeline_mode = #tpu.pipeline_mode<synchronous>, transform_indices = @transform_5, window_bounds = array<i64: 1, 1>}, {transform_indices = @transform_6, window_bounds = array<i64: 8, 1>}]} {
    %c0 = arith.constant 0 : index
    %c0_0 = arith.constant 0 : index
    %0 = vector.load %arg3[%c0, %c0_0] : memref<128x512xf32, #tpu.memory_space<vmem>>, vector<128x512xf32>
    %c0_1 = arith.constant 0 : index
    %c0_2 = arith.constant 0 : index
    %c0_3 = arith.constant 0 : index
    %1 = vector.load %arg1[%c0_1, %c0_2, %c0_3] : memref<1x192x50xf32, #tpu.memory_space<vmem>>, vector<1x192x50xf32>
    %2 = vector.shape_cast %1 : vector<1x192x50xf32> to vector<192x50xf32>
    %c0_4 = arith.constant 0 : index
    %c0_5 = arith.constant 0 : index
    %3 = vector.load %arg2[%c0_4, %c0_5] : memref<50x512xf32, #tpu.memory_space<vmem>>, vector<50x512xf32>
    %cst = arith.constant dense<0.000000e+00> : vector<192x512xf32>
    %4 = tpu.matmul %2, %3, %cst {dimension_numbers = #tpu.dot_dimension_numbers<[1], [0], [0], [1], [0, 0, 1, 1], [], []>} : vector<192x50xf32>, vector<50x512xf32>, vector<192x512xf32> -> vector<192x512xf32>
    %c0_6 = arith.constant 0 : index
    %c0_7 = arith.constant 0 : index
    %5 = vector.load %arg4[%c0_6, %c0_7] : memref<1x512xf32, #tpu.memory_space<vmem>>, vector<1x512xf32>
    %6 = vector.broadcast %5 : vector<1x512xf32> to vector<192x512xf32>
    %7 = arith.addf %4, %6 : vector<192x512xf32>
    %cst_8 = arith.constant 0.000000e+00 : f32
    %8 = vector.broadcast %cst_8 : f32 to vector<24x128xf32>
    %cst_9 = arith.constant 0.000000e+00 : f32
    %9 = vector.broadcast %cst_9 : f32 to vector<24x128xf32>
    %cst_10 = arith.constant 0.000000e+00 : f32
    %10 = vector.broadcast %cst_10 : f32 to vector<24x128xf32>
    %11 = vector.extract_strided_slice %7 {offsets = [0, 0], sizes = [24, 512], strides = [1, 1]} : vector<192x512xf32> to vector<24x512xf32>
    %cst_11 = arith.constant dense<0.000000e+00> : vector<24x512xf32>
    %12 = tpu.matmul %8, %0, %cst_11 {dimension_numbers = #tpu.dot_dimension_numbers<[1], [0], [0], [1], [0, 0, 1, 1], [], []>} : vector<24x128xf32>, vector<128x512xf32>, vector<24x512xf32> -> vector<24x512xf32>
    %13 = arith.addf %11, %12 : vector<24x512xf32>
    %14 = vector.extract_strided_slice %13 {offsets = [0, 0], sizes = [24, 128], strides = [1, 1]} : vector<24x512xf32> to vector<24x128xf32>
    %cst_12 = arith.constant 5.000000e-01 : f32
    %15 = vector.broadcast %cst_12 : f32 to vector<24x128xf32>
    %16 = arith.mulf %15, %14 : vector<24x128xf32>
    %17 = math.tanh %16 : vector<24x128xf32>
    %cst_13 = arith.constant 1.000000e+00 : f32
    %18 = vector.broadcast %cst_13 : f32 to vector<24x128xf32>
    %19 = arith.addf %17, %18 : vector<24x128xf32>
    %cst_14 = arith.constant 5.000000e-01 : f32
    %20 = vector.broadcast %cst_14 : f32 to vector<24x128xf32>
    %21 = arith.mulf %20, %19 : vector<24x128xf32>
    %22 = vector.extract_strided_slice %13 {offsets = [0, 128], sizes = [24, 128], strides = [1, 1]} : vector<24x512xf32> to vector<24x128xf32>
    %cst_15 = arith.constant 5.000000e-01 : f32
    %23 = vector.broadcast %cst_15 : f32 to vector<24x128xf32>
    %24 = arith.mulf %23, %22 : vector<24x128xf32>
    %25 = math.tanh %24 : vector<24x128xf32>
    %cst_16 = arith.constant 1.000000e+00 : f32
    %26 = vector.broadcast %cst_16 : f32 to vector<24x128xf32>
    %27 = arith.addf %25, %26 : vector<24x128xf32>
    %cst_17 = arith.constant 5.000000e-01 : f32
    %28 = vector.broadcast %cst_17 : f32 to vector<24x128xf32>
    %29 = arith.mulf %28, %27 : vector<24x128xf32>
    %30 = vector.extract_strided_slice %13 {offsets = [0, 256], sizes = [24, 128], strides = [1, 1]} : vector<24x512xf32> to vector<24x128xf32>
    %31 = math.tanh %30 : vector<24x128xf32>
    %32 = vector.extract_strided_slice %13 {offsets = [0, 384], sizes = [24, 128], strides = [1, 1]} : vector<24x512xf32> to vector<24x128xf32>
    %cst_18 = arith.constant 5.000000e-01 : f32
    %33 = vector.broadcast %cst_18 : f32 to vector<24x128xf32>
    %34 = arith.mulf %33, %32 : vector<24x128xf32>
    %35 = math.tanh %34 : vector<24x128xf32>
    %cst_19 = arith.constant 1.000000e+00 : f32
    %36 = vector.broadcast %cst_19 : f32 to vector<24x128xf32>
    %37 = arith.addf %35, %36 : vector<24x128xf32>
    %cst_20 = arith.constant 5.000000e-01 : f32
    %38 = vector.broadcast %cst_20 : f32 to vector<24x128xf32>
    %39 = arith.mulf %38, %37 : vector<24x128xf32>
    %40 = arith.mulf %29, %9 : vector<24x128xf32>
    %41 = arith.mulf %21, %31 : vector<24x128xf32>
    %42 = arith.addf %40, %41 : vector<24x128xf32>
    %43 = math.tanh %42 : vector<24x128xf32>
    %44 = arith.mulf %39, %43 : vector<24x128xf32>
    %45 = arith.addf %10, %44 : vector<24x128xf32>
    %46 = vector.extract_strided_slice %7 {offsets = [24, 0], sizes = [24, 512], strides = [1, 1]} : vector<192x512xf32> to vector<24x512xf32>
    %cst_21 = arith.constant dense<0.000000e+00> : vector<24x512xf32>
    %47 = tpu.matmul %44, %0, %cst_21 {dimension_numbers = #tpu.dot_dimension_numbers<[1], [0], [0], [1], [0, 0, 1, 1], [], []>} : vector<24x128xf32>, vector<128x512xf32>, vector<24x512xf32> -> vector<24x512xf32>
    %48 = arith.addf %46, %47 : vector<24x512xf32>
    %49 = vector.extract_strided_slice %48 {offsets = [0, 0], sizes = [24, 128], strides = [1, 1]} : vector<24x512xf32> to vector<24x128xf32>
    %cst_22 = arith.constant 5.000000e-01 : f32
    %50 = vector.broadcast %cst_22 : f32 to vector<24x128xf32>
    %51 = arith.mulf %50, %49 : vector<24x128xf32>
    %52 = math.tanh %51 : vector<24x128xf32>
    %cst_23 = arith.constant 1.000000e+00 : f32
    %53 = vector.broadcast %cst_23 : f32 to vector<24x128xf32>
    %54 = arith.addf %52, %53 : vector<24x128xf32>
    %cst_24 = arith.constant 5.000000e-01 : f32
    %55 = vector.broadcast %cst_24 : f32 to vector<24x128xf32>
    %56 = arith.mulf %55, %54 : vector<24x128xf32>
    %57 = vector.extract_strided_slice %48 {offsets = [0, 128], sizes = [24, 128], strides = [1, 1]} : vector<24x512xf32> to vector<24x128xf32>
    %cst_25 = arith.constant 5.000000e-01 : f32
    %58 = vector.broadcast %cst_25 : f32 to vector<24x128xf32>
    %59 = arith.mulf %58, %57 : vector<24x128xf32>
    %60 = math.tanh %59 : vector<24x128xf32>
    %cst_26 = arith.constant 1.000000e+00 : f32
    %61 = vector.broadcast %cst_26 : f32 to vector<24x128xf32>
    %62 = arith.addf %60, %61 : vector<24x128xf32>
    %cst_27 = arith.constant 5.000000e-01 : f32
    %63 = vector.broadcast %cst_27 : f32 to vector<24x128xf32>
    %64 = arith.mulf %63, %62 : vector<24x128xf32>
    %65 = vector.extract_strided_slice %48 {offsets = [0, 256], sizes = [24, 128], strides = [1, 1]} : vector<24x512xf32> to vector<24x128xf32>
    %66 = math.tanh %65 : vector<24x128xf32>
    %67 = vector.extract_strided_slice %48 {offsets = [0, 384], sizes = [24, 128], strides = [1, 1]} : vector<24x512xf32> to vector<24x128xf32>
    %cst_28 = arith.constant 5.000000e-01 : f32
    %68 = vector.broadcast %cst_28 : f32 to vector<24x128xf32>
    %69 = arith.mulf %68, %67 : vector<24x128xf32>
    %70 = math.tanh %69 : vector<24x128xf32>
    %cst_29 = arith.constant 1.000000e+00 : f32
    %71 = vector.broadcast %cst_29 : f32 to vector<24x128xf32>
    %72 = arith.addf %70, %71 : vector<24x128xf32>
    %cst_30 = arith.constant 5.000000e-01 : f32
    %73 = vector.broadcast %cst_30 : f32 to vector<24x128xf32>
    %74 = arith.mulf %73, %72 : vector<24x128xf32>
    %75 = arith.mulf %64, %42 : vector<24x128xf32>
    %76 = arith.mulf %56, %66 : vector<24x128xf32>
    %77 = arith.addf %75, %76 : vector<24x128xf32>
    %78 = math.tanh %77 : vector<24x128xf32>
    %79 = arith.mulf %74, %78 : vector<24x128xf32>
    %80 = arith.addf %45, %79 : vector<24x128xf32>
    %81 = vector.extract_strided_slice %7 {offsets = [48, 0], sizes = [24, 512], strides = [1, 1]} : vector<192x512xf32> to vector<24x512xf32>
    %cst_31 = arith.constant dense<0.000000e+00> : vector<24x512xf32>
    %82 = tpu.matmul %79, %0, %cst_31 {dimension_numbers = #tpu.dot_dimension_numbers<[1], [0], [0], [1], [0, 0, 1, 1], [], []>} : vector<24x128xf32>, vector<128x512xf32>, vector<24x512xf32> -> vector<24x512xf32>
    %83 = arith.addf %81, %82 : vector<24x512xf32>
    %84 = vector.extract_strided_slice %83 {offsets = [0, 0], sizes = [24, 128], strides = [1, 1]} : vector<24x512xf32> to vector<24x128xf32>
    %cst_32 = arith.constant 5.000000e-01 : f32
    %85 = vector.broadcast %cst_32 : f32 to vector<24x128xf32>
    %86 = arith.mulf %85, %84 : vector<24x128xf32>
    %87 = math.tanh %86 : vector<24x128xf32>
    %cst_33 = arith.constant 1.000000e+00 : f32
    %88 = vector.broadcast %cst_33 : f32 to vector<24x128xf32>
    %89 = arith.addf %87, %88 : vector<24x128xf32>
    %cst_34 = arith.constant 5.000000e-01 : f32
    %90 = vector.broadcast %cst_34 : f32 to vector<24x128xf32>
    %91 = arith.mulf %90, %89 : vector<24x128xf32>
    %92 = vector.extract_strided_slice %83 {offsets = [0, 128], sizes = [24, 128], strides = [1, 1]} : vector<24x512xf32> to vector<24x128xf32>
    %cst_35 = arith.constant 5.000000e-01 : f32
    %93 = vector.broadcast %cst_35 : f32 to vector<24x128xf32>
    %94 = arith.mulf %93, %92 : vector<24x128xf32>
    %95 = math.tanh %94 : vector<24x128xf32>
    %cst_36 = arith.constant 1.000000e+00 : f32
    %96 = vector.broadcast %cst_36 : f32 to vector<24x128xf32>
    %97 = arith.addf %95, %96 : vector<24x128xf32>
    %cst_37 = arith.constant 5.000000e-01 : f32
    %98 = vector.broadcast %cst_37 : f32 to vector<24x128xf32>
    %99 = arith.mulf %98, %97 : vector<24x128xf32>
    %100 = vector.extract_strided_slice %83 {offsets = [0, 256], sizes = [24, 128], strides = [1, 1]} : vector<24x512xf32> to vector<24x128xf32>
    %101 = math.tanh %100 : vector<24x128xf32>
    %102 = vector.extract_strided_slice %83 {offsets = [0, 384], sizes = [24, 128], strides = [1, 1]} : vector<24x512xf32> to vector<24x128xf32>
    %cst_38 = arith.constant 5.000000e-01 : f32
    %103 = vector.broadcast %cst_38 : f32 to vector<24x128xf32>
    %104 = arith.mulf %103, %102 : vector<24x128xf32>
    %105 = math.tanh %104 : vector<24x128xf32>
    %cst_39 = arith.constant 1.000000e+00 : f32
    %106 = vector.broadcast %cst_39 : f32 to vector<24x128xf32>
    %107 = arith.addf %105, %106 : vector<24x128xf32>
    %cst_40 = arith.constant 5.000000e-01 : f32
    %108 = vector.broadcast %cst_40 : f32 to vector<24x128xf32>
    %109 = arith.mulf %108, %107 : vector<24x128xf32>
    %110 = arith.mulf %99, %77 : vector<24x128xf32>
    %111 = arith.mulf %91, %101 : vector<24x128xf32>
    %112 = arith.addf %110, %111 : vector<24x128xf32>
    %113 = math.tanh %112 : vector<24x128xf32>
    %114 = arith.mulf %109, %113 : vector<24x128xf32>
    %115 = arith.addf %80, %114 : vector<24x128xf32>
    %116 = vector.extract_strided_slice %7 {offsets = [72, 0], sizes = [24, 512], strides = [1, 1]} : vector<192x512xf32> to vector<24x512xf32>
    %cst_41 = arith.constant dense<0.000000e+00> : vector<24x512xf32>
    %117 = tpu.matmul %114, %0, %cst_41 {dimension_numbers = #tpu.dot_dimension_numbers<[1], [0], [0], [1], [0, 0, 1, 1], [], []>} : vector<24x128xf32>, vector<128x512xf32>, vector<24x512xf32> -> vector<24x512xf32>
    %118 = arith.addf %116, %117 : vector<24x512xf32>
    %119 = vector.extract_strided_slice %118 {offsets = [0, 0], sizes = [24, 128], strides = [1, 1]} : vector<24x512xf32> to vector<24x128xf32>
    %cst_42 = arith.constant 5.000000e-01 : f32
    %120 = vector.broadcast %cst_42 : f32 to vector<24x128xf32>
    %121 = arith.mulf %120, %119 : vector<24x128xf32>
    %122 = math.tanh %121 : vector<24x128xf32>
    %cst_43 = arith.constant 1.000000e+00 : f32
    %123 = vector.broadcast %cst_43 : f32 to vector<24x128xf32>
    %124 = arith.addf %122, %123 : vector<24x128xf32>
    %cst_44 = arith.constant 5.000000e-01 : f32
    %125 = vector.broadcast %cst_44 : f32 to vector<24x128xf32>
    %126 = arith.mulf %125, %124 : vector<24x128xf32>
    %127 = vector.extract_strided_slice %118 {offsets = [0, 128], sizes = [24, 128], strides = [1, 1]} : vector<24x512xf32> to vector<24x128xf32>
    %cst_45 = arith.constant 5.000000e-01 : f32
    %128 = vector.broadcast %cst_45 : f32 to vector<24x128xf32>
    %129 = arith.mulf %128, %127 : vector<24x128xf32>
    %130 = math.tanh %129 : vector<24x128xf32>
    %cst_46 = arith.constant 1.000000e+00 : f32
    %131 = vector.broadcast %cst_46 : f32 to vector<24x128xf32>
    %132 = arith.addf %130, %131 : vector<24x128xf32>
    %cst_47 = arith.constant 5.000000e-01 : f32
    %133 = vector.broadcast %cst_47 : f32 to vector<24x128xf32>
    %134 = arith.mulf %133, %132 : vector<24x128xf32>
    %135 = vector.extract_strided_slice %118 {offsets = [0, 256], sizes = [24, 128], strides = [1, 1]} : vector<24x512xf32> to vector<24x128xf32>
    %136 = math.tanh %135 : vector<24x128xf32>
    %137 = vector.extract_strided_slice %118 {offsets = [0, 384], sizes = [24, 128], strides = [1, 1]} : vector<24x512xf32> to vector<24x128xf32>
    %cst_48 = arith.constant 5.000000e-01 : f32
    %138 = vector.broadcast %cst_48 : f32 to vector<24x128xf32>
    %139 = arith.mulf %138, %137 : vector<24x128xf32>
    %140 = math.tanh %139 : vector<24x128xf32>
    %cst_49 = arith.constant 1.000000e+00 : f32
    %141 = vector.broadcast %cst_49 : f32 to vector<24x128xf32>
    %142 = arith.addf %140, %141 : vector<24x128xf32>
    %cst_50 = arith.constant 5.000000e-01 : f32
    %143 = vector.broadcast %cst_50 : f32 to vector<24x128xf32>
    %144 = arith.mulf %143, %142 : vector<24x128xf32>
    %145 = arith.mulf %134, %112 : vector<24x128xf32>
    %146 = arith.mulf %126, %136 : vector<24x128xf32>
    %147 = arith.addf %145, %146 : vector<24x128xf32>
    %148 = math.tanh %147 : vector<24x128xf32>
    %149 = arith.mulf %144, %148 : vector<24x128xf32>
    %150 = arith.addf %115, %149 : vector<24x128xf32>
    %151 = vector.extract_strided_slice %7 {offsets = [96, 0], sizes = [24, 512], strides = [1, 1]} : vector<192x512xf32> to vector<24x512xf32>
    %cst_51 = arith.constant dense<0.000000e+00> : vector<24x512xf32>
    %152 = tpu.matmul %149, %0, %cst_51 {dimension_numbers = #tpu.dot_dimension_numbers<[1], [0], [0], [1], [0, 0, 1, 1], [], []>} : vector<24x128xf32>, vector<128x512xf32>, vector<24x512xf32> -> vector<24x512xf32>
    %153 = arith.addf %151, %152 : vector<24x512xf32>
    %154 = vector.extract_strided_slice %153 {offsets = [0, 0], sizes = [24, 128], strides = [1, 1]} : vector<24x512xf32> to vector<24x128xf32>
    %cst_52 = arith.constant 5.000000e-01 : f32
    %155 = vector.broadcast %cst_52 : f32 to vector<24x128xf32>
    %156 = arith.mulf %155, %154 : vector<24x128xf32>
    %157 = math.tanh %156 : vector<24x128xf32>
    %cst_53 = arith.constant 1.000000e+00 : f32
    %158 = vector.broadcast %cst_53 : f32 to vector<24x128xf32>
    %159 = arith.addf %157, %158 : vector<24x128xf32>
    %cst_54 = arith.constant 5.000000e-01 : f32
    %160 = vector.broadcast %cst_54 : f32 to vector<24x128xf32>
    %161 = arith.mulf %160, %159 : vector<24x128xf32>
    %162 = vector.extract_strided_slice %153 {offsets = [0, 128], sizes = [24, 128], strides = [1, 1]} : vector<24x512xf32> to vector<24x128xf32>
    %cst_55 = arith.constant 5.000000e-01 : f32
    %163 = vector.broadcast %cst_55 : f32 to vector<24x128xf32>
    %164 = arith.mulf %163, %162 : vector<24x128xf32>
    %165 = math.tanh %164 : vector<24x128xf32>
    %cst_56 = arith.constant 1.000000e+00 : f32
    %166 = vector.broadcast %cst_56 : f32 to vector<24x128xf32>
    %167 = arith.addf %165, %166 : vector<24x128xf32>
    %cst_57 = arith.constant 5.000000e-01 : f32
    %168 = vector.broadcast %cst_57 : f32 to vector<24x128xf32>
    %169 = arith.mulf %168, %167 : vector<24x128xf32>
    %170 = vector.extract_strided_slice %153 {offsets = [0, 256], sizes = [24, 128], strides = [1, 1]} : vector<24x512xf32> to vector<24x128xf32>
    %171 = math.tanh %170 : vector<24x128xf32>
    %172 = vector.extract_strided_slice %153 {offsets = [0, 384], sizes = [24, 128], strides = [1, 1]} : vector<24x512xf32> to vector<24x128xf32>
    %cst_58 = arith.constant 5.000000e-01 : f32
    %173 = vector.broadcast %cst_58 : f32 to vector<24x128xf32>
    %174 = arith.mulf %173, %172 : vector<24x128xf32>
    %175 = math.tanh %174 : vector<24x128xf32>
    %cst_59 = arith.constant 1.000000e+00 : f32
    %176 = vector.broadcast %cst_59 : f32 to vector<24x128xf32>
    %177 = arith.addf %175, %176 : vector<24x128xf32>
    %cst_60 = arith.constant 5.000000e-01 : f32
    %178 = vector.broadcast %cst_60 : f32 to vector<24x128xf32>
    %179 = arith.mulf %178, %177 : vector<24x128xf32>
    %180 = arith.mulf %169, %147 : vector<24x128xf32>
    %181 = arith.mulf %161, %171 : vector<24x128xf32>
    %182 = arith.addf %180, %181 : vector<24x128xf32>
    %183 = math.tanh %182 : vector<24x128xf32>
    %184 = arith.mulf %179, %183 : vector<24x128xf32>
    %185 = arith.addf %150, %184 : vector<24x128xf32>
    %186 = vector.extract_strided_slice %7 {offsets = [120, 0], sizes = [24, 512], strides = [1, 1]} : vector<192x512xf32> to vector<24x512xf32>
    %cst_61 = arith.constant dense<0.000000e+00> : vector<24x512xf32>
    %187 = tpu.matmul %184, %0, %cst_61 {dimension_numbers = #tpu.dot_dimension_numbers<[1], [0], [0], [1], [0, 0, 1, 1], [], []>} : vector<24x128xf32>, vector<128x512xf32>, vector<24x512xf32> -> vector<24x512xf32>
    %188 = arith.addf %186, %187 : vector<24x512xf32>
    %189 = vector.extract_strided_slice %188 {offsets = [0, 0], sizes = [24, 128], strides = [1, 1]} : vector<24x512xf32> to vector<24x128xf32>
    %cst_62 = arith.constant 5.000000e-01 : f32
    %190 = vector.broadcast %cst_62 : f32 to vector<24x128xf32>
    %191 = arith.mulf %190, %189 : vector<24x128xf32>
    %192 = math.tanh %191 : vector<24x128xf32>
    %cst_63 = arith.constant 1.000000e+00 : f32
    %193 = vector.broadcast %cst_63 : f32 to vector<24x128xf32>
    %194 = arith.addf %192, %193 : vector<24x128xf32>
    %cst_64 = arith.constant 5.000000e-01 : f32
    %195 = vector.broadcast %cst_64 : f32 to vector<24x128xf32>
    %196 = arith.mulf %195, %194 : vector<24x128xf32>
    %197 = vector.extract_strided_slice %188 {offsets = [0, 128], sizes = [24, 128], strides = [1, 1]} : vector<24x512xf32> to vector<24x128xf32>
    %cst_65 = arith.constant 5.000000e-01 : f32
    %198 = vector.broadcast %cst_65 : f32 to vector<24x128xf32>
    %199 = arith.mulf %198, %197 : vector<24x128xf32>
    %200 = math.tanh %199 : vector<24x128xf32>
    %cst_66 = arith.constant 1.000000e+00 : f32
    %201 = vector.broadcast %cst_66 : f32 to vector<24x128xf32>
    %202 = arith.addf %200, %201 : vector<24x128xf32>
    %cst_67 = arith.constant 5.000000e-01 : f32
    %203 = vector.broadcast %cst_67 : f32 to vector<24x128xf32>
    %204 = arith.mulf %203, %202 : vector<24x128xf32>
    %205 = vector.extract_strided_slice %188 {offsets = [0, 256], sizes = [24, 128], strides = [1, 1]} : vector<24x512xf32> to vector<24x128xf32>
    %206 = math.tanh %205 : vector<24x128xf32>
    %207 = vector.extract_strided_slice %188 {offsets = [0, 384], sizes = [24, 128], strides = [1, 1]} : vector<24x512xf32> to vector<24x128xf32>
    %cst_68 = arith.constant 5.000000e-01 : f32
    %208 = vector.broadcast %cst_68 : f32 to vector<24x128xf32>
    %209 = arith.mulf %208, %207 : vector<24x128xf32>
    %210 = math.tanh %209 : vector<24x128xf32>
    %cst_69 = arith.constant 1.000000e+00 : f32
    %211 = vector.broadcast %cst_69 : f32 to vector<24x128xf32>
    %212 = arith.addf %210, %211 : vector<24x128xf32>
    %cst_70 = arith.constant 5.000000e-01 : f32
    %213 = vector.broadcast %cst_70 : f32 to vector<24x128xf32>
    %214 = arith.mulf %213, %212 : vector<24x128xf32>
    %215 = arith.mulf %204, %182 : vector<24x128xf32>
    %216 = arith.mulf %196, %206 : vector<24x128xf32>
    %217 = arith.addf %215, %216 : vector<24x128xf32>
    %218 = math.tanh %217 : vector<24x128xf32>
    %219 = arith.mulf %214, %218 : vector<24x128xf32>
    %220 = arith.addf %185, %219 : vector<24x128xf32>
    %221 = vector.extract_strided_slice %7 {offsets = [144, 0], sizes = [24, 512], strides = [1, 1]} : vector<192x512xf32> to vector<24x512xf32>
    %cst_71 = arith.constant dense<0.000000e+00> : vector<24x512xf32>
    %222 = tpu.matmul %219, %0, %cst_71 {dimension_numbers = #tpu.dot_dimension_numbers<[1], [0], [0], [1], [0, 0, 1, 1], [], []>} : vector<24x128xf32>, vector<128x512xf32>, vector<24x512xf32> -> vector<24x512xf32>
    %223 = arith.addf %221, %222 : vector<24x512xf32>
    %224 = vector.extract_strided_slice %223 {offsets = [0, 0], sizes = [24, 128], strides = [1, 1]} : vector<24x512xf32> to vector<24x128xf32>
    %cst_72 = arith.constant 5.000000e-01 : f32
    %225 = vector.broadcast %cst_72 : f32 to vector<24x128xf32>
    %226 = arith.mulf %225, %224 : vector<24x128xf32>
    %227 = math.tanh %226 : vector<24x128xf32>
    %cst_73 = arith.constant 1.000000e+00 : f32
    %228 = vector.broadcast %cst_73 : f32 to vector<24x128xf32>
    %229 = arith.addf %227, %228 : vector<24x128xf32>
    %cst_74 = arith.constant 5.000000e-01 : f32
    %230 = vector.broadcast %cst_74 : f32 to vector<24x128xf32>
    %231 = arith.mulf %230, %229 : vector<24x128xf32>
    %232 = vector.extract_strided_slice %223 {offsets = [0, 128], sizes = [24, 128], strides = [1, 1]} : vector<24x512xf32> to vector<24x128xf32>
    %cst_75 = arith.constant 5.000000e-01 : f32
    %233 = vector.broadcast %cst_75 : f32 to vector<24x128xf32>
    %234 = arith.mulf %233, %232 : vector<24x128xf32>
    %235 = math.tanh %234 : vector<24x128xf32>
    %cst_76 = arith.constant 1.000000e+00 : f32
    %236 = vector.broadcast %cst_76 : f32 to vector<24x128xf32>
    %237 = arith.addf %235, %236 : vector<24x128xf32>
    %cst_77 = arith.constant 5.000000e-01 : f32
    %238 = vector.broadcast %cst_77 : f32 to vector<24x128xf32>
    %239 = arith.mulf %238, %237 : vector<24x128xf32>
    %240 = vector.extract_strided_slice %223 {offsets = [0, 256], sizes = [24, 128], strides = [1, 1]} : vector<24x512xf32> to vector<24x128xf32>
    %241 = math.tanh %240 : vector<24x128xf32>
    %242 = vector.extract_strided_slice %223 {offsets = [0, 384], sizes = [24, 128], strides = [1, 1]} : vector<24x512xf32> to vector<24x128xf32>
    %cst_78 = arith.constant 5.000000e-01 : f32
    %243 = vector.broadcast %cst_78 : f32 to vector<24x128xf32>
    %244 = arith.mulf %243, %242 : vector<24x128xf32>
    %245 = math.tanh %244 : vector<24x128xf32>
    %cst_79 = arith.constant 1.000000e+00 : f32
    %246 = vector.broadcast %cst_79 : f32 to vector<24x128xf32>
    %247 = arith.addf %245, %246 : vector<24x128xf32>
    %cst_80 = arith.constant 5.000000e-01 : f32
    %248 = vector.broadcast %cst_80 : f32 to vector<24x128xf32>
    %249 = arith.mulf %248, %247 : vector<24x128xf32>
    %250 = arith.mulf %239, %217 : vector<24x128xf32>
    %251 = arith.mulf %231, %241 : vector<24x128xf32>
    %252 = arith.addf %250, %251 : vector<24x128xf32>
    %253 = math.tanh %252 : vector<24x128xf32>
    %254 = arith.mulf %249, %253 : vector<24x128xf32>
    %255 = arith.addf %220, %254 : vector<24x128xf32>
    %256 = vector.extract_strided_slice %7 {offsets = [168, 0], sizes = [24, 512], strides = [1, 1]} : vector<192x512xf32> to vector<24x512xf32>
    %cst_81 = arith.constant dense<0.000000e+00> : vector<24x512xf32>
    %257 = tpu.matmul %254, %0, %cst_81 {dimension_numbers = #tpu.dot_dimension_numbers<[1], [0], [0], [1], [0, 0, 1, 1], [], []>} : vector<24x128xf32>, vector<128x512xf32>, vector<24x512xf32> -> vector<24x512xf32>
    %258 = arith.addf %256, %257 : vector<24x512xf32>
    %259 = vector.extract_strided_slice %258 {offsets = [0, 0], sizes = [24, 128], strides = [1, 1]} : vector<24x512xf32> to vector<24x128xf32>
    %cst_82 = arith.constant 5.000000e-01 : f32
    %260 = vector.broadcast %cst_82 : f32 to vector<24x128xf32>
    %261 = arith.mulf %260, %259 : vector<24x128xf32>
    %262 = math.tanh %261 : vector<24x128xf32>
    %cst_83 = arith.constant 1.000000e+00 : f32
    %263 = vector.broadcast %cst_83 : f32 to vector<24x128xf32>
    %264 = arith.addf %262, %263 : vector<24x128xf32>
    %cst_84 = arith.constant 5.000000e-01 : f32
    %265 = vector.broadcast %cst_84 : f32 to vector<24x128xf32>
    %266 = arith.mulf %265, %264 : vector<24x128xf32>
    %267 = vector.extract_strided_slice %258 {offsets = [0, 128], sizes = [24, 128], strides = [1, 1]} : vector<24x512xf32> to vector<24x128xf32>
    %cst_85 = arith.constant 5.000000e-01 : f32
    %268 = vector.broadcast %cst_85 : f32 to vector<24x128xf32>
    %269 = arith.mulf %268, %267 : vector<24x128xf32>
    %270 = math.tanh %269 : vector<24x128xf32>
    %cst_86 = arith.constant 1.000000e+00 : f32
    %271 = vector.broadcast %cst_86 : f32 to vector<24x128xf32>
    %272 = arith.addf %270, %271 : vector<24x128xf32>
    %cst_87 = arith.constant 5.000000e-01 : f32
    %273 = vector.broadcast %cst_87 : f32 to vector<24x128xf32>
    %274 = arith.mulf %273, %272 : vector<24x128xf32>
    %275 = vector.extract_strided_slice %258 {offsets = [0, 256], sizes = [24, 128], strides = [1, 1]} : vector<24x512xf32> to vector<24x128xf32>
    %276 = math.tanh %275 : vector<24x128xf32>
    %277 = vector.extract_strided_slice %258 {offsets = [0, 384], sizes = [24, 128], strides = [1, 1]} : vector<24x512xf32> to vector<24x128xf32>
    %cst_88 = arith.constant 5.000000e-01 : f32
    %278 = vector.broadcast %cst_88 : f32 to vector<24x128xf32>
    %279 = arith.mulf %278, %277 : vector<24x128xf32>
    %280 = math.tanh %279 : vector<24x128xf32>
    %cst_89 = arith.constant 1.000000e+00 : f32
    %281 = vector.broadcast %cst_89 : f32 to vector<24x128xf32>
    %282 = arith.addf %280, %281 : vector<24x128xf32>
    %cst_90 = arith.constant 5.000000e-01 : f32
    %283 = vector.broadcast %cst_90 : f32 to vector<24x128xf32>
    %284 = arith.mulf %283, %282 : vector<24x128xf32>
    %285 = arith.mulf %274, %252 : vector<24x128xf32>
    %286 = arith.mulf %266, %276 : vector<24x128xf32>
    %287 = arith.addf %285, %286 : vector<24x128xf32>
    %288 = math.tanh %287 : vector<24x128xf32>
    %289 = arith.mulf %284, %288 : vector<24x128xf32>
    %290 = arith.addf %255, %289 : vector<24x128xf32>
    %cst_91 = arith.constant 1.250000e-01 : f32
    %291 = vector.broadcast %cst_91 : f32 to vector<24x128xf32>
    %292 = arith.mulf %290, %291 : vector<24x128xf32>
    %c0_92 = arith.constant 0 : index
    %c0_93 = arith.constant 0 : index
    %293 = vector.load %arg5[%c0_92, %c0_93] : memref<128x2xf32, #tpu.memory_space<vmem>>, vector<128x2xf32>
    %cst_94 = arith.constant dense<0.000000e+00> : vector<24x2xf32>
    %294 = tpu.matmul %292, %293, %cst_94 {dimension_numbers = #tpu.dot_dimension_numbers<[1], [0], [0], [1], [0, 0, 1, 1], [], []>} : vector<24x128xf32>, vector<128x2xf32>, vector<24x2xf32> -> vector<24x2xf32>
    %c0_95 = arith.constant 0 : index
    %c0_96 = arith.constant 0 : index
    %295 = vector.load %arg6[%c0_95, %c0_96] : memref<1x1xf32, #tpu.memory_space<vmem>>, vector<1x1xf32>
    %296 = vector.extract_strided_slice %294 {offsets = [0, 0], sizes = [8, 1], strides = [1, 1]} : vector<24x2xf32> to vector<8x1xf32>
    %297 = vector.extract_strided_slice %294 {offsets = [8, 1], sizes = [8, 1], strides = [1, 1]} : vector<24x2xf32> to vector<8x1xf32>
    %298 = vector.extract_strided_slice %294 {offsets = [16, 1], sizes = [8, 1], strides = [1, 1]} : vector<24x2xf32> to vector<8x1xf32>
    %299 = arith.addf %296, %297 : vector<8x1xf32>
    %300 = vector.broadcast %295 : vector<1x1xf32> to vector<8x1xf32>
    %301 = arith.addf %299, %300 : vector<8x1xf32>
    %cst_97 = arith.constant 0.000000e+00 : f32
    %302 = vector.broadcast %cst_97 : f32 to vector<8x1xf32>
    %303 = arith.maximumf %301, %302 : vector<8x1xf32>
    %304 = arith.addf %296, %298 : vector<8x1xf32>
    %305 = vector.broadcast %295 : vector<1x1xf32> to vector<8x1xf32>
    %306 = arith.addf %304, %305 : vector<8x1xf32>
    %cst_98 = arith.constant 0.000000e+00 : f32
    %307 = vector.broadcast %cst_98 : f32 to vector<8x1xf32>
    %308 = arith.maximumf %306, %307 : vector<8x1xf32>
    %309 = arith.subf %303, %308 : vector<8x1xf32>
    %c0_99 = arith.constant 0 : index
    %c0_100 = arith.constant 0 : index
    %310 = vector.load %arg7[%c0_99, %c0_100] : memref<8x1xf32, #tpu.memory_space<vmem>>, vector<8x1xf32>
    tpu.vector_store %arg7[%c0_99, %c0_100], %309 {strides = array<i32>} : memref<8x1xf32, #tpu.memory_space<vmem>>, vector<8x1xf32>,
    return
  }
  func.func @transform_0(%arg0: i32) -> (i32, i32, i32) {
    %c0_i32 = arith.constant 0 : i32
    %c0_i32_0 = arith.constant 0 : i32
    %c0_i32_1 = arith.constant 0 : i32
    return %arg0, %c0_i32, %c0_i32_0 : i32, i32, i32
  }
  func.func @transform_1(%arg0: i32) -> (i32, i32) {
    %c0_i32 = arith.constant 0 : i32
    %c0_i32_0 = arith.constant 0 : i32
    %c0_i32_1 = arith.constant 0 : i32
    return %c0_i32, %c0_i32_0 : i32, i32
  }
  func.func @transform_2(%arg0: i32) -> (i32, i32) {
    %c0_i32 = arith.constant 0 : i32
    %c0_i32_0 = arith.constant 0 : i32
    %c0_i32_1 = arith.constant 0 : i32
    return %c0_i32, %c0_i32_0 : i32, i32
  }
  func.func @transform_3(%arg0: i32) -> (i32, i32) {
    %c0_i32 = arith.constant 0 : i32
    %c0_i32_0 = arith.constant 0 : i32
    %c0_i32_1 = arith.constant 0 : i32
    return %c0_i32, %c0_i32_0 : i32, i32
  }
  func.func @transform_4(%arg0: i32) -> (i32, i32) {
    %c0_i32 = arith.constant 0 : i32
    %c0_i32_0 = arith.constant 0 : i32
    %c0_i32_1 = arith.constant 0 : i32
    return %c0_i32, %c0_i32_0 : i32, i32
  }
  func.func @transform_5(%arg0: i32) -> (i32, i32) {
    %c0_i32 = arith.constant 0 : i32
    %c0_i32_0 = arith.constant 0 : i32
    %c0_i32_1 = arith.constant 0 : i32
    return %c0_i32, %c0_i32_0 : i32, i32
  }
  func.func @transform_6(%arg0: i32) -> (i32, i32) {
    %c0_i32 = arith.constant 0 : i32
    %c0_i32_0 = arith.constant 0 : i32
    return %arg0, %c0_i32 : i32, i32
  }
}

</mosaic_0001>

<llo_original>
// kernel: ranking_model_forward.1
$region0: #{ranking_model_forward.1}
  #allocation0 [shape = 'u32[]', space=smem, size = 0x4, offset = 0x4, fixed_abs, tag = 'smem constant byte address 0x4 - core index']
  #allocation1 [shape = 'u32[144,128]{1,0:T(1,128)}', space=vmem, size = 0x12000, scoped, tag = 'internal scratch']
  #allocation2 [shape = 'f32[1,1]{1,0:T(1,128)S(1)}', space=vmem, size = 0x200, scoped, tag = 'scoped memory for ranking_model_forward.1']
  %s0 = inlined_call_operand.vmem [shape: f32[1,192,50], index: 0, kind: input, shape index: {}]
  %s1 = inlined_call_operand.vmem [shape: f32[50,512], index: 1, kind: input, shape index: {}]
  %s2 = inlined_call_operand.vmem [shape: f32[128,512], index: 2, kind: input, shape index: {}]
  %s3 = inlined_call_operand.vmem [shape: f32[1,512], index: 3, kind: input, shape index: {}]
  %s4 = inlined_call_operand.vmem [shape: f32[128,2], index: 4, kind: input, shape index: {}]
  %s5 = inlined_call_operand.<no memory space> [shape: f32[1,1], index: 5, kind: input, shape index: {}]
  %s6 = inlined_call_operand.vmem [shape: f32[8,1], index: 6, kind: output, shape index: {}]
  %s7 = sld [smem:[#allocation0]]
  $region34: #{ranking_model_forward.1} parent=0
    _
  %s9 = ssub.s32 1, %s7
  %s10 = scalar_select 0, %s9, %s7
  %v11 = vstv %s5
  %12 = vst [vmem:[#allocation2] sm:$0x1] %v11
  // Predicated region
  $region2: #{ranking_model_forward.1} parent=0 // pred_check
    _
  $region3: #{ranking_model_forward.1} parent=0 // pred_check_branch
    %14 = sbr.rel (0) target = $region5
  $region4: #{ranking_model_forward.1} parent=0 // pred_region
    _
  $region5: #{ranking_model_forward.1} parent=0 // pred_fallthru
    _
  // Predicated region
  $region6: #{ranking_model_forward.1} parent=0 // pred_check
    _
  $region7: #{ranking_model_forward.1} parent=0 // pred_check_branch
    %16 = sbr.rel (0) target = $region9
  $region8: #{ranking_model_forward.1} parent=0 // pred_region
    _
  $region9: #{ranking_model_forward.1} parent=0 // pred_fallthru
    _
  // Predicated region
  $region10: #{ranking_model_forward.1} parent=0 // pred_check
    _
  $region11: #{ranking_model_forward.1} parent=0 // pred_check_branch
    %18 = sbr.rel (0) target = $region13
  $region12: #{ranking_model_forward.1} parent=0 // pred_region
    _
  $region13: #{ranking_model_forward.1} parent=0 // pred_fallthru
    _
  // Predicated region
  $region14: #{ranking_model_forward.1} parent=0 // pred_check
    _
  $region15: #{ranking_model_forward.1} parent=0 // pred_check_branch
    %20 = sbr.rel (0) target = $region17
  $region16: #{ranking_model_forward.1} parent=0 // pred_region
    _
  $region17: #{ranking_model_forward.1} parent=0 // pred_fallthru
    _
  // Predicated region
  $region18: #{ranking_model_forward.1} parent=0 // pred_check
    _
  $region19: #{ranking_model_forward.1} parent=0 // pred_check_branch
    %22 = sbr.rel (0) target = $region21
  $region20: #{ranking_model_forward.1} parent=0 // pred_region
    _
  $region21: #{ranking_model_forward.1} parent=0 // pred_fallthru
    _
  // Predicated region
  $region22: #{ranking_model_forward.1} parent=0 // pred_check
    _
  $region23: #{ranking_model_forward.1} parent=0 // pred_check_branch
    %24 = sbr.rel (0) target = $region25
  $region24: #{ranking_model_forward.1} parent=0 // pred_region
    _
  $region25: #{ranking_model_forward.1} parent=0 // pred_fallthru
    _
  %v25 = vld [vmem:[%s2] sm:$0xff]
  %v26 = vld [vmem:[%s2 + $0x8] sm:$0xff]
  %v27 = vld [vmem:[%s2 + $0x10] sm:$0xff]
  %v28 = vld [vmem:[%s2 + $0x18] sm:$0xff]
  %v29 = vld [vmem:[%s2 + $0x20] sm:$0xff]
  %v30 = vld [vmem:[%s2 + $0x28] sm:$0xff]
  %v31 = vld [vmem:[%s2 + $0x30] sm:$0xff]
  %v32 = vld [vmem:[%s2 + $0x38] sm:$0xff]
  %v33 = vld [vmem:[%s2 + $0x40] sm:$0xff]
  %v34 = vld [vmem:[%s2 + $0x48] sm:$0xff]
  %v35 = vld [vmem:[%s2 + $0x50] sm:$0xff]
  %v36 = vld [vmem:[%s2 + $0x58] sm:$0xff]
  %v37 = vld [vmem:[%s2 + $0x60] sm:$0xff]
  %v38 = vld [vmem:[%s2 + $0x68] sm:$0xff]
  %v39 = vld [vmem:[%s2 + $0x70] sm:$0xff]
  %v40 = vld [vmem:[%s2 + $0x78] sm:$0xff]
  %v41 = vld [vmem:[%s2 + $0x80] sm:$0xff]
  %v42 = vld [vmem:[%s2 + $0x88] sm:$0xff]
  %v43 = vld [vmem:[%s2 + $0x90] sm:$0xff]
  %v44 = vld [vmem:[%s2 + $0x98] sm:$0xff]
  %v45 = vld [vmem:[%s2 + $0xa0] sm:$0xff]
  %v46 = vld [vmem:[%s2 + $0xa8] sm:$0xff]
  %v47 = vld [vmem:[%s2 + $0xb0] sm:$0xff]
  %v48 = vld [vmem:[%s2 + $0xb8] sm:$0xff]
  %v49 = vld [vmem:[%s2 + $0xc0] sm:$0xff]
  %v50 = vld [vmem:[%s2 + $0xc8] sm:$0xff]
  %v51 = vld [vmem:[%s2 + $0xd0] sm:$0xff]
  %v52 = vld [vmem:[%s2 + $0xd8] sm:$0xff]
  %v53 = vld [vmem:[%s2 + $0xe0] sm:$0xff]
  %v54 = vld [vmem:[%s2 + $0xe8] sm:$0xff]
  %v55 = vld [vmem:[%s2 + $0xf0] sm:$0xff]
  %v56 = vld [vmem:[%s2 + $0xf8] sm:$0xff]
  %v57 = vld [vmem:[%s2 + $0x100] sm:$0xff]
  %v58 = vld [vmem:[%s2 + $0x108] sm:$0xff]
  %v59 = vld [vmem:[%s2 + $0x110] sm:$0xff]
  %v60 = vld [vmem:[%s2 + $0x118] sm:$0xff]
  %v61 = vld [vmem:[%s2 + $0x120] sm:$0xff]
  %v62 = vld [vmem:[%s2 + $0x128] sm:$0xff]
  %v63 = vld [vmem:[%s2 + $0x130] sm:$0xff]
  %v64 = vld [vmem:[%s2 + $0x138] sm:$0xff]
  %v65 = vld [vmem:[%s2 + $0x140] sm:$0xff]
  %v66 = vld [vmem:[%s2 + $0x148] sm:$0xff]
  %v67 = vld [vmem:[%s2 + $0x150] sm:$0xff]
  %v68 = vld [vmem:[%s2 + $0x158] sm:$0xff]
  %v69 = vld [vmem:[%s2 + $0x160] sm:$0xff]
  %v70 = vld [vmem:[%s2 + $0x168] sm:$0xff]
  %v71 = vld [vmem:[%s2 + $0x170] sm:$0xff]
  %v72 = vld [vmem:[%s2 + $0x178] sm:$0xff]
  %v73 = vld [vmem:[%s2 + $0x180] sm:$0xff]
  %v74 = vld [vmem:[%s2 + $0x188] sm:$0xff]
  %v75 = vld [vmem:[%s2 + $0x190] sm:$0xff]
  %v76 = vld [vmem:[%s2 + $0x198] sm:$0xff]
  %v77 = vld [vmem:[%s2 + $0x1a0] sm:$0xff]
  %v78 = vld [vmem:[%s2 + $0x1a8] sm:$0xff]
  %v79 = vld [vmem:[%s2 + $0x1b0] sm:$0xff]
  %v80 = vld [vmem:[%s2 + $0x1b8] sm:$0xff]
  %v81 = vld [vmem:[%s2 + $0x1c0] sm:$0xff]
  %v82 = vld [vmem:[%s2 + $0x1c8] sm:$0xff]
  %v83 = vld [vmem:[%s2 + $0x1d0] sm:$0xff]
  %v84 = vld [vmem:[%s2 + $0x1d8] sm:$0xff]
  %v85 = vld [vmem:[%s2 + $0x1e0] sm:$0xff]
  %v86 = vld [vmem:[%s2 + $0x1e8] sm:$0xff]
  %v87 = vld [vmem:[%s2 + $0x1f0] sm:$0xff]
  %v88 = vld [vmem:[%s2 + $0x1f8] sm:$0xff]
  %v89 = vld [vmem:[%s0] sm:$0xff]
  %v90 = vld [vmem:[%s0 + $0x8] sm:$0xff]
  %v91 = vld [vmem:[%s0 + $0x10] sm:$0xff]
  %v92 = vld [vmem:[%s0 + $0x18] sm:$0xff]
  %v93 = vld [vmem:[%s0 + $0x20] sm:$0xff]
  %v94 = vld [vmem:[%s0 + $0x28] sm:$0xff]
  %v95 = vld [vmem:[%s0 + $0x30] sm:$0xff]
  %v96 = vld [vmem:[%s0 + $0x38] sm:$0xff]
  %v97 = vld [vmem:[%s0 + $0x40] sm:$0xff]
  %v98 = vld [vmem:[%s0 + $0x48] sm:$0xff]
  %v99 = vld [vmem:[%s0 + $0x50] sm:$0xff]
  %v100 = vld [vmem:[%s0 + $0x58] sm:$0xff]
  %v101 = vld [vmem:[%s0 + $0x60] sm:$0xff]
  %v102 = vld [vmem:[%s0 + $0x68] sm:$0xff]
  %v103 = vld [vmem:[%s0 + $0x70] sm:$0xff]
  %v104 = vld [vmem:[%s0 + $0x78] sm:$0xff]
  %v105 = vld [vmem:[%s0 + $0x80] sm:$0xff]
  %v106 = vld [vmem:[%s0 + $0x88] sm:$0xff]
  %v107 = vld [vmem:[%s0 + $0x90] sm:$0xff]
  %v108 = vld [vmem:[%s0 + $0x98] sm:$0xff]
  %v109 = vld [vmem:[%s0 + $0xa0] sm:$0xff]
  %v110 = vld [vmem:[%s0 + $0xa8] sm:$0xff]
  %v111 = vld [vmem:[%s0 + $0xb0] sm:$0xff]
  %v112 = vld [vmem:[%s0 + $0xb8] sm:$0xff]
  %v113 = vld [vmem:[%s1] sm:$0xff]
  %v114 = vld [vmem:[%s1 + $0x8] sm:$0xff]
  %v115 = vld [vmem:[%s1 + $0x10] sm:$0xff]
  %v116 = vld [vmem:[%s1 + $0x18] sm:$0xff]
  %v117 = vld [vmem:[%s1 + $0x20] sm:$0xff]
  %v118 = vld [vmem:[%s1 + $0x28] sm:$0xff]
  %v119 = vld [vmem:[%s1 + $0x30] sm:$0xff]
  %v120 = vld [vmem:[%s1 + $0x38] sm:$0xff]
  %v121 = vld [vmem:[%s1 + $0x40] sm:$0xff]
  %v122 = vld [vmem:[%s1 + $0x48] sm:$0xff]
  %v123 = vld [vmem:[%s1 + $0x50] sm:$0xff]
  %v124 = vld [vmem:[%s1 + $0x58] sm:$0xff]
  %v125 = vld [vmem:[%s1 + $0x60] sm:$0xff]
  %v126 = vld [vmem:[%s1 + $0x68] sm:$0xff]
  %v127 = vld [vmem:[%s1 + $0x70] sm:$0xff]
  %v128 = vld [vmem:[%s1 + $0x78] sm:$0xff]
  %v129 = vld [vmem:[%s1 + $0x80] sm:$0xff]
  %v130 = vld [vmem:[%s1 + $0x88] sm:$0xff]
  %v131 = vld [vmem:[%s1 + $0x90] sm:$0xff]
  %v132 = vld [vmem:[%s1 + $0x98] sm:$0xff]
  %v133 = vld [vmem:[%s1 + $0xa0] sm:$0xff]
  %v134 = vld [vmem:[%s1 + $0xa8] sm:$0xff]
  %v135 = vld [vmem:[%s1 + $0xb0] sm:$0xff]
  %v136 = vld [vmem:[%s1 + $0xb8] sm:$0xff]
  %v137 = vld [vmem:[%s1 + $0xc0] sm:$0x3]
  %v138 = vld [vmem:[%s1 + $0xc8] sm:$0x3]
  %v139 = vld [vmem:[%s1 + $0xd0] sm:$0x3]
  %v140 = vld [vmem:[%s1 + $0xd8] sm:$0x3]
  %v141 = vld [vmem:[%s3] sm:$0xf]
  %v143 = vlaneseq
  %v144 = vshrl.u32 %v143, 7
  %v145 = vsub.s32 0, %v144
  %v146 = vrot.slane %v141, %v145
  %v147 = vlaneseq
  %v148 = vshrl.u32 %v147, 7
  %v149 = vsub.s32 1, %v148
  %v150 = vrot.slane %v141, %v149
  %v151 = vlaneseq
  %v152 = vshrl.u32 %v151, 7
  %v153 = vsub.s32 2, %v152
  %v154 = vrot.slane %v141, %v153
  %v155 = vlaneseq
  %v156 = vshrl.u32 %v155, 7
  %v157 = vsub.s32 3, %v156
  %v158 = vrot.slane %v141, %v157
  %vm163 = vcmask 408576
  %v165 = vsel %vm163, %v89, 0
  %v168 = vsel %vm163, %v90, 0
  %v171 = vsel %vm163, %v91, 0
  %v174 = vsel %vm163, %v92, 0
  %v177 = vsel %vm163, %v93, 0
  %v180 = vsel %vm163, %v94, 0
  %v183 = vsel %vm163, %v95, 0
  %v186 = vsel %vm163, %v96, 0
  %v189 = vsel %vm163, %v97, 0
  %v192 = vsel %vm163, %v98, 0
  %v195 = vsel %vm163, %v99, 0
  %v198 = vsel %vm163, %v100, 0
  %v201 = vsel %vm163, %v101, 0
  %v204 = vsel %vm163, %v102, 0
  %v207 = vsel %vm163, %v103, 0
  %v210 = vsel %vm163, %v104, 0
  %v213 = vsel %vm163, %v105, 0
  %v216 = vsel %vm163, %v106, 0
  %v219 = vsel %vm163, %v107, 0
  %v222 = vsel %vm163, %v108, 0
  %v225 = vsel %vm163, %v109, 0
  %v228 = vsel %vm163, %v110, 0
  %v231 = vsel %vm163, %v111, 0
  %v234 = vsel %vm163, %v112, 0
  %vm236 = vcmask 1041408
  %v238 = vsel %vm236, %v137, 0
  %v241 = vsel %vm236, %v138, 0
  %v244 = vsel %vm236, %v139, 0
  %v247 = vsel %vm236, %v140, 0
  %249 = vmatprep.subr.mxu0 %v114
  %250 = vmatpush1.msra.mxu0 %v113
  %251 = vmatprep.subr.mxu0 %v118
  %252 = vmatpush1.msra.mxu0 %v117
  %253 = vmatprep.subr.mxu0 %v122
  %254 = vmatpush1.msra.mxu0 %v121
  %255 = vmatprep.subr.mxu0 %v126
  %256 = vmatpush1.msra.mxu0 %v125
  %257 = vmatprep.subr.mxu0 %v130
  %258 = vmatpush1.msra.mxu0 %v129
  %259 = vmatprep.subr.mxu0 %v134
  %260 = vmatpush1.msra.mxu0 %v133
  %261 = vmatprep.subr.mxu0 %v241
  %262 = vmatpush1.msra.mxu0 %v238
  %263 = vmatprep.subr.mxu0 0.0
  %264 = vmatpush1.msra.mxu0 0.0
  %265 = vmatprep.subr.mxu0 0.0
  %266 = vmatpush1.msra.mxu0 0.0
  %267 = vmatprep.subr.mxu0 0.0
  %268 = vmatpush1.msra.mxu0 0.0
  %269 = vmatprep.subr.mxu0 0.0
  %270 = vmatpush1.msra.mxu0 0.0
  %271 = vmatprep.subr.mxu0 0.0
  %272 = vmatpush1.msra.mxu0 0.0
  %273 = vmatprep.subr.mxu0 0.0
  %274 = vmatpush1.msra.mxu0 0.0
  %275 = vmatprep.subr.mxu0 0.0
  %276 = vmatpush1.msra.mxu0 0.0
  %277 = vmatprep.subr.mxu0 0.0
  %278 = vmatpush1.msra.mxu0 0.0
  %279 = vmatprep.subr.mxu0 0.0
  %280 = vmatpush1.msra.mxu0 0.0
  %281 = vmatprep.subr.mxu0 0.0
  %282 = vmatpush1.msra.mxu0 0.0
  %283 = vmatprep.subr.mxu0 0.0
  %284 = vmatpush1.msra.mxu0 0.0
  %285 = vmatprep.subr.mxu0 0.0
  %286 = vmatpush1.msra.mxu0 0.0
  %287 = vmatprep.subr.mxu0 0.0
  %288 = vmatpush1.msra.mxu0 0.0
  %289 = vmatprep.subr.mxu0 0.0
  %290 = vmatpush1.msra.mxu0 0.0
  %291 = vmatprep.subr.mxu0 0.0
  %292 = vmatpush1.msra.mxu0 0.0
  %293 = vmatprep.subr.mxu0 0.0
  %294 = vmatpush1.msra.mxu0 0.0
  %295 = vmatprep.subr.mxu0 0.0
  %296 = vmatpush1.msra.mxu0 0.0
  %297 = vmatprep.subr.mxu0 0.0
  %298 = vmatpush1.msra.mxu0 0.0
  %299 = vmatprep.subr.mxu0 0.0
  %300 = vmatpush1.msra.mxu0 0.0
  %301 = vmatprep.subr.mxu0 0.0
  %302 = vmatpush1.msra.mxu0 0.0
  %303 = vmatprep.subr.mxu0 0.0
  %304 = vmatpush1.msra.mxu0 0.0
  %305 = vmatprep.subr.mxu0 0.0
  %306 = vmatpush1.msra.mxu0 0.0
  %307 = vmatprep.subr.mxu0 0.0
  %308 = vmatpush1.msra.mxu0 0.0
  %309 = vmatprep.subr.mxu0 0.0
  %310 = vmatpush1.msra.mxu0 0.0
  %311 = vmatprep.subr.mxu0 0.0
  %312 = vmatpush1.msra.mxu0 0.0
  %313 = vmatprep.mubr.f32.mxu0 0.0
  %314 = vmatmul.mubr.f32.gmra.mrb[0].mxu0 %v165
  %v315 = vpop.f32.mrb[0].mxu0
  %v316 = vadd.f32 %v146, %v315
  %v317 = vpop.f32.mrb[0].mxu0
  %v318 = vadd.f32 %v150, %v317
  %319 = vmatprep.mubr.f32.mxu0 0.0
  %320 = vmatmul.mubr.f32.gmra.mrb[0].mxu0 %v168
  %v321 = vpop.f32.mrb[0].mxu0
  %v322 = vadd.f32 %v146, %v321
  %v323 = vpop.f32.mrb[0].mxu0
  %v324 = vadd.f32 %v150, %v323
  %325 = vmatprep.mubr.f32.mxu0 0.0
  %326 = vmatmul.mubr.f32.gmra.mrb[0].mxu0 %v171
  %v327 = vpop.f32.mrb[0].mxu0
  %v328 = vadd.f32 %v146, %v327
  %v329 = vpop.f32.mrb[0].mxu0
  %v330 = vadd.f32 %v150, %v329
  %331 = vmatprep.mubr.f32.mxu0 0.0
  %332 = vmatmul.mubr.f32.gmra.mrb[0].mxu0 %v174
  %v333 = vpop.f32.mrb[0].mxu0
  %v334 = vadd.f32 %v146, %v333
  %v335 = vpop.f32.mrb[0].mxu0
  %v336 = vadd.f32 %v150, %v335
  %337 = vmatprep.mubr.f32.mxu0 0.0
  %338 = vmatmul.mubr.f32.gmra.mrb[0].mxu0 %v177
  %v339 = vpop.f32.mrb[0].mxu0
  %v340 = vadd.f32 %v146, %v339
  %v341 = vpop.f32.mrb[0].mxu0
  %v342 = vadd.f32 %v150, %v341
  %343 = vmatprep.mubr.f32.mxu0 0.0
  %344 = vmatmul.mubr.f32.gmra.mrb[0].mxu0 %v180
  %v345 = vpop.f32.mrb[0].mxu0
  %v346 = vadd.f32 %v146, %v345
  %v347 = vpop.f32.mrb[0].mxu0
  %v348 = vadd.f32 %v150, %v347
  %349 = vmatprep.mubr.f32.mxu0 0.0
  %350 = vmatmul.mubr.f32.gmra.mrb[0].mxu0 %v183
  %v351 = vpop.f32.mrb[0].mxu0
  %v352 = vadd.f32 %v146, %v351
  %v353 = vpop.f32.mrb[0].mxu0
  %v354 = vadd.f32 %v150, %v353
  %355 = vmatprep.mubr.f32.mxu0 0.0
  %356 = vmatmul.mubr.f32.gmra.mrb[0].mxu0 %v186
  %v357 = vpop.f32.mrb[0].mxu0
  %v358 = vadd.f32 %v146, %v357
  %v359 = vpop.f32.mrb[0].mxu0
  %v360 = vadd.f32 %v150, %v359
  %361 = vmatprep.mubr.f32.mxu0 0.0
  %362 = vmatmul.mubr.f32.gmra.mrb[0].mxu0 %v189
  %v363 = vpop.f32.mrb[0].mxu0
  %v364 = vadd.f32 %v146, %v363
  %v365 = vpop.f32.mrb[0].mxu0
  %v366 = vadd.f32 %v150, %v365
  %367 = vmatprep.mubr.f32.mxu0 0.0
  %368 = vmatmul.mubr.f32.gmra.mrb[0].mxu0 %v192
  %v369 = vpop.f32.mrb[0].mxu0
  %v370 = vadd.f32 %v146, %v369
  %v371 = vpop.f32.mrb[0].mxu0
  %v372 = vadd.f32 %v150, %v371
  %373 = vmatprep.mubr.f32.mxu0 0.0
  %374 = vmatmul.mubr.f32.gmra.mrb[0].mxu0 %v195
  %v375 = vpop.f32.mrb[0].mxu0
  %v376 = vadd.f32 %v146, %v375
  %v377 = vpop.f32.mrb[0].mxu0
  %v378 = vadd.f32 %v150, %v377
  %379 = vmatprep.mubr.f32.mxu0 0.0
  %380 = vmatmul.mubr.f32.gmra.mrb[0].mxu0 %v198
  %v381 = vpop.f32.mrb[0].mxu0
  %v382 = vadd.f32 %v146, %v381
  %v383 = vpop.f32.mrb[0].mxu0
  %v384 = vadd.f32 %v150, %v383
  %385 = vmatprep.mubr.f32.mxu0 0.0
  %386 = vmatmul.mubr.f32.gmra.mrb[0].mxu0 %v201
  %v387 = vpop.f32.mrb[0].mxu0
  %v388 = vadd.f32 %v146, %v387
  %v389 = vpop.f32.mrb[0].mxu0
  %v390 = vadd.f32 %v150, %v389
  %391 = vmatprep.mubr.f32.mxu0 0.0
  %392 = vmatmul.mubr.f32.gmra.mrb[0].mxu0 %v204
  %v393 = vpop.f32.mrb[0].mxu0
  %v394 = vadd.f32 %v146, %v393
  %v395 = vpop.f32.mrb[0].mxu0
  %v396 = vadd.f32 %v150, %v395
  %397 = vmatprep.mubr.f32.mxu0 0.0
  %398 = vmatmul.mubr.f32.gmra.mrb[0].mxu0 %v207
  %v399 = vpop.f32.mrb[0].mxu0
  %v400 = vadd.f32 %v146, %v399
  %v401 = vpop.f32.mrb[0].mxu0
  %v402 = vadd.f32 %v150, %v401
  %403 = vmatprep.mubr.f32.mxu0 0.0
  %404 = vmatmul.mubr.f32.gmra.mrb[0].mxu0 %v210
  %v405 = vpop.f32.mrb[0].mxu0
  %v406 = vadd.f32 %v146, %v405
  %v407 = vpop.f32.mrb[0].mxu0
  %v408 = vadd.f32 %v150, %v407
  %409 = vmatprep.mubr.f32.mxu0 0.0
  %410 = vmatmul.mubr.f32.gmra.mrb[0].mxu0 %v213
  %v411 = vpop.f32.mrb[0].mxu0
  %v412 = vadd.f32 %v146, %v411
  %v413 = vpop.f32.mrb[0].mxu0
  %v414 = vadd.f32 %v150, %v413
  %415 = vmatprep.mubr.f32.mxu0 0.0
  %416 = vmatmul.mubr.f32.gmra.mrb[0].mxu0 %v216
  %v417 = vpop.f32.mrb[0].mxu0
  %v418 = vadd.f32 %v146, %v417
  %v419 = vpop.f32.mrb[0].mxu0
  %v420 = vadd.f32 %v150, %v419
  %421 = vmatprep.mubr.f32.mxu0 0.0
  %422 = vmatmul.mubr.f32.gmra.mrb[0].mxu0 %v219
  %v423 = vpop.f32.mrb[0].mxu0
  %v424 = vadd.f32 %v146, %v423
  %v425 = vpop.f32.mrb[0].mxu0
  %v426 = vadd.f32 %v150, %v425
  %427 = vmatprep.mubr.f32.mxu0 0.0
  %428 = vmatmul.mubr.f32.gmra.mrb[0].mxu0 %v222
  %v429 = vpop.f32.mrb[0].mxu0
  %v430 = vadd.f32 %v146, %v429
  %v431 = vpop.f32.mrb[0].mxu0
  %v432 = vadd.f32 %v150, %v431
  %433 = vmatprep.mubr.f32.mxu0 0.0
  %434 = vmatmul.mubr.f32.gmra.mrb[0].mxu0 %v225
  %v435 = vpop.f32.mrb[0].mxu0
  %v436 = vadd.f32 %v146, %v435
  %v437 = vpop.f32.mrb[0].mxu0
  %v438 = vadd.f32 %v150, %v437
  %439 = vmatprep.mubr.f32.mxu0 0.0
  %440 = vmatmul.mubr.f32.gmra.mrb[0].mxu0 %v228
  %v441 = vpop.f32.mrb[0].mxu0
  %v442 = vadd.f32 %v146, %v441
  %v443 = vpop.f32.mrb[0].mxu0
  %v444 = vadd.f32 %v150, %v443
  %445 = vmatprep.mubr.f32.mxu0 0.0
  %446 = vmatmul.mubr.f32.gmra.mrb[0].mxu0 %v231
  %v447 = vpop.f32.mrb[0].mxu0
  %v448 = vadd.f32 %v146, %v447
  %v449 = vpop.f32.mrb[0].mxu0
  %v450 = vadd.f32 %v150, %v449
  %451 = vmatprep.mubr.f32.mxu0 0.0
  %452 = vmatmul.mubr.f32.gmra.mrb[0].mxu0 %v234
  %v453 = vpop.f32.mrb[0].mxu0
  %v454 = vadd.f32 %v146, %v453
  %v455 = vpop.f32.mrb[0].mxu0
  %v456 = vadd.f32 %v150, %v455
  %457 = vdwg.mxu0
  %458 = vmatprep.subr.mxu0 %v116
  %459 = vmatpush1.msra.mxu0 %v115
  %460 = vmatprep.subr.mxu0 %v120
  %461 = vmatpush1.msra.mxu0 %v119
  %462 = vmatprep.subr.mxu0 %v124
  %463 = vmatpush1.msra.mxu0 %v123
  %464 = vmatprep.subr.mxu0 %v128
  %465 = vmatpush1.msra.mxu0 %v127
  %466 = vmatprep.subr.mxu0 %v132
  %467 = vmatpush1.msra.mxu0 %v131
  %468 = vmatprep.subr.mxu0 %v136
  %469 = vmatpush1.msra.mxu0 %v135
  %470 = vmatprep.subr.mxu0 %v247
  %471 = vmatpush1.msra.mxu0 %v244
  %472 = vmatprep.subr.mxu0 0.0
  %473 = vmatpush1.msra.mxu0 0.0
  %474 = vmatprep.subr.mxu0 0.0
  %475 = vmatpush1.msra.mxu0 0.0
  %476 = vmatprep.subr.mxu0 0.0
  %477 = vmatpush1.msra.mxu0 0.0
  %478 = vmatprep.subr.mxu0 0.0
  %479 = vmatpush1.msra.mxu0 0.0
  %480 = vmatprep.subr.mxu0 0.0
  %481 = vmatpush1.msra.mxu0 0.0
  %482 = vmatprep.subr.mxu0 0.0
  %483 = vmatpush1.msra.mxu0 0.0
  %484 = vmatprep.subr.mxu0 0.0
  %485 = vmatpush1.msra.mxu0 0.0
  %486 = vmatprep.subr.mxu0 0.0
  %487 = vmatpush1.msra.mxu0 0.0
  %488 = vmatprep.subr.mxu0 0.0
  %489 = vmatpush1.msra.mxu0 0.0
  %490 = vmatprep.subr.mxu0 0.0
  %491 = vmatpush1.msra.mxu0 0.0
  %492 = vmatprep.subr.mxu0 0.0
  %493 = vmatpush1.msra.mxu0 0.0
  %494 = vmatprep.subr.mxu0 0.0
  %495 = vmatpush1.msra.mxu0 0.0
  %496 = vmatprep.subr.mxu0 0.0
  %497 = vmatpush1.msra.mxu0 0.0
  %498 = vmatprep.subr.mxu0 0.0
  %499 = vmatpush1.msra.mxu0 0.0
  %500 = vmatprep.subr.mxu0 0.0
  %501 = vmatpush1.msra.mxu0 0.0
  %502 = vmatprep.subr.mxu0 0.0
  %503 = vmatpush1.msra.mxu0 0.0
  %504 = vmatprep.subr.mxu0 0.0
  %505 = vmatpush1.msra.mxu0 0.0
  %506 = vmatprep.subr.mxu0 0.0
  %507 = vmatpush1.msra.mxu0 0.0
  %508 = vmatprep.subr.mxu0 0.0
  %509 = vmatpush1.msra.mxu0 0.0
  %510 = vmatprep.subr.mxu0 0.0
  %511 = vmatpush1.msra.mxu0 0.0
  %512 = vmatprep.subr.mxu0 0.0
  %513 = vmatpush1.msra.mxu0 0.0
  %514 = vmatprep.subr.mxu0 0.0
  %515 = vmatpush1.msra.mxu0 0.0
  %516 = vmatprep.subr.mxu0 0.0
  %517 = vmatpush1.msra.mxu0 0.0
  %518 = vmatprep.subr.mxu0 0.0
  %519 = vmatpush1.msra.mxu0 0.0
  %520 = vmatprep.subr.mxu0 0.0
  %521 = vmatpush1.msra.mxu0 0.0
  %522 = vmatprep.mubr.f32.mxu0 0.0
  %523 = vmatmul.mubr.f32.gmra.mrb[0].mxu0 %v165
  %v524 = vpop.f32.mrb[0].mxu0
  %v525 = vadd.f32 %v154, %v524
  %v526 = vpop.f32.mrb[0].mxu0
  %v527 = vadd.f32 %v158, %v526
  %528 = vmatprep.mubr.f32.mxu0 0.0
  %529 = vmatmul.mubr.f32.gmra.mrb[0].mxu0 %v168
  %v530 = vpop.f32.mrb[0].mxu0
  %v531 = vadd.f32 %v154, %v530
  %v532 = vpop.f32.mrb[0].mxu0
  %v533 = vadd.f32 %v158, %v532
  %534 = vmatprep.mubr.f32.mxu0 0.0
  %535 = vmatmul.mubr.f32.gmra.mrb[0].mxu0 %v171
  %v536 = vpop.f32.mrb[0].mxu0
  %v537 = vadd.f32 %v154, %v536
  %v538 = vpop.f32.mrb[0].mxu0
  %v539 = vadd.f32 %v158, %v538
  %540 = vmatprep.mubr.f32.mxu0 0.0
  %541 = vmatmul.mubr.f32.gmra.mrb[0].mxu0 %v174
  %v542 = vpop.f32.mrb[0].mxu0
  %v543 = vadd.f32 %v154, %v542
  %v544 = vpop.f32.mrb[0].mxu0
  %v545 = vadd.f32 %v158, %v544
  %546 = vmatprep.mubr.f32.mxu0 0.0
  %547 = vmatmul.mubr.f32.gmra.mrb[0].mxu0 %v177
  %v548 = vpop.f32.mrb[0].mxu0
  %v549 = vadd.f32 %v154, %v548
  %v550 = vpop.f32.mrb[0].mxu0
  %v551 = vadd.f32 %v158, %v550
  %552 = vmatprep.mubr.f32.mxu0 0.0
  %553 = vmatmul.mubr.f32.gmra.mrb[0].mxu0 %v180
  %v554 = vpop.f32.mrb[0].mxu0
  %v555 = vadd.f32 %v154, %v554
  %v556 = vpop.f32.mrb[0].mxu0
  %v557 = vadd.f32 %v158, %v556
  %558 = vmatprep.mubr.f32.mxu0 0.0
  %559 = vmatmul.mubr.f32.gmra.mrb[0].mxu0 %v183
  %v560 = vpop.f32.mrb[0].mxu0
  %v561 = vadd.f32 %v154, %v560
  %v562 = vpop.f32.mrb[0].mxu0
  %v563 = vadd.f32 %v158, %v562
  %564 = vmatprep.mubr.f32.mxu0 0.0
  %565 = vmatmul.mubr.f32.gmra.mrb[0].mxu0 %v186
  %v566 = vpop.f32.mrb[0].mxu0
  %v567 = vadd.f32 %v154, %v566
  %v568 = vpop.f32.mrb[0].mxu0
  %v569 = vadd.f32 %v158, %v568
  %570 = vmatprep.mubr.f32.mxu0 0.0
  %571 = vmatmul.mubr.f32.gmra.mrb[0].mxu0 %v189
  %v572 = vpop.f32.mrb[0].mxu0
  %v573 = vadd.f32 %v154, %v572
  %v574 = vpop.f32.mrb[0].mxu0
  %v575 = vadd.f32 %v158, %v574
  %576 = vmatprep.mubr.f32.mxu0 0.0
  %577 = vmatmul.mubr.f32.gmra.mrb[0].mxu0 %v192
  %v578 = vpop.f32.mrb[0].mxu0
  %v579 = vadd.f32 %v154, %v578
  %v580 = vpop.f32.mrb[0].mxu0
  %v581 = vadd.f32 %v158, %v580
  %582 = vmatprep.mubr.f32.mxu0 0.0
  %583 = vmatmul.mubr.f32.gmra.mrb[0].mxu0 %v195
  %v584 = vpop.f32.mrb[0].mxu0
  %v585 = vadd.f32 %v154, %v584
  %v586 = vpop.f32.mrb[0].mxu0
  %v587 = vadd.f32 %v158, %v586
  %588 = vmatprep.mubr.f32.mxu0 0.0
  %589 = vmatmul.mubr.f32.gmra.mrb[0].mxu0 %v198
  %v590 = vpop.f32.mrb[0].mxu0
  %v591 = vadd.f32 %v154, %v590
  %v592 = vpop.f32.mrb[0].mxu0
  %v593 = vadd.f32 %v158, %v592
  %594 = vmatprep.mubr.f32.mxu0 0.0
  %595 = vmatmul.mubr.f32.gmra.mrb[0].mxu0 %v201
  %v596 = vpop.f32.mrb[0].mxu0
  %v597 = vadd.f32 %v154, %v596
  %v598 = vpop.f32.mrb[0].mxu0
  %v599 = vadd.f32 %v158, %v598
  %600 = vmatprep.mubr.f32.mxu0 0.0
  %601 = vmatmul.mubr.f32.gmra.mrb[0].mxu0 %v204
  %v602 = vpop.f32.mrb[0].mxu0
  %v603 = vadd.f32 %v154, %v602
  %v604 = vpop.f32.mrb[0].mxu0
  %v605 = vadd.f32 %v158, %v604
  %606 = vmatprep.mubr.f32.mxu0 0.0
  %607 = vmatmul.mubr.f32.gmra.mrb[0].mxu0 %v207
  %v608 = vpop.f32.mrb[0].mxu0
  %v609 = vadd.f32 %v154, %v608
  %v610 = vpop.f32.mrb[0].mxu0
  %v611 = vadd.f32 %v158, %v610
  %612 = vmatprep.mubr.f32.mxu0 0.0
  %613 = vmatmul.mubr.f32.gmra.mrb[0].mxu0 %v210
  %v614 = vpop.f32.mrb[0].mxu0
  %v615 = vadd.f32 %v154, %v614
  %v616 = vpop.f32.mrb[0].mxu0
  %v617 = vadd.f32 %v158, %v616
  %618 = vmatprep.mubr.f32.mxu0 0.0
  %619 = vmatmul.mubr.f32.gmra.mrb[0].mxu0 %v213
  %v620 = vpop.f32.mrb[0].mxu0
  %v621 = vadd.f32 %v154, %v620
  %v622 = vpop.f32.mrb[0].mxu0
  %v623 = vadd.f32 %v158, %v622
  %624 = vmatprep.mubr.f32.mxu0 0.0
  %625 = vmatmul.mubr.f32.gmra.mrb[0].mxu0 %v216
  %v626 = vpop.f32.mrb[0].mxu0
  %v627 = vadd.f32 %v154, %v626
  %v628 = vpop.f32.mrb[0].mxu0
  %v629 = vadd.f32 %v158, %v628
  %630 = vmatprep.mubr.f32.mxu0 0.0
  %631 = vmatmul.mubr.f32.gmra.mrb[0].mxu0 %v219
  %v632 = vpop.f32.mrb[0].mxu0
  %v633 = vadd.f32 %v154, %v632
  %v634 = vpop.f32.mrb[0].mxu0
  %v635 = vadd.f32 %v158, %v634
  %636 = vmatprep.mubr.f32.mxu0 0.0
  %637 = vmatmul.mubr.f32.gmra.mrb[0].mxu0 %v222
  %v638 = vpop.f32.mrb[0].mxu0
  %v639 = vadd.f32 %v154, %v638
  %v640 = vpop.f32.mrb[0].mxu0
  %v641 = vadd.f32 %v158, %v640
  %642 = vmatprep.mubr.f32.mxu0 0.0
  %643 = vmatmul.mubr.f32.gmra.mrb[0].mxu0 %v225
  %v644 = vpop.f32.mrb[0].mxu0
  %v645 = vadd.f32 %v154, %v644
  %v646 = vpop.f32.mrb[0].mxu0
  %v647 = vadd.f32 %v158, %v646
  %648 = vmatprep.mubr.f32.mxu0 0.0
  %649 = vmatmul.mubr.f32.gmra.mrb[0].mxu0 %v228
  %v650 = vpop.f32.mrb[0].mxu0
  %v651 = vadd.f32 %v154, %v650
  %v652 = vpop.f32.mrb[0].mxu0
  %v653 = vadd.f32 %v158, %v652
  %654 = vmatprep.mubr.f32.mxu0 0.0
  %655 = vmatmul.mubr.f32.gmra.mrb[0].mxu0 %v231
  %v656 = vpop.f32.mrb[0].mxu0
  %v657 = vadd.f32 %v154, %v656
  %v658 = vpop.f32.mrb[0].mxu0
  %v659 = vadd.f32 %v158, %v658
  %660 = vmatprep.mubr.f32.mxu0 0.0
  %661 = vmatmul.mubr.f32.gmra.mrb[0].mxu0 %v234
  %v662 = vpop.f32.mrb[0].mxu0
  %v663 = vadd.f32 %v154, %v662
  %v664 = vpop.f32.mrb[0].mxu0
  %v665 = vadd.f32 %v158, %v664
  %666 = vdwg.mxu0
  %667 = vmatprep.subr.mxu0 %v26
  %668 = vmatpush1.msra.mxu0 %v25
  %669 = vmatprep.subr.mxu0 %v30
  %670 = vmatpush1.msra.mxu0 %v29
  %671 = vmatprep.subr.mxu0 %v34
  %672 = vmatpush1.msra.mxu0 %v33
  %673 = vmatprep.subr.mxu0 %v38
  %674 = vmatpush1.msra.mxu0 %v37
  %675 = vmatprep.subr.mxu0 %v42
  %676 = vmatpush1.msra.mxu0 %v41
  %677 = vmatprep.subr.mxu0 %v46
  %678 = vmatpush1.msra.mxu0 %v45
  %679 = vmatprep.subr.mxu0 %v50
  %680 = vmatpush1.msra.mxu0 %v49
  %681 = vmatprep.subr.mxu0 %v54
  %682 = vmatpush1.msra.mxu0 %v53
  %683 = vmatprep.subr.mxu0 %v58
  %684 = vmatpush1.msra.mxu0 %v57
  %685 = vmatprep.subr.mxu0 %v62
  %686 = vmatpush1.msra.mxu0 %v61
  %687 = vmatprep.subr.mxu0 %v66
  %688 = vmatpush1.msra.mxu0 %v65
  %689 = vmatprep.subr.mxu0 %v70
  %690 = vmatpush1.msra.mxu0 %v69
  %691 = vmatprep.subr.mxu0 %v74
  %692 = vmatpush1.msra.mxu0 %v73
  %693 = vmatprep.subr.mxu0 %v78
  %694 = vmatpush1.msra.mxu0 %v77
  %695 = vmatprep.subr.mxu0 %v82
  %696 = vmatpush1.msra.mxu0 %v81
  %697 = vmatprep.subr.mxu0 %v86
  %698 = vmatpush1.msra.mxu0 %v85
  %699 = vmatprep.subr.mxu0 0.0
  %700 = vmatpush1.msra.mxu0 0.0
  %701 = vmatprep.subr.mxu0 0.0
  %702 = vmatpush1.msra.mxu0 0.0
  %703 = vmatprep.subr.mxu0 0.0
  %704 = vmatpush1.msra.mxu0 0.0
  %705 = vmatprep.subr.mxu0 0.0
  %706 = vmatpush1.msra.mxu0 0.0
  %707 = vmatprep.subr.mxu0 0.0
  %708 = vmatpush1.msra.mxu0 0.0
  %709 = vmatprep.subr.mxu0 0.0
  %710 = vmatpush1.msra.mxu0 0.0
  %711 = vmatprep.subr.mxu0 0.0
  %712 = vmatpush1.msra.mxu0 0.0
  %713 = vmatprep.subr.mxu0 0.0
  %714 = vmatpush1.msra.mxu0 0.0
  %715 = vmatprep.subr.mxu0 0.0
  %716 = vmatpush1.msra.mxu0 0.0
  %717 = vmatprep.subr.mxu0 0.0
  %718 = vmatpush1.msra.mxu0 0.0
  %719 = vmatprep.subr.mxu0 0.0
  %720 = vmatpush1.msra.mxu0 0.0
  %721 = vmatprep.subr.mxu0 0.0
  %722 = vmatpush1.msra.mxu0 0.0
  %723 = vmatprep.subr.mxu0 0.0
  %724 = vmatpush1.msra.mxu0 0.0
  %725 = vmatprep.subr.mxu0 0.0
  %726 = vmatpush1.msra.mxu0 0.0
  %727 = vmatprep.subr.mxu0 0.0
  %728 = vmatpush1.msra.mxu0 0.0
  %729 = vmatprep.subr.mxu0 0.0
  %730 = vmatpush1.msra.mxu0 0.0
  %731 = vmatprep.mubr.f32.mxu0 0.0
  %732 = vmatmul.mubr.f32.gmra.mrb[0].mxu0 0.0
  %v733 = vpop.f32.mrb[0].mxu0
  %v734 = vadd.f32 0.0, %v733
  %v735 = vpop.f32.mrb[0].mxu0
  %v736 = vadd.f32 0.0, %v735
  %737 = vmatprep.mubr.f32.mxu0 0.0
  %738 = vmatmul.mubr.f32.gmra.mrb[0].mxu0 0.0
  %v739 = vpop.f32.mrb[0].mxu0
  %v740 = vadd.f32 0.0, %v739
  %v741 = vpop.f32.mrb[0].mxu0
  %v742 = vadd.f32 0.0, %v741
  %743 = vmatprep.mubr.f32.mxu0 0.0
  %744 = vmatmul.mubr.f32.gmra.mrb[0].mxu0 0.0
  %v745 = vpop.f32.mrb[0].mxu0
  %v746 = vadd.f32 0.0, %v745
  %v747 = vpop.f32.mrb[0].mxu0
  %v748 = vadd.f32 0.0, %v747
  %749 = vdwg.mxu0
  %750 = vmatprep.subr.mxu0 %v28
  %751 = vmatpush1.msra.mxu0 %v27
  %752 = vmatprep.subr.mxu0 %v32
  %753 = vmatpush1.msra.mxu0 %v31
  %754 = vmatprep.subr.mxu0 %v36
  %755 = vmatpush1.msra.mxu0 %v35
  %756 = vmatprep.subr.mxu0 %v40
  %757 = vmatpush1.msra.mxu0 %v39
  %758 = vmatprep.subr.mxu0 %v44
  %759 = vmatpush1.msra.mxu0 %v43
  %760 = vmatprep.subr.mxu0 %v48
  %761 = vmatpush1.msra.mxu0 %v47
  %762 = vmatprep.subr.mxu0 %v52
  %763 = vmatpush1.msra.mxu0 %v51
  %764 = vmatprep.subr.mxu0 %v56
  %765 = vmatpush1.msra.mxu0 %v55
  %766 = vmatprep.subr.mxu0 %v60
  %767 = vmatpush1.msra.mxu0 %v59
  %768 = vmatprep.subr.mxu0 %v64
  %769 = vmatpush1.msra.mxu0 %v63
  %770 = vmatprep.subr.mxu0 %v68
  %771 = vmatpush1.msra.mxu0 %v67
  %772 = vmatprep.subr.mxu0 %v72
  %773 = vmatpush1.msra.mxu0 %v71
  %774 = vmatprep.subr.mxu0 %v76
  %775 = vmatpush1.msra.mxu0 %v75
  %776 = vmatprep.subr.mxu0 %v80
  %777 = vmatpush1.msra.mxu0 %v79
  %778 = vmatprep.subr.mxu0 %v84
  %779 = vmatpush1.msra.mxu0 %v83
  %780 = vmatprep.subr.mxu0 %v88
  %781 = vmatpush1.msra.mxu0 %v87
  %782 = vmatprep.subr.mxu0 0.0
  %783 = vmatpush1.msra.mxu0 0.0
  %784 = vmatprep.subr.mxu0 0.0
  %785 = vmatpush1.msra.mxu0 0.0
  %786 = vmatprep.subr.mxu0 0.0
  %787 = vmatpush1.msra.mxu0 0.0
  %788 = vmatprep.subr.mxu0 0.0
  %789 = vmatpush1.msra.mxu0 0.0
  %790 = vmatprep.subr.mxu0 0.0
  %791 = vmatpush1.msra.mxu0 0.0
  %792 = vmatprep.subr.mxu0 0.0
  %793 = vmatpush1.msra.mxu0 0.0
  %794 = vmatprep.subr.mxu0 0.0
  %795 = vmatpush1.msra.mxu0 0.0
  %796 = vmatprep.subr.mxu0 0.0
  %797 = vmatpush1.msra.mxu0 0.0
  %798 = vmatprep.subr.mxu0 0.0
  %799 = vmatpush1.msra.mxu0 0.0
  %800 = vmatprep.subr.mxu0 0.0
  %801 = vmatpush1.msra.mxu0 0.0
  %802 = vmatprep.subr.mxu0 0.0
  %803 = vmatpush1.msra.mxu0 0.0
  %804 = vmatprep.subr.mxu0 0.0
  %805 = vmatpush1.msra.mxu0 0.0
  %806 = vmatprep.subr.mxu0 0.0
  %807 = vmatpush1.msra.mxu0 0.0
  %808 = vmatprep.subr.mxu0 0.0
  %809 = vmatpush1.msra.mxu0 0.0
  %810 = vmatprep.subr.mxu0 0.0
  %811 = vmatpush1.msra.mxu0 0.0
  %812 = vmatprep.subr.mxu0 0.0
  %813 = vmatpush1.msra.mxu0 0.0
  %814 = vmatprep.mubr.f32.mxu0 0.0
  %815 = vmatmul.mubr.f32.gmra.mrb[0].mxu0 0.0
  %v816 = vpop.f32.mrb[0].mxu0
  %v817 = vadd.f32 0.0, %v816
  %v818 = vpop.f32.mrb[0].mxu0
  %v819 = vadd.f32 0.0, %v818
  %820 = vmatprep.mubr.f32.mxu0 0.0
  %821 = vmatmul.mubr.f32.gmra.mrb[0].mxu0 0.0
  %v822 = vpop.f32.mrb[0].mxu0
  %v823 = vadd.f32 0.0, %v822
  %v824 = vpop.f32.mrb[0].mxu0
  %v825 = vadd.f32 0.0, %v824
  %826 = vmatprep.mubr.f32.mxu0 0.0
  %827 = vmatmul.mubr.f32.gmra.mrb[0].mxu0 0.0
  %v828 = vpop.f32.mrb[0].mxu0
  %v829 = vadd.f32 0.0, %v828
  %v830 = vpop.f32.mrb[0].mxu0
  %v831 = vadd.f32 0.0, %v830
  %832 = vdwg.mxu0
  %v833 = vadd.f32 %v316, %v734
  %v834 = vadd.f32 %v318, %v736
  %v835 = vadd.f32 %v525, %v817
  %v836 = vadd.f32 %v527, %v819
  %v837 = vadd.f32 %v322, %v740
  %v838 = vadd.f32 %v324, %v742
  %v839 = vadd.f32 %v531, %v823
  %v840 = vadd.f32 %v533, %v825
  %v841 = vadd.f32 %v328, %v746
  %v842 = vadd.f32 %v330, %v748
  %v843 = vadd.f32 %v537, %v829
  %v844 = vadd.f32 %v539, %v831
  %v845 = vmul.f32 %v833, 0.5
  %v846 = vmul.f32 %v837, 0.5
  %v847 = vmul.f32 %v841, 0.5
  %v848 = vtanh.pop %v845
  %v849 = vtanh.pop %v846
  %v850 = vtanh.pop %v847
  %v851 = vadd.f32 %v848, 1.0
  %v852 = vadd.f32 %v849, 1.0
  %v853 = vadd.f32 %v850, 1.0
  %v854 = vmul.f32 %v851, 0.5
  %v855 = vmul.f32 %v852, 0.5
  %v856 = vmul.f32 %v853, 0.5
  %v857 = vmul.f32 %v834, 0.5
  %v858 = vmul.f32 %v838, 0.5
  %v859 = vmul.f32 %v842, 0.5
  %v860 = vtanh.pop %v857
  %v861 = vtanh.pop %v858
  %v862 = vtanh.pop %v859
  %v863 = vadd.f32 %v860, 1.0
  %v864 = vadd.f32 %v861, 1.0
  %v865 = vadd.f32 %v862, 1.0
  %v866 = vmul.f32 %v863, 0.5
  %v867 = vmul.f32 %v864, 0.5
  %v868 = vmul.f32 %v865, 0.5
  %v869 = vtanh.pop %v835
  %v870 = vtanh.pop %v839
  %v871 = vtanh.pop %v843
  %v872 = vmul.f32 %v836, 0.5
  %v873 = vmul.f32 %v840, 0.5
  %v874 = vmul.f32 %v844, 0.5
  %v875 = vtanh.pop %v872
  %v876 = vtanh.pop %v873
  %v877 = vtanh.pop %v874
  %v878 = vadd.f32 %v875, 1.0
  %v879 = vadd.f32 %v876, 1.0
  %v880 = vadd.f32 %v877, 1.0
  %v881 = vmul.f32 %v878, 0.5
  %v882 = vmul.f32 %v879, 0.5
  %v883 = vmul.f32 %v880, 0.5
  %v884 = vmul.f32 %v866, 0.0
  %v885 = vmul.f32 %v867, 0.0
  %v886 = vmul.f32 %v868, 0.0
  %v887 = vmul.f32 %v854, %v869
  %v888 = vmul.f32 %v855, %v870
  %v889 = vmul.f32 %v856, %v871
  %v890 = vadd.f32 %v884, %v887
  %v891 = vadd.f32 %v885, %v888
  %v892 = vadd.f32 %v886, %v889
  %v893 = vtanh.pop %v890
  %v894 = vtanh.pop %v891
  %v895 = vtanh.pop %v892
  %v896 = vmul.f32 %v881, %v893
  %v897 = vmul.f32 %v882, %v894
  %v898 = vmul.f32 %v883, %v895
  %v899 = vadd.f32 %v896, 0.0
  %v900 = vadd.f32 %v897, 0.0
  %v901 = vadd.f32 %v898, 0.0
  %902 = vmatprep.subr.mxu0 %v26
  %903 = vmatpush1.msra.mxu0 %v25
  %904 = vmatprep.subr.mxu0 %v30
  %905 = vmatpush1.msra.mxu0 %v29
  %906 = vmatprep.subr.mxu0 %v34
  %907 = vmatpush1.msra.mxu0 %v33
  %908 = vmatprep.subr.mxu0 %v38
  %909 = vmatpush1.msra.mxu0 %v37
  %910 = vmatprep.subr.mxu0 %v42
  %911 = vmatpush1.msra.mxu0 %v41
  %912 = vmatprep.subr.mxu0 %v46
  %913 = vmatpush1.msra.mxu0 %v45
  %914 = vmatprep.subr.mxu0 %v50
  %915 = vmatpush1.msra.mxu0 %v49
  %916 = vmatprep.subr.mxu0 %v54
  %917 = vmatpush1.msra.mxu0 %v53
  %918 = vmatprep.subr.mxu0 %v58
  %919 = vmatpush1.msra.mxu0 %v57
  %920 = vmatprep.subr.mxu0 %v62
  %921 = vmatpush1.msra.mxu0 %v61
  %922 = vmatprep.subr.mxu0 %v66
  %923 = vmatpush1.msra.mxu0 %v65
  %924 = vmatprep.subr.mxu0 %v70
  %925 = vmatpush1.msra.mxu0 %v69
  %926 = vmatprep.subr.mxu0 %v74
  %927 = vmatpush1.msra.mxu0 %v73
  %928 = vmatprep.subr.mxu0 %v78
  %929 = vmatpush1.msra.mxu0 %v77
  %930 = vmatprep.subr.mxu0 %v82
  %931 = vmatpush1.msra.mxu0 %v81
  %932 = vmatprep.subr.mxu0 %v86
  %933 = vmatpush1.msra.mxu0 %v85
  %934 = vmatprep.subr.mxu0 0.0
  %935 = vmatpush1.msra.mxu0 0.0
  %936 = vmatprep.subr.mxu0 0.0
  %937 = vmatpush1.msra.mxu0 0.0
  %938 = vmatprep.subr.mxu0 0.0
  %939 = vmatpush1.msra.mxu0 0.0
  %940 = vmatprep.subr.mxu0 0.0
  %941 = vmatpush1.msra.mxu0 0.0
  %942 = vmatprep.subr.mxu0 0.0
  %943 = vmatpush1.msra.mxu0 0.0
  %944 = vmatprep.subr.mxu0 0.0
  %945 = vmatpush1.msra.mxu0 0.0
  %946 = vmatprep.subr.mxu0 0.0
  %947 = vmatpush1.msra.mxu0 0.0
  %948 = vmatprep.subr.mxu0 0.0
  %949 = vmatpush1.msra.mxu0 0.0
  %950 = vmatprep.subr.mxu0 0.0
  %951 = vmatpush1.msra.mxu0 0.0
  %952 = vmatprep.subr.mxu0 0.0
  %953 = vmatpush1.msra.mxu0 0.0
  %954 = vmatprep.subr.mxu0 0.0
  %955 = vmatpush1.msra.mxu0 0.0
  %956 = vmatprep.subr.mxu0 0.0
  %957 = vmatpush1.msra.mxu0 0.0
  %958 = vmatprep.subr.mxu0 0.0
  %959 = vmatpush1.msra.mxu0 0.0
  %960 = vmatprep.subr.mxu0 0.0
  %961 = vmatpush1.msra.mxu0 0.0
  %962 = vmatprep.subr.mxu0 0.0
  %963 = vmatpush1.msra.mxu0 0.0
  %964 = vmatprep.subr.mxu0 0.0
  %965 = vmatpush1.msra.mxu0 0.0
  %966 = vmatprep.mubr.f32.mxu0 0.0
  %967 = vmatmul.mubr.f32.gmra.mrb[0].mxu0 %v896
  %v968 = vpop.f32.mrb[0].mxu0
  %v969 = vadd.f32 0.0, %v968
  %v970 = vpop.f32.mrb[0].mxu0
  %v971 = vadd.f32 0.0, %v970
  %972 = vmatprep.mubr.f32.mxu0 0.0
  %973 = vmatmul.mubr.f32.gmra.mrb[0].mxu0 %v897
  %v974 = vpop.f32.mrb[0].mxu0
  %v975 = vadd.f32 0.0, %v974
  %v976 = vpop.f32.mrb[0].mxu0
  %v977 = vadd.f32 0.0, %v976
  %978 = vmatprep.mubr.f32.mxu0 0.0
  %979 = vmatmul.mubr.f32.gmra.mrb[0].mxu0 %v898
  %v980 = vpop.f32.mrb[0].mxu0
  %v981 = vadd.f32 0.0, %v980
  %v982 = vpop.f32.mrb[0].mxu0
  %v983 = vadd.f32 0.0, %v982
  %984 = vdwg.mxu0
  %985 = vmatprep.subr.mxu0 %v28
  %986 = vmatpush1.msra.mxu0 %v27
  %987 = vmatprep.subr.mxu0 %v32
  %988 = vmatpush1.msra.mxu0 %v31
  %989 = vmatprep.subr.mxu0 %v36
  %990 = vmatpush1.msra.mxu0 %v35
  %991 = vmatprep.subr.mxu0 %v40
  %992 = vmatpush1.msra.mxu0 %v39
  %993 = vmatprep.subr.mxu0 %v44
  %994 = vmatpush1.msra.mxu0 %v43
  %995 = vmatprep.subr.mxu0 %v48
  %996 = vmatpush1.msra.mxu0 %v47
  %997 = vmatprep.subr.mxu0 %v52
  %998 = vmatpush1.msra.mxu0 %v51
  %999 = vmatprep.subr.mxu0 %v56
  %1000 = vmatpush1.msra.mxu0 %v55
  %1001 = vmatprep.subr.mxu0 %v60
  %1002 = vmatpush1.msra.mxu0 %v59
  %1003 = vmatprep.subr.mxu0 %v64
  %1004 = vmatpush1.msra.mxu0 %v63
  %1005 = vmatprep.subr.mxu0 %v68
  %1006 = vmatpush1.msra.mxu0 %v67
  %1007 = vmatprep.subr.mxu0 %v72
  %1008 = vmatpush1.msra.mxu0 %v71
  %1009 = vmatprep.subr.mxu0 %v76
  %1010 = vmatpush1.msra.mxu0 %v75
  %1011 = vmatprep.subr.mxu0 %v80
  %1012 = vmatpush1.msra.mxu0 %v79
  %1013 = vmatprep.subr.mxu0 %v84
  %1014 = vmatpush1.msra.mxu0 %v83
  %1015 = vmatprep.subr.mxu0 %v88
  %1016 = vmatpush1.msra.mxu0 %v87
  %1017 = vmatprep.subr.mxu0 0.0
  %1018 = vmatpush1.msra.mxu0 0.0
  %1019 = vmatprep.subr.mxu0 0.0
  %1020 = vmatpush1.msra.mxu0 0.0
  %1021 = vmatprep.subr.mxu0 0.0
  %1022 = vmatpush1.msra.mxu0 0.0
  %1023 = vmatprep.subr.mxu0 0.0
  %1024 = vmatpush1.msra.mxu0 0.0
  %1025 = vmatprep.subr.mxu0 0.0
  %1026 = vmatpush1.msra.mxu0 0.0
  %1027 = vmatprep.subr.mxu0 0.0
  %1028 = vmatpush1.msra.mxu0 0.0
  %1029 = vmatprep.subr.mxu0 0.0
  %1030 = vmatpush1.msra.mxu0 0.0
  %1031 = vmatprep.subr.mxu0 0.0
  %1032 = vmatpush1.msra.mxu0 0.0
  %1033 = vmatprep.subr.mxu0 0.0
  %1034 = vmatpush1.msra.mxu0 0.0
  %1035 = vmatprep.subr.mxu0 0.0
  %1036 = vmatpush1.msra.mxu0 0.0
  %1037 = vmatprep.subr.mxu0 0.0
  %1038 = vmatpush1.msra.mxu0 0.0
  %1039 = vmatprep.subr.mxu0 0.0
  %1040 = vmatpush1.msra.mxu0 0.0
  %1041 = vmatprep.subr.mxu0 0.0
  %1042 = vmatpush1.msra.mxu0 0.0
  %1043 = vmatprep.subr.mxu0 0.0
  %1044 = vmatpush1.msra.mxu0 0.0
  %1045 = vmatprep.subr.mxu0 0.0
  %1046 = vmatpush1.msra.mxu0 0.0
  %1047 = vmatprep.subr.mxu0 0.0
  %1048 = vmatpush1.msra.mxu0 0.0
  %1049 = vmatprep.mubr.f32.mxu0 0.0
  %1050 = vmatmul.mubr.f32.gmra.mrb[0].mxu0 %v896
  %v1051 = vpop.f32.mrb[0].mxu0
  %v1052 = vadd.f32 0.0, %v1051
  %v1053 = vpop.f32.mrb[0].mxu0
  %v1054 = vadd.f32 0.0, %v1053
  %1055 = vmatprep.mubr.f32.mxu0 0.0
  %1056 = vmatmul.mubr.f32.gmra.mrb[0].mxu0 %v897
  %v1057 = vpop.f32.mrb[0].mxu0
  %v1058 = vadd.f32 0.0, %v1057
  %v1059 = vpop.f32.mrb[0].mxu0
  %v1060 = vadd.f32 0.0, %v1059
  %1061 = vmatprep.mubr.f32.mxu0 0.0
  %1062 = vmatmul.mubr.f32.gmra.mrb[0].mxu0 %v898
  %v1063 = vpop.f32.mrb[0].mxu0
  %v1064 = vadd.f32 0.0, %v1063
  %v1065 = vpop.f32.mrb[0].mxu0
  %v1066 = vadd.f32 0.0, %v1065
  %1067 = vdwg.mxu0
  %v1068 = vadd.f32 %v334, %v969
  %v1069 = vadd.f32 %v336, %v971
  %v1070 = vadd.f32 %v543, %v1052
  %v1071 = vadd.f32 %v545, %v1054
  %v1072 = vadd.f32 %v340, %v975
  %v1073 = vadd.f32 %v342, %v977
  %v1074 = vadd.f32 %v549, %v1058
  %v1075 = vadd.f32 %v551, %v1060
  %v1076 = vadd.f32 %v346, %v981
  %v1077 = vadd.f32 %v348, %v983
  %v1078 = vadd.f32 %v555, %v1064
  %v1079 = vadd.f32 %v557, %v1066
  %v1080 = vmul.f32 %v1068, 0.5
  %v1081 = vmul.f32 %v1072, 0.5
  %v1082 = vmul.f32 %v1076, 0.5
  %v1083 = vtanh.pop %v1080
  %v1084 = vtanh.pop %v1081
  %v1085 = vtanh.pop %v1082
  %v1086 = vadd.f32 %v1083, 1.0
  %v1087 = vadd.f32 %v1084, 1.0
  %v1088 = vadd.f32 %v1085, 1.0
  %v1089 = vmul.f32 %v1086, 0.5
  %v1090 = vmul.f32 %v1087, 0.5
  %v1091 = vmul.f32 %v1088, 0.5
  %v1092 = vmul.f32 %v1069, 0.5
  %v1093 = vmul.f32 %v1073, 0.5
  %v1094 = vmul.f32 %v1077, 0.5
  %v1095 = vtanh.pop %v1092
  %v1096 = vtanh.pop %v1093
  %v1097 = vtanh.pop %v1094
  %v1098 = vadd.f32 %v1095, 1.0
  %v1099 = vadd.f32 %v1096, 1.0
  %v1100 = vadd.f32 %v1097, 1.0
  %v1101 = vmul.f32 %v1098, 0.5
  %v1102 = vmul.f32 %v1099, 0.5
  %v1103 = vmul.f32 %v1100, 0.5
  %v1104 = vtanh.pop %v1070
  %v1105 = vtanh.pop %v1074
  %v1106 = vtanh.pop %v1078
  %v1107 = vmul.f32 %v1071, 0.5
  %v1108 = vmul.f32 %v1075, 0.5
  %v1109 = vmul.f32 %v1079, 0.5
  %v1110 = vtanh.pop %v1107
  %v1111 = vtanh.pop %v1108
  %v1112 = vtanh.pop %v1109
  %v1113 = vadd.f32 %v1110, 1.0
  %v1114 = vadd.f32 %v1111, 1.0
  %v1115 = vadd.f32 %v1112, 1.0
  %v1116 = vmul.f32 %v1113, 0.5
  %v1117 = vmul.f32 %v1114, 0.5
  %v1118 = vmul.f32 %v1115, 0.5
  %v1119 = vmul.f32 %v1101, %v890
  %v1120 = vmul.f32 %v1102, %v891
  %v1121 = vmul.f32 %v1103, %v892
  %v1122 = vmul.f32 %v1089, %v1104
  %v1123 = vmul.f32 %v1090, %v1105
  %v1124 = vmul.f32 %v1091, %v1106
  %v1125 = vadd.f32 %v1119, %v1122
  %v1126 = vadd.f32 %v1120, %v1123
  %v1127 = vadd.f32 %v1121, %v1124
  %v1128 = vtanh.pop %v1125
  %v1129 = vtanh.pop %v1126
  %v1130 = vtanh.pop %v1127
  %v1131 = vmul.f32 %v1116, %v1128
  %v1132 = vmul.f32 %v1117, %v1129
  %v1133 = vmul.f32 %v1118, %v1130
  %v1134 = vadd.f32 %v899, %v1131
  %v1135 = vadd.f32 %v900, %v1132
  %v1136 = vadd.f32 %v901, %v1133
  %1137 = vmatprep.subr.mxu0 %v26
  %1138 = vmatpush1.msra.mxu0 %v25
  %1139 = vmatprep.subr.mxu0 %v30
  %1140 = vmatpush1.msra.mxu0 %v29
  %1141 = vmatprep.subr.mxu0 %v34
  %1142 = vmatpush1.msra.mxu0 %v33
  %1143 = vmatprep.subr.mxu0 %v38
  %1144 = vmatpush1.msra.mxu0 %v37
  %1145 = vmatprep.subr.mxu0 %v42
  %1146 = vmatpush1.msra.mxu0 %v41
  %1147 = vmatprep.subr.mxu0 %v46
  %1148 = vmatpush1.msra.mxu0 %v45
  %1149 = vmatprep.subr.mxu0 %v50
  %1150 = vmatpush1.msra.mxu0 %v49
  %1151 = vmatprep.subr.mxu0 %v54
  %1152 = vmatpush1.msra.mxu0 %v53
  %1153 = vmatprep.subr.mxu0 %v58
  %1154 = vmatpush1.msra.mxu0 %v57
  %1155 = vmatprep.subr.mxu0 %v62
  %1156 = vmatpush1.msra.mxu0 %v61
  %1157 = vmatprep.subr.mxu0 %v66
  %1158 = vmatpush1.msra.mxu0 %v65
  %1159 = vmatprep.subr.mxu0 %v70
  %1160 = vmatpush1.msra.mxu0 %v69
  %1161 = vmatprep.subr.mxu0 %v74
  %1162 = vmatpush1.msra.mxu0 %v73
  %1163 = vmatprep.subr.mxu0 %v78
  %1164 = vmatpush1.msra.mxu0 %v77
  %1165 = vmatprep.subr.mxu0 %v82
  %1166 = vmatpush1.msra.mxu0 %v81
  %1167 = vmatprep.subr.mxu0 %v86
  %1168 = vmatpush1.msra.mxu0 %v85
  %1169 = vmatprep.subr.mxu0 0.0
  %1170 = vmatpush1.msra.mxu0 0.0
  %1171 = vmatprep.subr.mxu0 0.0
  %1172 = vmatpush1.msra.mxu0 0.0
  %1173 = vmatprep.subr.mxu0 0.0
  %1174 = vmatpush1.msra.mxu0 0.0
  %1175 = vmatprep.subr.mxu0 0.0
  %1176 = vmatpush1.msra.mxu0 0.0
  %1177 = vmatprep.subr.mxu0 0.0
  %1178 = vmatpush1.msra.mxu0 0.0
  %1179 = vmatprep.subr.mxu0 0.0
  %1180 = vmatpush1.msra.mxu0 0.0
  %1181 = vmatprep.subr.mxu0 0.0
  %1182 = vmatpush1.msra.mxu0 0.0
  %1183 = vmatprep.subr.mxu0 0.0
  %1184 = vmatpush1.msra.mxu0 0.0
  %1185 = vmatprep.subr.mxu0 0.0
  %1186 = vmatpush1.msra.mxu0 0.0
  %1187 = vmatprep.subr.mxu0 0.0
  %1188 = vmatpush1.msra.mxu0 0.0
  %1189 = vmatprep.subr.mxu0 0.0
  %1190 = vmatpush1.msra.mxu0 0.0
  %1191 = vmatprep.subr.mxu0 0.0
  %1192 = vmatpush1.msra.mxu0 0.0
  %1193 = vmatprep.subr.mxu0 0.0
  %1194 = vmatpush1.msra.mxu0 0.0
  %1195 = vmatprep.subr.mxu0 0.0
  %1196 = vmatpush1.msra.mxu0 0.0
  %1197 = vmatprep.subr.mxu0 0.0
  %1198 = vmatpush1.msra.mxu0 0.0
  %1199 = vmatprep.subr.mxu0 0.0
  %1200 = vmatpush1.msra.mxu0 0.0
  %1201 = vmatprep.mubr.f32.mxu0 0.0
  %1202 = vmatmul.mubr.f32.gmra.mrb[0].mxu0 %v1131
  %v1203 = vpop.f32.mrb[0].mxu0
  %v1204 = vadd.f32 0.0, %v1203
  %v1205 = vpop.f32.mrb[0].mxu0
  %v1206 = vadd.f32 0.0, %v1205
  %1207 = vmatprep.mubr.f32.mxu0 0.0
  %1208 = vmatmul.mubr.f32.gmra.mrb[0].mxu0 %v1132
  %v1209 = vpop.f32.mrb[0].mxu0
  %v1210 = vadd.f32 0.0, %v1209
  %v1211 = vpop.f32.mrb[0].mxu0
  %v1212 = vadd.f32 0.0, %v1211
  %1213 = vmatprep.mubr.f32.mxu0 0.0
  %1214 = vmatmul.mubr.f32.gmra.mrb[0].mxu0 %v1133
  %v1215 = vpop.f32.mrb[0].mxu0
  %v1216 = vadd.f32 0.0, %v1215
  %v1217 = vpop.f32.mrb[0].mxu0
  %v1218 = vadd.f32 0.0, %v1217
  %1219 = vdwg.mxu0
  %1220 = vmatprep.subr.mxu0 %v28
  %1221 = vmatpush1.msra.mxu0 %v27
  %1222 = vmatprep.subr.mxu0 %v32
  %1223 = vmatpush1.msra.mxu0 %v31
  %1224 = vmatprep.subr.mxu0 %v36
  %1225 = vmatpush1.msra.mxu0 %v35
  %1226 = vmatprep.subr.mxu0 %v40
  %1227 = vmatpush1.msra.mxu0 %v39
  %1228 = vmatprep.subr.mxu0 %v44
  %1229 = vmatpush1.msra.mxu0 %v43
  %1230 = vmatprep.subr.mxu0 %v48
  %1231 = vmatpush1.msra.mxu0 %v47
  %1232 = vmatprep.subr.mxu0 %v52
  %1233 = vmatpush1.msra.mxu0 %v51
  %1234 = vmatprep.subr.mxu0 %v56
  %1235 = vmatpush1.msra.mxu0 %v55
  %1236 = vmatprep.subr.mxu0 %v60
  %1237 = vmatpush1.msra.mxu0 %v59
  %1238 = vmatprep.subr.mxu0 %v64
  %1239 = vmatpush1.msra.mxu0 %v63
  %1240 = vmatprep.subr.mxu0 %v68
  %1241 = vmatpush1.msra.mxu0 %v67
  %1242 = vmatprep.subr.mxu0 %v72
  %1243 = vmatpush1.msra.mxu0 %v71
  %1244 = vmatprep.subr.mxu0 %v76
  %1245 = vmatpush1.msra.mxu0 %v75
  %1246 = vmatprep.subr.mxu0 %v80
  %1247 = vmatpush1.msra.mxu0 %v79
  %1248 = vmatprep.subr.mxu0 %v84
  %1249 = vmatpush1.msra.mxu0 %v83
  %1250 = vmatprep.subr.mxu0 %v88
  %1251 = vmatpush1.msra.mxu0 %v87
  %1252 = vmatprep.subr.mxu0 0.0
  %1253 = vmatpush1.msra.mxu0 0.0
  %1254 = vmatprep.subr.mxu0 0.0
  %1255 = vmatpush1.msra.mxu0 0.0
  %1256 = vmatprep.subr.mxu0 0.0
  %1257 = vmatpush1.msra.mxu0 0.0
  %1258 = vmatprep.subr.mxu0 0.0
  %1259 = vmatpush1.msra.mxu0 0.0
  %1260 = vmatprep.subr.mxu0 0.0
  %1261 = vmatpush1.msra.mxu0 0.0
  %1262 = vmatprep.subr.mxu0 0.0
  %1263 = vmatpush1.msra.mxu0 0.0
  %1264 = vmatprep.subr.mxu0 0.0
  %1265 = vmatpush1.msra.mxu0 0.0
  %1266 = vmatprep.subr.mxu0 0.0
  %1267 = vmatpush1.msra.mxu0 0.0
  %1268 = vmatprep.subr.mxu0 0.0
  %1269 = vmatpush1.msra.mxu0 0.0
  %1270 = vmatprep.subr.mxu0 0.0
  %1271 = vmatpush1.msra.mxu0 0.0
  %1272 = vmatprep.subr.mxu0 0.0
  %1273 = vmatpush1.msra.mxu0 0.0
  %1274 = vmatprep.subr.mxu0 0.0
  %1275 = vmatpush1.msra.mxu0 0.0
  %1276 = vmatprep.subr.mxu0 0.0
  %1277 = vmatpush1.msra.mxu0 0.0
  %1278 = vmatprep.subr.mxu0 0.0
  %1279 = vmatpush1.msra.mxu0 0.0
  %1280 = vmatprep.subr.mxu0 0.0
  %1281 = vmatpush1.msra.mxu0 0.0
  %1282 = vmatprep.subr.mxu0 0.0
  %1283 = vmatpush1.msra.mxu0 0.0
  %1284 = vmatprep.mubr.f32.mxu0 0.0
  %1285 = vmatmul.mubr.f32.gmra.mrb[0].mxu0 %v1131
  %v1286 = vpop.f32.mrb[0].mxu0
  %v1287 = vadd.f32 0.0, %v1286
  %v1288 = vpop.f32.mrb[0].mxu0
  %v1289 = vadd.f32 0.0, %v1288
  %1290 = vmatprep.mubr.f32.mxu0 0.0
  %1291 = vmatmul.mubr.f32.gmra.mrb[0].mxu0 %v1132
  %v1292 = vpop.f32.mrb[0].mxu0
  %v1293 = vadd.f32 0.0, %v1292
  %v1294 = vpop.f32.mrb[0].mxu0
  %v1295 = vadd.f32 0.0, %v1294
  %1296 = vmatprep.mubr.f32.mxu0 0.0
  %1297 = vmatmul.mubr.f32.gmra.mrb[0].mxu0 %v1133
  %v1298 = vpop.f32.mrb[0].mxu0
  %v1299 = vadd.f32 0.0, %v1298
  %v1300 = vpop.f32.mrb[0].mxu0
  %v1301 = vadd.f32 0.0, %v1300
  %1302 = vdwg.mxu0
  %v1303 = vadd.f32 %v352, %v1204
  %v1304 = vadd.f32 %v354, %v1206
  %v1305 = vadd.f32 %v561, %v1287
  %v1306 = vadd.f32 %v563, %v1289
  %v1307 = vadd.f32 %v358, %v1210
  %v1308 = vadd.f32 %v360, %v1212
  %v1309 = vadd.f32 %v567, %v1293
  %v1310 = vadd.f32 %v569, %v1295
  %v1311 = vadd.f32 %v364, %v1216
  %v1312 = vadd.f32 %v366, %v1218
  %v1313 = vadd.f32 %v573, %v1299
  %v1314 = vadd.f32 %v575, %v1301
  %v1315 = vmul.f32 %v1303, 0.5
  %v1316 = vmul.f32 %v1307, 0.5
  %v1317 = vmul.f32 %v1311, 0.5
  %v1318 = vtanh.pop %v1315
  %v1319 = vtanh.pop %v1316
  %v1320 = vtanh.pop %v1317
  %v1321 = vadd.f32 %v1318, 1.0
  %v1322 = vadd.f32 %v1319, 1.0
  %v1323 = vadd.f32 %v1320, 1.0
  %v1324 = vmul.f32 %v1321, 0.5
  %v1325 = vmul.f32 %v1322, 0.5
  %v1326 = vmul.f32 %v1323, 0.5
  %v1327 = vmul.f32 %v1304, 0.5
  %v1328 = vmul.f32 %v1308, 0.5
  %v1329 = vmul.f32 %v1312, 0.5
  %v1330 = vtanh.pop %v1327
  %v1331 = vtanh.pop %v1328
  %v1332 = vtanh.pop %v1329
  %v1333 = vadd.f32 %v1330, 1.0
  %v1334 = vadd.f32 %v1331, 1.0
  %v1335 = vadd.f32 %v1332, 1.0
  %v1336 = vmul.f32 %v1333, 0.5
  %v1337 = vmul.f32 %v1334, 0.5
  %v1338 = vmul.f32 %v1335, 0.5
  %v1339 = vtanh.pop %v1305
  %v1340 = vtanh.pop %v1309
  %v1341 = vtanh.pop %v1313
  %v1342 = vmul.f32 %v1306, 0.5
  %v1343 = vmul.f32 %v1310, 0.5
  %v1344 = vmul.f32 %v1314, 0.5
  %v1345 = vtanh.pop %v1342
  %v1346 = vtanh.pop %v1343
  %v1347 = vtanh.pop %v1344
  %v1348 = vadd.f32 %v1345, 1.0
  %v1349 = vadd.f32 %v1346, 1.0
  %v1350 = vadd.f32 %v1347, 1.0
  %v1351 = vmul.f32 %v1348, 0.5
  %v1352 = vmul.f32 %v1349, 0.5
  %v1353 = vmul.f32 %v1350, 0.5
  %v1354 = vmul.f32 %v1336, %v1125
  %v1355 = vmul.f32 %v1337, %v1126
  %v1356 = vmul.f32 %v1338, %v1127
  %v1357 = vmul.f32 %v1324, %v1339
  %v1358 = vmul.f32 %v1325, %v1340
  %v1359 = vmul.f32 %v1326, %v1341
  %v1360 = vadd.f32 %v1354, %v1357
  %v1361 = vadd.f32 %v1355, %v1358
  %v1362 = vadd.f32 %v1356, %v1359
  %v1363 = vtanh.pop %v1360
  %v1364 = vtanh.pop %v1361
  %v1365 = vtanh.pop %v1362
  %v1366 = vmul.f32 %v1351, %v1363
  %v1367 = vmul.f32 %v1352, %v1364
  %v1368 = vmul.f32 %v1353, %v1365
  %v1369 = vadd.f32 %v1134, %v1366
  %v1370 = vadd.f32 %v1135, %v1367
  %v1371 = vadd.f32 %v1136, %v1368
  %1372 = vmatprep.subr.mxu0 %v26
  %1373 = vmatpush1.msra.mxu0 %v25
  %1374 = vmatprep.subr.mxu0 %v30
  %1375 = vmatpush1.msra.mxu0 %v29
  %1376 = vmatprep.subr.mxu0 %v34
  %1377 = vmatpush1.msra.mxu0 %v33
  %1378 = vmatprep.subr.mxu0 %v38
  %1379 = vmatpush1.msra.mxu0 %v37
  %1380 = vmatprep.subr.mxu0 %v42
  %1381 = vmatpush1.msra.mxu0 %v41
  %1382 = vmatprep.subr.mxu0 %v46
  %1383 = vmatpush1.msra.mxu0 %v45
  %1384 = vmatprep.subr.mxu0 %v50
  %1385 = vmatpush1.msra.mxu0 %v49
  %1386 = vmatprep.subr.mxu0 %v54
  %1387 = vmatpush1.msra.mxu0 %v53
  %1388 = vmatprep.subr.mxu0 %v58
  %1389 = vmatpush1.msra.mxu0 %v57
  %1390 = vmatprep.subr.mxu0 %v62
  %1391 = vmatpush1.msra.mxu0 %v61
  %1392 = vmatprep.subr.mxu0 %v66
  %1393 = vmatpush1.msra.mxu0 %v65
  %1394 = vmatprep.subr.mxu0 %v70
  %1395 = vmatpush1.msra.mxu0 %v69
  %1396 = vmatprep.subr.mxu0 %v74
  %1397 = vmatpush1.msra.mxu0 %v73
  %1398 = vmatprep.subr.mxu0 %v78
  %1399 = vmatpush1.msra.mxu0 %v77
  %1400 = vmatprep.subr.mxu0 %v82
  %1401 = vmatpush1.msra.mxu0 %v81
  %1402 = vmatprep.subr.mxu0 %v86
  %1403 = vmatpush1.msra.mxu0 %v85
  %1404 = vmatprep.subr.mxu0 0.0
  %1405 = vmatpush1.msra.mxu0 0.0
  %1406 = vmatprep.subr.mxu0 0.0
  %1407 = vmatpush1.msra.mxu0 0.0
  %1408 = vmatprep.subr.mxu0 0.0
  %1409 = vmatpush1.msra.mxu0 0.0
  %1410 = vmatprep.subr.mxu0 0.0
  %1411 = vmatpush1.msra.mxu0 0.0
  %1412 = vmatprep.subr.mxu0 0.0
  %1413 = vmatpush1.msra.mxu0 0.0
  %1414 = vmatprep.subr.mxu0 0.0
  %1415 = vmatpush1.msra.mxu0 0.0
  %1416 = vmatprep.subr.mxu0 0.0
  %1417 = vmatpush1.msra.mxu0 0.0
  %1418 = vmatprep.subr.mxu0 0.0
  %1419 = vmatpush1.msra.mxu0 0.0
  %1420 = vmatprep.subr.mxu0 0.0
  %1421 = vmatpush1.msra.mxu0 0.0
  %1422 = vmatprep.subr.mxu0 0.0
  %1423 = vmatpush1.msra.mxu0 0.0
  %1424 = vmatprep.subr.mxu0 0.0
  %1425 = vmatpush1.msra.mxu0 0.0
  %1426 = vmatprep.subr.mxu0 0.0
  %1427 = vmatpush1.msra.mxu0 0.0
  %1428 = vmatprep.subr.mxu0 0.0
  %1429 = vmatpush1.msra.mxu0 0.0
  %1430 = vmatprep.subr.mxu0 0.0
  %1431 = vmatpush1.msra.mxu0 0.0
  %1432 = vmatprep.subr.mxu0 0.0
  %1433 = vmatpush1.msra.mxu0 0.0
  %1434 = vmatprep.subr.mxu0 0.0
  %1435 = vmatpush1.msra.mxu0 0.0
  %1436 = vmatprep.mubr.f32.mxu0 0.0
  %1437 = vmatmul.mubr.f32.gmra.mrb[0].mxu0 %v1366
  %v1438 = vpop.f32.mrb[0].mxu0
  %v1439 = vadd.f32 0.0, %v1438
  %v1440 = vpop.f32.mrb[0].mxu0
  %v1441 = vadd.f32 0.0, %v1440
  %1442 = vmatprep.mubr.f32.mxu0 0.0
  %1443 = vmatmul.mubr.f32.gmra.mrb[0].mxu0 %v1367
  %v1444 = vpop.f32.mrb[0].mxu0
  %v1445 = vadd.f32 0.0, %v1444
  %v1446 = vpop.f32.mrb[0].mxu0
  %v1447 = vadd.f32 0.0, %v1446
  %1448 = vmatprep.mubr.f32.mxu0 0.0
  %1449 = vmatmul.mubr.f32.gmra.mrb[0].mxu0 %v1368
  %v1450 = vpop.f32.mrb[0].mxu0
  %v1451 = vadd.f32 0.0, %v1450
  %v1452 = vpop.f32.mrb[0].mxu0
  %v1453 = vadd.f32 0.0, %v1452
  %1454 = vdwg.mxu0
  %1455 = vmatprep.subr.mxu0 %v28
  %1456 = vmatpush1.msra.mxu0 %v27
  %1457 = vmatprep.subr.mxu0 %v32
  %1458 = vmatpush1.msra.mxu0 %v31
  %1459 = vmatprep.subr.mxu0 %v36
  %1460 = vmatpush1.msra.mxu0 %v35
  %1461 = vmatprep.subr.mxu0 %v40
  %1462 = vmatpush1.msra.mxu0 %v39
  %1463 = vmatprep.subr.mxu0 %v44
  %1464 = vmatpush1.msra.mxu0 %v43
  %1465 = vmatprep.subr.mxu0 %v48
  %1466 = vmatpush1.msra.mxu0 %v47
  %1467 = vmatprep.subr.mxu0 %v52
  %1468 = vmatpush1.msra.mxu0 %v51
  %1469 = vmatprep.subr.mxu0 %v56
  %1470 = vmatpush1.msra.mxu0 %v55
  %1471 = vmatprep.subr.mxu0 %v60
  %1472 = vmatpush1.msra.mxu0 %v59
  %1473 = vmatprep.subr.mxu0 %v64
  %1474 = vmatpush1.msra.mxu0 %v63
  %1475 = vmatprep.subr.mxu0 %v68
  %1476 = vmatpush1.msra.mxu0 %v67
  %1477 = vmatprep.subr.mxu0 %v72
  %1478 = vmatpush1.msra.mxu0 %v71
  %1479 = vmatprep.subr.mxu0 %v76
  %1480 = vmatpush1.msra.mxu0 %v75
  %1481 = vmatprep.subr.mxu0 %v80
  %1482 = vmatpush1.msra.mxu0 %v79
  %1483 = vmatprep.subr.mxu0 %v84
  %1484 = vmatpush1.msra.mxu0 %v83
  %1485 = vmatprep.subr.mxu0 %v88
  %1486 = vmatpush1.msra.mxu0 %v87
  %1487 = vmatprep.subr.mxu0 0.0
  %1488 = vmatpush1.msra.mxu0 0.0
  %1489 = vmatprep.subr.mxu0 0.0
  %1490 = vmatpush1.msra.mxu0 0.0
  %1491 = vmatprep.subr.mxu0 0.0
  %1492 = vmatpush1.msra.mxu0 0.0
  %1493 = vmatprep.subr.mxu0 0.0
  %1494 = vmatpush1.msra.mxu0 0.0
  %1495 = vmatprep.subr.mxu0 0.0
  %1496 = vmatpush1.msra.mxu0 0.0
  %1497 = vmatprep.subr.mxu0 0.0
  %1498 = vmatpush1.msra.mxu0 0.0
  %1499 = vmatprep.subr.mxu0 0.0
  %1500 = vmatpush1.msra.mxu0 0.0
  %1501 = vmatprep.subr.mxu0 0.0
  %1502 = vmatpush1.msra.mxu0 0.0
  %1503 = vmatprep.subr.mxu0 0.0
  %1504 = vmatpush1.msra.mxu0 0.0
  %1505 = vmatprep.subr.mxu0 0.0
  %1506 = vmatpush1.msra.mxu0 0.0
  %1507 = vmatprep.subr.mxu0 0.0
  %1508 = vmatpush1.msra.mxu0 0.0
  %1509 = vmatprep.subr.mxu0 0.0
  %1510 = vmatpush1.msra.mxu0 0.0
  %1511 = vmatprep.subr.mxu0 0.0
  %1512 = vmatpush1.msra.mxu0 0.0
  %1513 = vmatprep.subr.mxu0 0.0
  %1514 = vmatpush1.msra.mxu0 0.0
  %1515 = vmatprep.subr.mxu0 0.0
  %1516 = vmatpush1.msra.mxu0 0.0
  %1517 = vmatprep.subr.mxu0 0.0
  %1518 = vmatpush1.msra.mxu0 0.0
  %1519 = vmatprep.mubr.f32.mxu0 0.0
  %1520 = vmatmul.mubr.f32.gmra.mrb[0].mxu0 %v1366
  %v1521 = vpop.f32.mrb[0].mxu0
  %v1522 = vadd.f32 0.0, %v1521
  %v1523 = vpop.f32.mrb[0].mxu0
  %v1524 = vadd.f32 0.0, %v1523
  %1525 = vmatprep.mubr.f32.mxu0 0.0
  %1526 = vmatmul.mubr.f32.gmra.mrb[0].mxu0 %v1367
  %v1527 = vpop.f32.mrb[0].mxu0
  %v1528 = vadd.f32 0.0, %v1527
  %v1529 = vpop.f32.mrb[0].mxu0
  %v1530 = vadd.f32 0.0, %v1529
  %1531 = vmatprep.mubr.f32.mxu0 0.0
  %1532 = vmatmul.mubr.f32.gmra.mrb[0].mxu0 %v1368
  %v1533 = vpop.f32.mrb[0].mxu0
  %v1534 = vadd.f32 0.0, %v1533
  %v1535 = vpop.f32.mrb[0].mxu0
  %v1536 = vadd.f32 0.0, %v1535
  %1537 = vdwg.mxu0
  %v1538 = vadd.f32 %v370, %v1439
  %v1539 = vadd.f32 %v372, %v1441
  %v1540 = vadd.f32 %v579, %v1522
  %v1541 = vadd.f32 %v581, %v1524
  %v1542 = vadd.f32 %v376, %v1445
  %v1543 = vadd.f32 %v378, %v1447
  %v1544 = vadd.f32 %v585, %v1528
  %v1545 = vadd.f32 %v587, %v1530
  %v1546 = vadd.f32 %v382, %v1451
  %v1547 = vadd.f32 %v384, %v1453
  %v1548 = vadd.f32 %v591, %v1534
  %v1549 = vadd.f32 %v593, %v1536
  %v1550 = vmul.f32 %v1538, 0.5
  %v1551 = vmul.f32 %v1542, 0.5
  %v1552 = vmul.f32 %v1546, 0.5
  %v1553 = vtanh.pop %v1550
  %v1554 = vtanh.pop %v1551
  %v1555 = vtanh.pop %v1552
  %v1556 = vadd.f32 %v1553, 1.0
  %v1557 = vadd.f32 %v1554, 1.0
  %v1558 = vadd.f32 %v1555, 1.0
  %v1559 = vmul.f32 %v1556, 0.5
  %v1560 = vmul.f32 %v1557, 0.5
  %v1561 = vmul.f32 %v1558, 0.5
  %v1562 = vmul.f32 %v1539, 0.5
  %v1563 = vmul.f32 %v1543, 0.5
  %v1564 = vmul.f32 %v1547, 0.5
  %v1565 = vtanh.pop %v1562
  %v1566 = vtanh.pop %v1563
  %v1567 = vtanh.pop %v1564
  %v1568 = vadd.f32 %v1565, 1.0
  %v1569 = vadd.f32 %v1566, 1.0
  %v1570 = vadd.f32 %v1567, 1.0
  %v1571 = vmul.f32 %v1568, 0.5
  %v1572 = vmul.f32 %v1569, 0.5
  %v1573 = vmul.f32 %v1570, 0.5
  %v1574 = vtanh.pop %v1540
  %v1575 = vtanh.pop %v1544
  %v1576 = vtanh.pop %v1548
  %v1577 = vmul.f32 %v1541, 0.5
  %v1578 = vmul.f32 %v1545, 0.5
  %v1579 = vmul.f32 %v1549, 0.5
  %v1580 = vtanh.pop %v1577
  %v1581 = vtanh.pop %v1578
  %v1582 = vtanh.pop %v1579
  %v1583 = vadd.f32 %v1580, 1.0
  %v1584 = vadd.f32 %v1581, 1.0
  %v1585 = vadd.f32 %v1582, 1.0
  %v1586 = vmul.f32 %v1583, 0.5
  %v1587 = vmul.f32 %v1584, 0.5
  %v1588 = vmul.f32 %v1585, 0.5
  %v1589 = vmul.f32 %v1571, %v1360
  %v1590 = vmul.f32 %v1572, %v1361
  %v1591 = vmul.f32 %v1573, %v1362
  %v1592 = vmul.f32 %v1559, %v1574
  %v1593 = vmul.f32 %v1560, %v1575
  %v1594 = vmul.f32 %v1561, %v1576
  %v1595 = vadd.f32 %v1589, %v1592
  %v1596 = vadd.f32 %v1590, %v1593
  %v1597 = vadd.f32 %v1591, %v1594
  %v1598 = vtanh.pop %v1595
  %v1599 = vtanh.pop %v1596
  %v1600 = vtanh.pop %v1597
  %v1601 = vmul.f32 %v1586, %v1598
  %v1602 = vmul.f32 %v1587, %v1599
  %v1603 = vmul.f32 %v1588, %v1600
  %v1604 = vadd.f32 %v1369, %v1601
  %v1605 = vadd.f32 %v1370, %v1602
  %v1606 = vadd.f32 %v1371, %v1603
  %1607 = vmatprep.subr.mxu0 %v26
  %1608 = vmatpush1.msra.mxu0 %v25
  %1609 = vmatprep.subr.mxu0 %v30
  %1610 = vmatpush1.msra.mxu0 %v29
  %1611 = vmatprep.subr.mxu0 %v34
  %1612 = vmatpush1.msra.mxu0 %v33
  %1613 = vmatprep.subr.mxu0 %v38
  %1614 = vmatpush1.msra.mxu0 %v37
  %1615 = vmatprep.subr.mxu0 %v42
  %1616 = vmatpush1.msra.mxu0 %v41
  %1617 = vmatprep.subr.mxu0 %v46
  %1618 = vmatpush1.msra.mxu0 %v45
  %1619 = vmatprep.subr.mxu0 %v50
  %1620 = vmatpush1.msra.mxu0 %v49
  %1621 = vmatprep.subr.mxu0 %v54
  %1622 = vmatpush1.msra.mxu0 %v53
  %1623 = vmatprep.subr.mxu0 %v58
  %1624 = vmatpush1.msra.mxu0 %v57
  %1625 = vmatprep.subr.mxu0 %v62
  %1626 = vmatpush1.msra.mxu0 %v61
  %1627 = vmatprep.subr.mxu0 %v66
  %1628 = vmatpush1.msra.mxu0 %v65
  %1629 = vmatprep.subr.mxu0 %v70
  %1630 = vmatpush1.msra.mxu0 %v69
  %1631 = vmatprep.subr.mxu0 %v74
  %1632 = vmatpush1.msra.mxu0 %v73
  %1633 = vmatprep.subr.mxu0 %v78
  %1634 = vmatpush1.msra.mxu0 %v77
  %1635 = vmatprep.subr.mxu0 %v82
  %1636 = vmatpush1.msra.mxu0 %v81
  %1637 = vmatprep.subr.mxu0 %v86
  %1638 = vmatpush1.msra.mxu0 %v85
  %1639 = vmatprep.subr.mxu0 0.0
  %1640 = vmatpush1.msra.mxu0 0.0
  %1641 = vmatprep.subr.mxu0 0.0
  %1642 = vmatpush1.msra.mxu0 0.0
  %1643 = vmatprep.subr.mxu0 0.0
  %1644 = vmatpush1.msra.mxu0 0.0
  %1645 = vmatprep.subr.mxu0 0.0
  %1646 = vmatpush1.msra.mxu0 0.0
  %1647 = vmatprep.subr.mxu0 0.0
  %1648 = vmatpush1.msra.mxu0 0.0
  %1649 = vmatprep.subr.mxu0 0.0
  %1650 = vmatpush1.msra.mxu0 0.0
  %1651 = vmatprep.subr.mxu0 0.0
  %1652 = vmatpush1.msra.mxu0 0.0
  %1653 = vmatprep.subr.mxu0 0.0
  %1654 = vmatpush1.msra.mxu0 0.0
  %1655 = vmatprep.subr.mxu0 0.0
  %1656 = vmatpush1.msra.mxu0 0.0
  %1657 = vmatprep.subr.mxu0 0.0
  %1658 = vmatpush1.msra.mxu0 0.0
  %1659 = vmatprep.subr.mxu0 0.0
  %1660 = vmatpush1.msra.mxu0 0.0
  %1661 = vmatprep.subr.mxu0 0.0
  %1662 = vmatpush1.msra.mxu0 0.0
  %1663 = vmatprep.subr.mxu0 0.0
  %1664 = vmatpush1.msra.mxu0 0.0
  %1665 = vmatprep.subr.mxu0 0.0
  %1666 = vmatpush1.msra.mxu0 0.0
  %1667 = vmatprep.subr.mxu0 0.0
  %1668 = vmatpush1.msra.mxu0 0.0
  %1669 = vmatprep.subr.mxu0 0.0
  %1670 = vmatpush1.msra.mxu0 0.0
  %1671 = vmatprep.mubr.f32.mxu0 0.0
  %1672 = vmatmul.mubr.f32.gmra.mrb[0].mxu0 %v1601
  %v1673 = vpop.f32.mrb[0].mxu0
  %v1674 = vadd.f32 0.0, %v1673
  %v1675 = vpop.f32.mrb[0].mxu0
  %v1676 = vadd.f32 0.0, %v1675
  %1677 = vmatprep.mubr.f32.mxu0 0.0
  %1678 = vmatmul.mubr.f32.gmra.mrb[0].mxu0 %v1602
  %v1679 = vpop.f32.mrb[0].mxu0
  %v1680 = vadd.f32 0.0, %v1679
  %v1681 = vpop.f32.mrb[0].mxu0
  %v1682 = vadd.f32 0.0, %v1681
  %1683 = vmatprep.mubr.f32.mxu0 0.0
  %1684 = vmatmul.mubr.f32.gmra.mrb[0].mxu0 %v1603
  %v1685 = vpop.f32.mrb[0].mxu0
  %v1686 = vadd.f32 0.0, %v1685
  %v1687 = vpop.f32.mrb[0].mxu0
  %v1688 = vadd.f32 0.0, %v1687
  %1689 = vdwg.mxu0
  %1690 = vmatprep.subr.mxu0 %v28
  %1691 = vmatpush1.msra.mxu0 %v27
  %1692 = vmatprep.subr.mxu0 %v32
  %1693 = vmatpush1.msra.mxu0 %v31
  %1694 = vmatprep.subr.mxu0 %v36
  %1695 = vmatpush1.msra.mxu0 %v35
  %1696 = vmatprep.subr.mxu0 %v40
  %1697 = vmatpush1.msra.mxu0 %v39
  %1698 = vmatprep.subr.mxu0 %v44
  %1699 = vmatpush1.msra.mxu0 %v43
  %1700 = vmatprep.subr.mxu0 %v48
  %1701 = vmatpush1.msra.mxu0 %v47
  %1702 = vmatprep.subr.mxu0 %v52
  %1703 = vmatpush1.msra.mxu0 %v51
  %1704 = vmatprep.subr.mxu0 %v56
  %1705 = vmatpush1.msra.mxu0 %v55
  %1706 = vmatprep.subr.mxu0 %v60
  %1707 = vmatpush1.msra.mxu0 %v59
  %1708 = vmatprep.subr.mxu0 %v64
  %1709 = vmatpush1.msra.mxu0 %v63
  %1710 = vmatprep.subr.mxu0 %v68
  %1711 = vmatpush1.msra.mxu0 %v67
  %1712 = vmatprep.subr.mxu0 %v72
  %1713 = vmatpush1.msra.mxu0 %v71
  %1714 = vmatprep.subr.mxu0 %v76
  %1715 = vmatpush1.msra.mxu0 %v75
  %1716 = vmatprep.subr.mxu0 %v80
  %1717 = vmatpush1.msra.mxu0 %v79
  %1718 = vmatprep.subr.mxu0 %v84
  %1719 = vmatpush1.msra.mxu0 %v83
  %1720 = vmatprep.subr.mxu0 %v88
  %1721 = vmatpush1.msra.mxu0 %v87
  %1722 = vmatprep.subr.mxu0 0.0
  %1723 = vmatpush1.msra.mxu0 0.0
  %1724 = vmatprep.subr.mxu0 0.0
  %1725 = vmatpush1.msra.mxu0 0.0
  %1726 = vmatprep.subr.mxu0 0.0
  %1727 = vmatpush1.msra.mxu0 0.0
  %1728 = vmatprep.subr.mxu0 0.0
  %1729 = vmatpush1.msra.mxu0 0.0
  %1730 = vmatprep.subr.mxu0 0.0
  %1731 = vmatpush1.msra.mxu0 0.0
  %1732 = vmatprep.subr.mxu0 0.0
  %1733 = vmatpush1.msra.mxu0 0.0
  %1734 = vmatprep.subr.mxu0 0.0
  %1735 = vmatpush1.msra.mxu0 0.0
  %1736 = vmatprep.subr.mxu0 0.0
  %1737 = vmatpush1.msra.mxu0 0.0
  %1738 = vmatprep.subr.mxu0 0.0
  %1739 = vmatpush1.msra.mxu0 0.0
  %1740 = vmatprep.subr.mxu0 0.0
  %1741 = vmatpush1.msra.mxu0 0.0
  %1742 = vmatprep.subr.mxu0 0.0
  %1743 = vmatpush1.msra.mxu0 0.0
  %1744 = vmatprep.subr.mxu0 0.0
  %1745 = vmatpush1.msra.mxu0 0.0
  %1746 = vmatprep.subr.mxu0 0.0
  %1747 = vmatpush1.msra.mxu0 0.0
  %1748 = vmatprep.subr.mxu0 0.0
  %1749 = vmatpush1.msra.mxu0 0.0
  %1750 = vmatprep.subr.mxu0 0.0
  %1751 = vmatpush1.msra.mxu0 0.0
  %1752 = vmatprep.subr.mxu0 0.0
  %1753 = vmatpush1.msra.mxu0 0.0
  %1754 = vmatprep.mubr.f32.mxu0 0.0
  %1755 = vmatmul.mubr.f32.gmra.mrb[0].mxu0 %v1601
  %v1756 = vpop.f32.mrb[0].mxu0
  %v1757 = vadd.f32 0.0, %v1756
  %v1758 = vpop.f32.mrb[0].mxu0
  %v1759 = vadd.f32 0.0, %v1758
  %1760 = vmatprep.mubr.f32.mxu0 0.0
  %1761 = vmatmul.mubr.f32.gmra.mrb[0].mxu0 %v1602
  %v1762 = vpop.f32.mrb[0].mxu0
  %v1763 = vadd.f32 0.0, %v1762
  %v1764 = vpop.f32.mrb[0].mxu0
  %v1765 = vadd.f32 0.0, %v1764
  %1766 = vmatprep.mubr.f32.mxu0 0.0
  %1767 = vmatmul.mubr.f32.gmra.mrb[0].mxu0 %v1603
  %v1768 = vpop.f32.mrb[0].mxu0
  %v1769 = vadd.f32 0.0, %v1768
  %v1770 = vpop.f32.mrb[0].mxu0
  %v1771 = vadd.f32 0.0, %v1770
  %1772 = vdwg.mxu0
  %v1773 = vadd.f32 %v388, %v1674
  %v1774 = vadd.f32 %v390, %v1676
  %v1775 = vadd.f32 %v597, %v1757
  %v1776 = vadd.f32 %v599, %v1759
  %v1777 = vadd.f32 %v394, %v1680
  %v1778 = vadd.f32 %v396, %v1682
  %v1779 = vadd.f32 %v603, %v1763
  %v1780 = vadd.f32 %v605, %v1765
  %v1781 = vadd.f32 %v400, %v1686
  %v1782 = vadd.f32 %v402, %v1688
  %v1783 = vadd.f32 %v609, %v1769
  %v1784 = vadd.f32 %v611, %v1771
  %v1785 = vmul.f32 %v1773, 0.5
  %v1786 = vmul.f32 %v1777, 0.5
  %v1787 = vmul.f32 %v1781, 0.5
  %v1788 = vtanh.pop %v1785
  %v1789 = vtanh.pop %v1786
  %v1790 = vtanh.pop %v1787
  %v1791 = vadd.f32 %v1788, 1.0
  %v1792 = vadd.f32 %v1789, 1.0
  %v1793 = vadd.f32 %v1790, 1.0
  %v1794 = vmul.f32 %v1791, 0.5
  %v1795 = vmul.f32 %v1792, 0.5
  %v1796 = vmul.f32 %v1793, 0.5
  %v1797 = vmul.f32 %v1774, 0.5
  %v1798 = vmul.f32 %v1778, 0.5
  %v1799 = vmul.f32 %v1782, 0.5
  %v1800 = vtanh.pop %v1797
  %v1801 = vtanh.pop %v1798
  %v1802 = vtanh.pop %v1799
  %v1803 = vadd.f32 %v1800, 1.0
  %v1804 = vadd.f32 %v1801, 1.0
  %v1805 = vadd.f32 %v1802, 1.0
  %v1806 = vmul.f32 %v1803, 0.5
  %v1807 = vmul.f32 %v1804, 0.5
  %v1808 = vmul.f32 %v1805, 0.5
  %v1809 = vtanh.pop %v1775
  %v1810 = vtanh.pop %v1779
  %v1811 = vtanh.pop %v1783
  %v1812 = vmul.f32 %v1776, 0.5
  %v1813 = vmul.f32 %v1780, 0.5
  %v1814 = vmul.f32 %v1784, 0.5
  %v1815 = vtanh.pop %v1812
  %v1816 = vtanh.pop %v1813
  %v1817 = vtanh.pop %v1814
  %v1818 = vadd.f32 %v1815, 1.0
  %v1819 = vadd.f32 %v1816, 1.0
  %v1820 = vadd.f32 %v1817, 1.0
  %v1821 = vmul.f32 %v1818, 0.5
  %v1822 = vmul.f32 %v1819, 0.5
  %v1823 = vmul.f32 %v1820, 0.5
  %v1824 = vmul.f32 %v1806, %v1595
  %v1825 = vmul.f32 %v1807, %v1596
  %v1826 = vmul.f32 %v1808, %v1597
  %v1827 = vmul.f32 %v1794, %v1809
  %v1828 = vmul.f32 %v1795, %v1810
  %v1829 = vmul.f32 %v1796, %v1811
  %v1830 = vadd.f32 %v1824, %v1827
  %v1831 = vadd.f32 %v1825, %v1828
  %v1832 = vadd.f32 %v1826, %v1829
  %v1833 = vtanh.pop %v1830
  %v1834 = vtanh.pop %v1831
  %v1835 = vtanh.pop %v1832
  %v1836 = vmul.f32 %v1821, %v1833
  %v1837 = vmul.f32 %v1822, %v1834
  %v1838 = vmul.f32 %v1823, %v1835
  %v1839 = vadd.f32 %v1604, %v1836
  %v1840 = vadd.f32 %v1605, %v1837
  %v1841 = vadd.f32 %v1606, %v1838
  %1842 = vmatprep.subr.mxu0 %v26
  %1843 = vmatpush1.msra.mxu0 %v25
  %1844 = vmatprep.subr.mxu0 %v30
  %1845 = vmatpush1.msra.mxu0 %v29
  %1846 = vmatprep.subr.mxu0 %v34
  %1847 = vmatpush1.msra.mxu0 %v33
  %1848 = vmatprep.subr.mxu0 %v38
  %1849 = vmatpush1.msra.mxu0 %v37
  %1850 = vmatprep.subr.mxu0 %v42
  %1851 = vmatpush1.msra.mxu0 %v41
  %1852 = vmatprep.subr.mxu0 %v46
  %1853 = vmatpush1.msra.mxu0 %v45
  %1854 = vmatprep.subr.mxu0 %v50
  %1855 = vmatpush1.msra.mxu0 %v49
  %1856 = vmatprep.subr.mxu0 %v54
  %1857 = vmatpush1.msra.mxu0 %v53
  %1858 = vmatprep.subr.mxu0 %v58
  %1859 = vmatpush1.msra.mxu0 %v57
  %1860 = vmatprep.subr.mxu0 %v62
  %1861 = vmatpush1.msra.mxu0 %v61
  %1862 = vmatprep.subr.mxu0 %v66
  %1863 = vmatpush1.msra.mxu0 %v65
  %1864 = vmatprep.subr.mxu0 %v70
  %1865 = vmatpush1.msra.mxu0 %v69
  %1866 = vmatprep.subr.mxu0 %v74
  %1867 = vmatpush1.msra.mxu0 %v73
  %1868 = vmatprep.subr.mxu0 %v78
  %1869 = vmatpush1.msra.mxu0 %v77
  %1870 = vmatprep.subr.mxu0 %v82
  %1871 = vmatpush1.msra.mxu0 %v81
  %1872 = vmatprep.subr.mxu0 %v86
  %1873 = vmatpush1.msra.mxu0 %v85
  %1874 = vmatprep.subr.mxu0 0.0
  %1875 = vmatpush1.msra.mxu0 0.0
  %1876 = vmatprep.subr.mxu0 0.0
  %1877 = vmatpush1.msra.mxu0 0.0
  %1878 = vmatprep.subr.mxu0 0.0
  %1879 = vmatpush1.msra.mxu0 0.0
  %1880 = vmatprep.subr.mxu0 0.0
  %1881 = vmatpush1.msra.mxu0 0.0
  %1882 = vmatprep.subr.mxu0 0.0
  %1883 = vmatpush1.msra.mxu0 0.0
  %1884 = vmatprep.subr.mxu0 0.0
  %1885 = vmatpush1.msra.mxu0 0.0
  %1886 = vmatprep.subr.mxu0 0.0
  %1887 = vmatpush1.msra.mxu0 0.0
  %1888 = vmatprep.subr.mxu0 0.0
  %1889 = vmatpush1.msra.mxu0 0.0
  %1890 = vmatprep.subr.mxu0 0.0
  %1891 = vmatpush1.msra.mxu0 0.0
  %1892 = vmatprep.subr.mxu0 0.0
  %1893 = vmatpush1.msra.mxu0 0.0
  %1894 = vmatprep.subr.mxu0 0.0
  %1895 = vmatpush1.msra.mxu0 0.0
  %1896 = vmatprep.subr.mxu0 0.0
  %1897 = vmatpush1.msra.mxu0 0.0
  %1898 = vmatprep.subr.mxu0 0.0
  %1899 = vmatpush1.msra.mxu0 0.0
  %1900 = vmatprep.subr.mxu0 0.0
  %1901 = vmatpush1.msra.mxu0 0.0
  %1902 = vmatprep.subr.mxu0 0.0
  %1903 = vmatpush1.msra.mxu0 0.0
  %1904 = vmatprep.subr.mxu0 0.0
  %1905 = vmatpush1.msra.mxu0 0.0
  %1906 = vmatprep.mubr.f32.mxu0 0.0
  %1907 = vmatmul.mubr.f32.gmra.mrb[0].mxu0 %v1836
  %v1908 = vpop.f32.mrb[0].mxu0
  %v1909 = vadd.f32 0.0, %v1908
  %v1910 = vpop.f32.mrb[0].mxu0
  %v1911 = vadd.f32 0.0, %v1910
  %1912 = vmatprep.mubr.f32.mxu0 0.0
  %1913 = vmatmul.mubr.f32.gmra.mrb[0].mxu0 %v1837
  %v1914 = vpop.f32.mrb[0].mxu0
  %v1915 = vadd.f32 0.0, %v1914
  %v1916 = vpop.f32.mrb[0].mxu0
  %v1917 = vadd.f32 0.0, %v1916
  %1918 = vmatprep.mubr.f32.mxu0 0.0
  %1919 = vmatmul.mubr.f32.gmra.mrb[0].mxu0 %v1838
  %v1920 = vpop.f32.mrb[0].mxu0
  %v1921 = vadd.f32 0.0, %v1920
  %v1922 = vpop.f32.mrb[0].mxu0
  %v1923 = vadd.f32 0.0, %v1922
  %1924 = vdwg.mxu0
  %1925 = vmatprep.subr.mxu0 %v28
  %1926 = vmatpush1.msra.mxu0 %v27
  %1927 = vmatprep.subr.mxu0 %v32
  %1928 = vmatpush1.msra.mxu0 %v31
  %1929 = vmatprep.subr.mxu0 %v36
  %1930 = vmatpush1.msra.mxu0 %v35
  %1931 = vmatprep.subr.mxu0 %v40
  %1932 = vmatpush1.msra.mxu0 %v39
  %1933 = vmatprep.subr.mxu0 %v44
  %1934 = vmatpush1.msra.mxu0 %v43
  %1935 = vmatprep.subr.mxu0 %v48
  %1936 = vmatpush1.msra.mxu0 %v47
  %1937 = vmatprep.subr.mxu0 %v52
  %1938 = vmatpush1.msra.mxu0 %v51
  %1939 = vmatprep.subr.mxu0 %v56
  %1940 = vmatpush1.msra.mxu0 %v55
  %1941 = vmatprep.subr.mxu0 %v60
  %1942 = vmatpush1.msra.mxu0 %v59
  %1943 = vmatprep.subr.mxu0 %v64
  %1944 = vmatpush1.msra.mxu0 %v63
  %1945 = vmatprep.subr.mxu0 %v68
  %1946 = vmatpush1.msra.mxu0 %v67
  %1947 = vmatprep.subr.mxu0 %v72
  %1948 = vmatpush1.msra.mxu0 %v71
  %1949 = vmatprep.subr.mxu0 %v76
  %1950 = vmatpush1.msra.mxu0 %v75
  %1951 = vmatprep.subr.mxu0 %v80
  %1952 = vmatpush1.msra.mxu0 %v79
  %1953 = vmatprep.subr.mxu0 %v84
  %1954 = vmatpush1.msra.mxu0 %v83
  %1955 = vmatprep.subr.mxu0 %v88
  %1956 = vmatpush1.msra.mxu0 %v87
  %1957 = vmatprep.subr.mxu0 0.0
  %1958 = vmatpush1.msra.mxu0 0.0
  %1959 = vmatprep.subr.mxu0 0.0
  %1960 = vmatpush1.msra.mxu0 0.0
  %1961 = vmatprep.subr.mxu0 0.0
  %1962 = vmatpush1.msra.mxu0 0.0
  %1963 = vmatprep.subr.mxu0 0.0
  %1964 = vmatpush1.msra.mxu0 0.0
  %1965 = vmatprep.subr.mxu0 0.0
  %1966 = vmatpush1.msra.mxu0 0.0
  %1967 = vmatprep.subr.mxu0 0.0
  %1968 = vmatpush1.msra.mxu0 0.0
  %1969 = vmatprep.subr.mxu0 0.0
  %1970 = vmatpush1.msra.mxu0 0.0
  %1971 = vmatprep.subr.mxu0 0.0
  %1972 = vmatpush1.msra.mxu0 0.0
  %1973 = vmatprep.subr.mxu0 0.0
  %1974 = vmatpush1.msra.mxu0 0.0
  %1975 = vmatprep.subr.mxu0 0.0
  %1976 = vmatpush1.msra.mxu0 0.0
  %1977 = vmatprep.subr.mxu0 0.0
  %1978 = vmatpush1.msra.mxu0 0.0
  %1979 = vmatprep.subr.mxu0 0.0
  %1980 = vmatpush1.msra.mxu0 0.0
  %1981 = vmatprep.subr.mxu0 0.0
  %1982 = vmatpush1.msra.mxu0 0.0
  %1983 = vmatprep.subr.mxu0 0.0
  %1984 = vmatpush1.msra.mxu0 0.0
  %1985 = vmatprep.subr.mxu0 0.0
  %1986 = vmatpush1.msra.mxu0 0.0
  %1987 = vmatprep.subr.mxu0 0.0
  %1988 = vmatpush1.msra.mxu0 0.0
  %1989 = vmatprep.mubr.f32.mxu0 0.0
  %1990 = vmatmul.mubr.f32.gmra.mrb[0].mxu0 %v1836
  %v1991 = vpop.f32.mrb[0].mxu0
  %v1992 = vadd.f32 0.0, %v1991
  %v1993 = vpop.f32.mrb[0].mxu0
  %v1994 = vadd.f32 0.0, %v1993
  %1995 = vmatprep.mubr.f32.mxu0 0.0
  %1996 = vmatmul.mubr.f32.gmra.mrb[0].mxu0 %v1837
  %v1997 = vpop.f32.mrb[0].mxu0
  %v1998 = vadd.f32 0.0, %v1997
  %v1999 = vpop.f32.mrb[0].mxu0
  %v2000 = vadd.f32 0.0, %v1999
  %2001 = vmatprep.mubr.f32.mxu0 0.0
  %2002 = vmatmul.mubr.f32.gmra.mrb[0].mxu0 %v1838
  %v2003 = vpop.f32.mrb[0].mxu0
  %v2004 = vadd.f32 0.0, %v2003
  %v2005 = vpop.f32.mrb[0].mxu0
  %v2006 = vadd.f32 0.0, %v2005
  %2007 = vdwg.mxu0
  %v2008 = vadd.f32 %v406, %v1909
  %v2009 = vadd.f32 %v408, %v1911
  %v2010 = vadd.f32 %v615, %v1992
  %v2011 = vadd.f32 %v617, %v1994
  %v2012 = vadd.f32 %v412, %v1915
  %v2013 = vadd.f32 %v414, %v1917
  %v2014 = vadd.f32 %v621, %v1998
  %v2015 = vadd.f32 %v623, %v2000
  %v2016 = vadd.f32 %v418, %v1921
  %v2017 = vadd.f32 %v420, %v1923
  %v2018 = vadd.f32 %v627, %v2004
  %v2019 = vadd.f32 %v629, %v2006
  %v2020 = vmul.f32 %v2008, 0.5
  %v2021 = vmul.f32 %v2012, 0.5
  %v2022 = vmul.f32 %v2016, 0.5
  %v2023 = vtanh.pop %v2020
  %v2024 = vtanh.pop %v2021
  %v2025 = vtanh.pop %v2022
  %v2026 = vadd.f32 %v2023, 1.0
  %v2027 = vadd.f32 %v2024, 1.0
  %v2028 = vadd.f32 %v2025, 1.0
  %v2029 = vmul.f32 %v2026, 0.5
  %v2030 = vmul.f32 %v2027, 0.5
  %v2031 = vmul.f32 %v2028, 0.5
  %v2032 = vmul.f32 %v2009, 0.5
  %v2033 = vmul.f32 %v2013, 0.5
  %v2034 = vmul.f32 %v2017, 0.5
  %v2035 = vtanh.pop %v2032
  %v2036 = vtanh.pop %v2033
  %v2037 = vtanh.pop %v2034
  %v2038 = vadd.f32 %v2035, 1.0
  %v2039 = vadd.f32 %v2036, 1.0
  %v2040 = vadd.f32 %v2037, 1.0
  %v2041 = vmul.f32 %v2038, 0.5
  %v2042 = vmul.f32 %v2039, 0.5
  %v2043 = vmul.f32 %v2040, 0.5
  %v2044 = vtanh.pop %v2010
  %v2045 = vtanh.pop %v2014
  %v2046 = vtanh.pop %v2018
  %v2047 = vmul.f32 %v2011, 0.5
  %v2048 = vmul.f32 %v2015, 0.5
  %v2049 = vmul.f32 %v2019, 0.5
  %v2050 = vtanh.pop %v2047
  %v2051 = vtanh.pop %v2048
  %v2052 = vtanh.pop %v2049
  %v2053 = vadd.f32 %v2050, 1.0
  %v2054 = vadd.f32 %v2051, 1.0
  %v2055 = vadd.f32 %v2052, 1.0
  %v2056 = vmul.f32 %v2053, 0.5
  %v2057 = vmul.f32 %v2054, 0.5
  %v2058 = vmul.f32 %v2055, 0.5
  %v2059 = vmul.f32 %v2041, %v1830
  %v2060 = vmul.f32 %v2042, %v1831
  %v2061 = vmul.f32 %v2043, %v1832
  %v2062 = vmul.f32 %v2029, %v2044
  %v2063 = vmul.f32 %v2030, %v2045
  %v2064 = vmul.f32 %v2031, %v2046
  %v2065 = vadd.f32 %v2059, %v2062
  %v2066 = vadd.f32 %v2060, %v2063
  %v2067 = vadd.f32 %v2061, %v2064
  %v2068 = vtanh.pop %v2065
  %v2069 = vtanh.pop %v2066
  %v2070 = vtanh.pop %v2067
  %v2071 = vmul.f32 %v2056, %v2068
  %v2072 = vmul.f32 %v2057, %v2069
  %v2073 = vmul.f32 %v2058, %v2070
  %v2074 = vadd.f32 %v1839, %v2071
  %v2075 = vadd.f32 %v1840, %v2072
  %v2076 = vadd.f32 %v1841, %v2073
  %2077 = vmatprep.subr.mxu0 %v26
  %2078 = vmatpush1.msra.mxu0 %v25
  %2079 = vmatprep.subr.mxu0 %v30
  %2080 = vmatpush1.msra.mxu0 %v29
  %2081 = vmatprep.subr.mxu0 %v34
  %2082 = vmatpush1.msra.mxu0 %v33
  %2083 = vmatprep.subr.mxu0 %v38
  %2084 = vmatpush1.msra.mxu0 %v37
  %2085 = vmatprep.subr.mxu0 %v42
  %2086 = vmatpush1.msra.mxu0 %v41
  %2087 = vmatprep.subr.mxu0 %v46
  %2088 = vmatpush1.msra.mxu0 %v45
  %2089 = vmatprep.subr.mxu0 %v50
  %2090 = vmatpush1.msra.mxu0 %v49
  %2091 = vmatprep.subr.mxu0 %v54
  %2092 = vmatpush1.msra.mxu0 %v53
  %2093 = vmatprep.subr.mxu0 %v58
  %2094 = vmatpush1.msra.mxu0 %v57
  %2095 = vmatprep.subr.mxu0 %v62
  %2096 = vmatpush1.msra.mxu0 %v61
  %2097 = vmatprep.subr.mxu0 %v66
  %2098 = vmatpush1.msra.mxu0 %v65
  %2099 = vmatprep.subr.mxu0 %v70
  %2100 = vmatpush1.msra.mxu0 %v69
  %2101 = vmatprep.subr.mxu0 %v74
  %2102 = vmatpush1.msra.mxu0 %v73
  %2103 = vmatprep.subr.mxu0 %v78
  %2104 = vmatpush1.msra.mxu0 %v77
  %2105 = vmatprep.subr.mxu0 %v82
  %2106 = vmatpush1.msra.mxu0 %v81
  %2107 = vmatprep.subr.mxu0 %v86
  %2108 = vmatpush1.msra.mxu0 %v85
  %2109 = vmatprep.subr.mxu0 0.0
  %2110 = vmatpush1.msra.mxu0 0.0
  %2111 = vmatprep.subr.mxu0 0.0
  %2112 = vmatpush1.msra.mxu0 0.0
  %2113 = vmatprep.subr.mxu0 0.0
  %2114 = vmatpush1.msra.mxu0 0.0
  %2115 = vmatprep.subr.mxu0 0.0
  %2116 = vmatpush1.msra.mxu0 0.0
  %2117 = vmatprep.subr.mxu0 0.0
  %2118 = vmatpush1.msra.mxu0 0.0
  %2119 = vmatprep.subr.mxu0 0.0
  %2120 = vmatpush1.msra.mxu0 0.0
  %2121 = vmatprep.subr.mxu0 0.0
  %2122 = vmatpush1.msra.mxu0 0.0
  %2123 = vmatprep.subr.mxu0 0.0
  %2124 = vmatpush1.msra.mxu0 0.0
  %2125 = vmatprep.subr.mxu0 0.0
  %2126 = vmatpush1.msra.mxu0 0.0
  %2127 = vmatprep.subr.mxu0 0.0
  %2128 = vmatpush1.msra.mxu0 0.0
  %2129 = vmatprep.subr.mxu0 0.0
  %2130 = vmatpush1.msra.mxu0 0.0
  %2131 = vmatprep.subr.mxu0 0.0
  %2132 = vmatpush1.msra.mxu0 0.0
  %2133 = vmatprep.subr.mxu0 0.0
  %2134 = vmatpush1.msra.mxu0 0.0
  %2135 = vmatprep.subr.mxu0 0.0
  %2136 = vmatpush1.msra.mxu0 0.0
  %2137 = vmatprep.subr.mxu0 0.0
  %2138 = vmatpush1.msra.mxu0 0.0
  %2139 = vmatprep.subr.mxu0 0.0
  %2140 = vmatpush1.msra.mxu0 0.0
  %2141 = vmatprep.mubr.f32.mxu0 0.0
  %2142 = vmatmul.mubr.f32.gmra.mrb[0].mxu0 %v2071
  %v2143 = vpop.f32.mrb[0].mxu0
  %v2144 = vadd.f32 0.0, %v2143
  %v2145 = vpop.f32.mrb[0].mxu0
  %v2146 = vadd.f32 0.0, %v2145
  %2147 = vmatprep.mubr.f32.mxu0 0.0
  %2148 = vmatmul.mubr.f32.gmra.mrb[0].mxu0 %v2072
  %v2149 = vpop.f32.mrb[0].mxu0
  %v2150 = vadd.f32 0.0, %v2149
  %v2151 = vpop.f32.mrb[0].mxu0
  %v2152 = vadd.f32 0.0, %v2151
  %2153 = vmatprep.mubr.f32.mxu0 0.0
  %2154 = vmatmul.mubr.f32.gmra.mrb[0].mxu0 %v2073
  %v2155 = vpop.f32.mrb[0].mxu0
  %v2156 = vadd.f32 0.0, %v2155
  %v2157 = vpop.f32.mrb[0].mxu0
  %v2158 = vadd.f32 0.0, %v2157
  %2159 = vdwg.mxu0
  %2160 = vmatprep.subr.mxu0 %v28
  %2161 = vmatpush1.msra.mxu0 %v27
  %2162 = vmatprep.subr.mxu0 %v32
  %2163 = vmatpush1.msra.mxu0 %v31
  %2164 = vmatprep.subr.mxu0 %v36
  %2165 = vmatpush1.msra.mxu0 %v35
  %2166 = vmatprep.subr.mxu0 %v40
  %2167 = vmatpush1.msra.mxu0 %v39
  %2168 = vmatprep.subr.mxu0 %v44
  %2169 = vmatpush1.msra.mxu0 %v43
  %2170 = vmatprep.subr.mxu0 %v48
  %2171 = vmatpush1.msra.mxu0 %v47
  %2172 = vmatprep.subr.mxu0 %v52
  %2173 = vmatpush1.msra.mxu0 %v51
  %2174 = vmatprep.subr.mxu0 %v56
  %2175 = vmatpush1.msra.mxu0 %v55
  %2176 = vmatprep.subr.mxu0 %v60
  %2177 = vmatpush1.msra.mxu0 %v59
  %2178 = vmatprep.subr.mxu0 %v64
  %2179 = vmatpush1.msra.mxu0 %v63
  %2180 = vmatprep.subr.mxu0 %v68
  %2181 = vmatpush1.msra.mxu0 %v67
  %2182 = vmatprep.subr.mxu0 %v72
  %2183 = vmatpush1.msra.mxu0 %v71
  %2184 = vmatprep.subr.mxu0 %v76
  %2185 = vmatpush1.msra.mxu0 %v75
  %2186 = vmatprep.subr.mxu0 %v80
  %2187 = vmatpush1.msra.mxu0 %v79
  %2188 = vmatprep.subr.mxu0 %v84
  %2189 = vmatpush1.msra.mxu0 %v83
  %2190 = vmatprep.subr.mxu0 %v88
  %2191 = vmatpush1.msra.mxu0 %v87
  %2192 = vmatprep.subr.mxu0 0.0
  %2193 = vmatpush1.msra.mxu0 0.0
  %2194 = vmatprep.subr.mxu0 0.0
  %2195 = vmatpush1.msra.mxu0 0.0
  %2196 = vmatprep.subr.mxu0 0.0
  %2197 = vmatpush1.msra.mxu0 0.0
  %2198 = vmatprep.subr.mxu0 0.0
  %2199 = vmatpush1.msra.mxu0 0.0
  %2200 = vmatprep.subr.mxu0 0.0
  %2201 = vmatpush1.msra.mxu0 0.0
  %2202 = vmatprep.subr.mxu0 0.0
  %2203 = vmatpush1.msra.mxu0 0.0
  %2204 = vmatprep.subr.mxu0 0.0
  %2205 = vmatpush1.msra.mxu0 0.0
  %2206 = vmatprep.subr.mxu0 0.0
  %2207 = vmatpush1.msra.mxu0 0.0
  %2208 = vmatprep.subr.mxu0 0.0
  %2209 = vmatpush1.msra.mxu0 0.0
  %2210 = vmatprep.subr.mxu0 0.0
  %2211 = vmatpush1.msra.mxu0 0.0
  %2212 = vmatprep.subr.mxu0 0.0
  %2213 = vmatpush1.msra.mxu0 0.0
  %2214 = vmatprep.subr.mxu0 0.0
  %2215 = vmatpush1.msra.mxu0 0.0
  %2216 = vmatprep.subr.mxu0 0.0
  %2217 = vmatpush1.msra.mxu0 0.0
  %2218 = vmatprep.subr.mxu0 0.0
  %2219 = vmatpush1.msra.mxu0 0.0
  %2220 = vmatprep.subr.mxu0 0.0
  %2221 = vmatpush1.msra.mxu0 0.0
  %2222 = vmatprep.subr.mxu0 0.0
  %2223 = vmatpush1.msra.mxu0 0.0
  %2224 = vmatprep.mubr.f32.mxu0 0.0
  %2225 = vmatmul.mubr.f32.gmra.mrb[0].mxu0 %v2071
  %v2226 = vpop.f32.mrb[0].mxu0
  %v2227 = vadd.f32 0.0, %v2226
  %v2228 = vpop.f32.mrb[0].mxu0
  %v2229 = vadd.f32 0.0, %v2228
  %2230 = vmatprep.mubr.f32.mxu0 0.0
  %2231 = vmatmul.mubr.f32.gmra.mrb[0].mxu0 %v2072
  %v2232 = vpop.f32.mrb[0].mxu0
  %v2233 = vadd.f32 0.0, %v2232
  %v2234 = vpop.f32.mrb[0].mxu0
  %v2235 = vadd.f32 0.0, %v2234
  %2236 = vmatprep.mubr.f32.mxu0 0.0
  %2237 = vmatmul.mubr.f32.gmra.mrb[0].mxu0 %v2073
  %v2238 = vpop.f32.mrb[0].mxu0
  %v2239 = vadd.f32 0.0, %v2238
  %v2240 = vpop.f32.mrb[0].mxu0
  %v2241 = vadd.f32 0.0, %v2240
  %2242 = vdwg.mxu0
  %v2243 = vadd.f32 %v424, %v2144
  %v2244 = vadd.f32 %v426, %v2146
  %v2245 = vadd.f32 %v633, %v2227
  %v2246 = vadd.f32 %v635, %v2229
  %v2247 = vadd.f32 %v430, %v2150
  %v2248 = vadd.f32 %v432, %v2152
  %v2249 = vadd.f32 %v639, %v2233
  %v2250 = vadd.f32 %v641, %v2235
  %v2251 = vadd.f32 %v436, %v2156
  %v2252 = vadd.f32 %v438, %v2158
  %v2253 = vadd.f32 %v645, %v2239
  %v2254 = vadd.f32 %v647, %v2241
  %v2255 = vmul.f32 %v2243, 0.5
  %v2256 = vmul.f32 %v2247, 0.5
  %v2257 = vmul.f32 %v2251, 0.5
  %v2258 = vtanh.pop %v2255
  %v2259 = vtanh.pop %v2256
  %v2260 = vtanh.pop %v2257
  %v2261 = vadd.f32 %v2258, 1.0
  %v2262 = vadd.f32 %v2259, 1.0
  %v2263 = vadd.f32 %v2260, 1.0
  %v2264 = vmul.f32 %v2261, 0.5
  %v2265 = vmul.f32 %v2262, 0.5
  %v2266 = vmul.f32 %v2263, 0.5
  %v2267 = vmul.f32 %v2244, 0.5
  %v2268 = vmul.f32 %v2248, 0.5
  %v2269 = vmul.f32 %v2252, 0.5
  %v2270 = vtanh.pop %v2267
  %v2271 = vtanh.pop %v2268
  %v2272 = vtanh.pop %v2269
  %v2273 = vadd.f32 %v2270, 1.0
  %v2274 = vadd.f32 %v2271, 1.0
  %v2275 = vadd.f32 %v2272, 1.0
  %v2276 = vmul.f32 %v2273, 0.5
  %v2277 = vmul.f32 %v2274, 0.5
  %v2278 = vmul.f32 %v2275, 0.5
  %v2279 = vtanh.pop %v2245
  %v2280 = vtanh.pop %v2249
  %v2281 = vtanh.pop %v2253
  %v2282 = vmul.f32 %v2246, 0.5
  %v2283 = vmul.f32 %v2250, 0.5
  %v2284 = vmul.f32 %v2254, 0.5
  %v2285 = vtanh.pop %v2282
  %v2286 = vtanh.pop %v2283
  %v2287 = vtanh.pop %v2284
  %v2288 = vadd.f32 %v2285, 1.0
  %v2289 = vadd.f32 %v2286, 1.0
  %v2290 = vadd.f32 %v2287, 1.0
  %v2291 = vmul.f32 %v2288, 0.5
  %v2292 = vmul.f32 %v2289, 0.5
  %v2293 = vmul.f32 %v2290, 0.5
  %v2294 = vmul.f32 %v2276, %v2065
  %v2295 = vmul.f32 %v2277, %v2066
  %v2296 = vmul.f32 %v2278, %v2067
  %v2297 = vmul.f32 %v2264, %v2279
  %v2298 = vmul.f32 %v2265, %v2280
  %v2299 = vmul.f32 %v2266, %v2281
  %v2300 = vadd.f32 %v2294, %v2297
  %v2301 = vadd.f32 %v2295, %v2298
  %v2302 = vadd.f32 %v2296, %v2299
  %v2303 = vtanh.pop %v2300
  %v2304 = vtanh.pop %v2301
  %v2305 = vtanh.pop %v2302
  %v2306 = vmul.f32 %v2291, %v2303
  %v2307 = vmul.f32 %v2292, %v2304
  %v2308 = vmul.f32 %v2293, %v2305
  %v2309 = vadd.f32 %v2074, %v2306
  %v2310 = vadd.f32 %v2075, %v2307
  %v2311 = vadd.f32 %v2076, %v2308
  %2312 = vmatprep.subr.mxu0 %v26
  %2313 = vmatpush1.msra.mxu0 %v25
  %2314 = vmatprep.subr.mxu0 %v30
  %2315 = vmatpush1.msra.mxu0 %v29
  %2316 = vmatprep.subr.mxu0 %v34
  %2317 = vmatpush1.msra.mxu0 %v33
  %2318 = vmatprep.subr.mxu0 %v38
  %2319 = vmatpush1.msra.mxu0 %v37
  %2320 = vmatprep.subr.mxu0 %v42
  %2321 = vmatpush1.msra.mxu0 %v41
  %2322 = vmatprep.subr.mxu0 %v46
  %2323 = vmatpush1.msra.mxu0 %v45
  %2324 = vmatprep.subr.mxu0 %v50
  %2325 = vmatpush1.msra.mxu0 %v49
  %2326 = vmatprep.subr.mxu0 %v54
  %2327 = vmatpush1.msra.mxu0 %v53
  %2328 = vmatprep.subr.mxu0 %v58
  %2329 = vmatpush1.msra.mxu0 %v57
  %2330 = vmatprep.subr.mxu0 %v62
  %2331 = vmatpush1.msra.mxu0 %v61
  %2332 = vmatprep.subr.mxu0 %v66
  %2333 = vmatpush1.msra.mxu0 %v65
  %2334 = vmatprep.subr.mxu0 %v70
  %2335 = vmatpush1.msra.mxu0 %v69
  %2336 = vmatprep.subr.mxu0 %v74
  %2337 = vmatpush1.msra.mxu0 %v73
  %2338 = vmatprep.subr.mxu0 %v78
  %2339 = vmatpush1.msra.mxu0 %v77
  %2340 = vmatprep.subr.mxu0 %v82
  %2341 = vmatpush1.msra.mxu0 %v81
  %2342 = vmatprep.subr.mxu0 %v86
  %2343 = vmatpush1.msra.mxu0 %v85
  %2344 = vmatprep.subr.mxu0 0.0
  %2345 = vmatpush1.msra.mxu0 0.0
  %2346 = vmatprep.subr.mxu0 0.0
  %2347 = vmatpush1.msra.mxu0 0.0
  %2348 = vmatprep.subr.mxu0 0.0
  %2349 = vmatpush1.msra.mxu0 0.0
  %2350 = vmatprep.subr.mxu0 0.0
  %2351 = vmatpush1.msra.mxu0 0.0
  %2352 = vmatprep.subr.mxu0 0.0
  %2353 = vmatpush1.msra.mxu0 0.0
  %2354 = vmatprep.subr.mxu0 0.0
  %2355 = vmatpush1.msra.mxu0 0.0
  %2356 = vmatprep.subr.mxu0 0.0
  %2357 = vmatpush1.msra.mxu0 0.0
  %2358 = vmatprep.subr.mxu0 0.0
  %2359 = vmatpush1.msra.mxu0 0.0
  %2360 = vmatprep.subr.mxu0 0.0
  %2361 = vmatpush1.msra.mxu0 0.0
  %2362 = vmatprep.subr.mxu0 0.0
  %2363 = vmatpush1.msra.mxu0 0.0
  %2364 = vmatprep.subr.mxu0 0.0
  %2365 = vmatpush1.msra.mxu0 0.0
  %2366 = vmatprep.subr.mxu0 0.0
  %2367 = vmatpush1.msra.mxu0 0.0
  %2368 = vmatprep.subr.mxu0 0.0
  %2369 = vmatpush1.msra.mxu0 0.0
  %2370 = vmatprep.subr.mxu0 0.0
  %2371 = vmatpush1.msra.mxu0 0.0
  %2372 = vmatprep.subr.mxu0 0.0
  %2373 = vmatpush1.msra.mxu0 0.0
  %2374 = vmatprep.subr.mxu0 0.0
  %2375 = vmatpush1.msra.mxu0 0.0
  %2376 = vmatprep.mubr.f32.mxu0 0.0
  %2377 = vmatmul.mubr.f32.gmra.mrb[0].mxu0 %v2306
  %v2378 = vpop.f32.mrb[0].mxu0
  %v2379 = vadd.f32 0.0, %v2378
  %v2380 = vpop.f32.mrb[0].mxu0
  %v2381 = vadd.f32 0.0, %v2380
  %2382 = vmatprep.mubr.f32.mxu0 0.0
  %2383 = vmatmul.mubr.f32.gmra.mrb[0].mxu0 %v2307
  %v2384 = vpop.f32.mrb[0].mxu0
  %v2385 = vadd.f32 0.0, %v2384
  %v2386 = vpop.f32.mrb[0].mxu0
  %v2387 = vadd.f32 0.0, %v2386
  %2388 = vmatprep.mubr.f32.mxu0 0.0
  %2389 = vmatmul.mubr.f32.gmra.mrb[0].mxu0 %v2308
  %v2390 = vpop.f32.mrb[0].mxu0
  %v2391 = vadd.f32 0.0, %v2390
  %v2392 = vpop.f32.mrb[0].mxu0
  %v2393 = vadd.f32 0.0, %v2392
  %2394 = vdwg.mxu0
  %2395 = vmatprep.subr.mxu0 %v28
  %2396 = vmatpush1.msra.mxu0 %v27
  %2397 = vmatprep.subr.mxu0 %v32
  %2398 = vmatpush1.msra.mxu0 %v31
  %2399 = vmatprep.subr.mxu0 %v36
  %2400 = vmatpush1.msra.mxu0 %v35
  %2401 = vmatprep.subr.mxu0 %v40
  %2402 = vmatpush1.msra.mxu0 %v39
  %2403 = vmatprep.subr.mxu0 %v44
  %2404 = vmatpush1.msra.mxu0 %v43
  %2405 = vmatprep.subr.mxu0 %v48
  %2406 = vmatpush1.msra.mxu0 %v47
  %2407 = vmatprep.subr.mxu0 %v52
  %2408 = vmatpush1.msra.mxu0 %v51
  %2409 = vmatprep.subr.mxu0 %v56
  %2410 = vmatpush1.msra.mxu0 %v55
  %2411 = vmatprep.subr.mxu0 %v60
  %2412 = vmatpush1.msra.mxu0 %v59
  %2413 = vmatprep.subr.mxu0 %v64
  %2414 = vmatpush1.msra.mxu0 %v63
  %2415 = vmatprep.subr.mxu0 %v68
  %2416 = vmatpush1.msra.mxu0 %v67
  %2417 = vmatprep.subr.mxu0 %v72
  %2418 = vmatpush1.msra.mxu0 %v71
  %2419 = vmatprep.subr.mxu0 %v76
  %2420 = vmatpush1.msra.mxu0 %v75
  %2421 = vmatprep.subr.mxu0 %v80
  %2422 = vmatpush1.msra.mxu0 %v79
  %2423 = vmatprep.subr.mxu0 %v84
  %2424 = vmatpush1.msra.mxu0 %v83
  %2425 = vmatprep.subr.mxu0 %v88
  %2426 = vmatpush1.msra.mxu0 %v87
  %2427 = vmatprep.subr.mxu0 0.0
  %2428 = vmatpush1.msra.mxu0 0.0
  %2429 = vmatprep.subr.mxu0 0.0
  %2430 = vmatpush1.msra.mxu0 0.0
  %2431 = vmatprep.subr.mxu0 0.0
  %2432 = vmatpush1.msra.mxu0 0.0
  %2433 = vmatprep.subr.mxu0 0.0
  %2434 = vmatpush1.msra.mxu0 0.0
  %2435 = vmatprep.subr.mxu0 0.0
  %2436 = vmatpush1.msra.mxu0 0.0
  %2437 = vmatprep.subr.mxu0 0.0
  %2438 = vmatpush1.msra.mxu0 0.0
  %2439 = vmatprep.subr.mxu0 0.0
  %2440 = vmatpush1.msra.mxu0 0.0
  %2441 = vmatprep.subr.mxu0 0.0
  %2442 = vmatpush1.msra.mxu0 0.0
  %2443 = vmatprep.subr.mxu0 0.0
  %2444 = vmatpush1.msra.mxu0 0.0
  %2445 = vmatprep.subr.mxu0 0.0
  %2446 = vmatpush1.msra.mxu0 0.0
  %2447 = vmatprep.subr.mxu0 0.0
  %2448 = vmatpush1.msra.mxu0 0.0
  %2449 = vmatprep.subr.mxu0 0.0
  %2450 = vmatpush1.msra.mxu0 0.0
  %2451 = vmatprep.subr.mxu0 0.0
  %2452 = vmatpush1.msra.mxu0 0.0
  %2453 = vmatprep.subr.mxu0 0.0
  %2454 = vmatpush1.msra.mxu0 0.0
  %2455 = vmatprep.subr.mxu0 0.0
  %2456 = vmatpush1.msra.mxu0 0.0
  %2457 = vmatprep.subr.mxu0 0.0
  %2458 = vmatpush1.msra.mxu0 0.0
  %2459 = vmatprep.mubr.f32.mxu0 0.0
  %2460 = vmatmul.mubr.f32.gmra.mrb[0].mxu0 %v2306
  %v2461 = vpop.f32.mrb[0].mxu0
  %v2462 = vadd.f32 0.0, %v2461
  %v2463 = vpop.f32.mrb[0].mxu0
  %v2464 = vadd.f32 0.0, %v2463
  %2465 = vmatprep.mubr.f32.mxu0 0.0
  %2466 = vmatmul.mubr.f32.gmra.mrb[0].mxu0 %v2307
  %v2467 = vpop.f32.mrb[0].mxu0
  %v2468 = vadd.f32 0.0, %v2467
  %v2469 = vpop.f32.mrb[0].mxu0
  %v2470 = vadd.f32 0.0, %v2469
  %2471 = vmatprep.mubr.f32.mxu0 0.0
  %2472 = vmatmul.mubr.f32.gmra.mrb[0].mxu0 %v2308
  %v2473 = vpop.f32.mrb[0].mxu0
  %v2474 = vadd.f32 0.0, %v2473
  %v2475 = vpop.f32.mrb[0].mxu0
  %v2476 = vadd.f32 0.0, %v2475
  %2477 = vdwg.mxu0
  %v2478 = vadd.f32 %v442, %v2379
  %v2479 = vadd.f32 %v444, %v2381
  %v2480 = vadd.f32 %v651, %v2462
  %v2481 = vadd.f32 %v653, %v2464
  %v2482 = vadd.f32 %v448, %v2385
  %v2483 = vadd.f32 %v450, %v2387
  %v2484 = vadd.f32 %v657, %v2468
  %v2485 = vadd.f32 %v659, %v2470
  %v2486 = vadd.f32 %v454, %v2391
  %v2487 = vadd.f32 %v456, %v2393
  %v2488 = vadd.f32 %v663, %v2474
  %v2489 = vadd.f32 %v665, %v2476
  %v2490 = vmul.f32 %v2478, 0.5
  %v2491 = vmul.f32 %v2482, 0.5
  %v2492 = vmul.f32 %v2486, 0.5
  %v2493 = vtanh.pop %v2490
  %v2494 = vtanh.pop %v2491
  %v2495 = vtanh.pop %v2492
  %v2496 = vadd.f32 %v2493, 1.0
  %v2497 = vadd.f32 %v2494, 1.0
  %v2498 = vadd.f32 %v2495, 1.0
  %v2499 = vmul.f32 %v2496, 0.5
  %v2500 = vmul.f32 %v2497, 0.5
  %v2501 = vmul.f32 %v2498, 0.5
  %v2502 = vmul.f32 %v2479, 0.5
  %v2503 = vmul.f32 %v2483, 0.5
  %v2504 = vmul.f32 %v2487, 0.5
  %v2505 = vtanh.pop %v2502
  %v2506 = vtanh.pop %v2503
  %v2507 = vtanh.pop %v2504
  %v2508 = vadd.f32 %v2505, 1.0
  %v2509 = vadd.f32 %v2506, 1.0
  %v2510 = vadd.f32 %v2507, 1.0
  %v2511 = vmul.f32 %v2508, 0.5
  %v2512 = vmul.f32 %v2509, 0.5
  %v2513 = vmul.f32 %v2510, 0.5
  %v2514 = vtanh.pop %v2480
  %v2515 = vtanh.pop %v2484
  %v2516 = vtanh.pop %v2488
  %v2517 = vmul.f32 %v2481, 0.5
  %v2518 = vmul.f32 %v2485, 0.5
  %v2519 = vmul.f32 %v2489, 0.5
  %v2520 = vtanh.pop %v2517
  %v2521 = vtanh.pop %v2518
  %v2522 = vtanh.pop %v2519
  %v2523 = vadd.f32 %v2520, 1.0
  %v2524 = vadd.f32 %v2521, 1.0
  %v2525 = vadd.f32 %v2522, 1.0
  %v2526 = vmul.f32 %v2523, 0.5
  %v2527 = vmul.f32 %v2524, 0.5
  %v2528 = vmul.f32 %v2525, 0.5
  %v2529 = vmul.f32 %v2511, %v2300
  %v2530 = vmul.f32 %v2512, %v2301
  %v2531 = vmul.f32 %v2513, %v2302
  %v2532 = vmul.f32 %v2499, %v2514
  %v2533 = vmul.f32 %v2500, %v2515
  %v2534 = vmul.f32 %v2501, %v2516
  %v2535 = vadd.f32 %v2529, %v2532
  %v2536 = vadd.f32 %v2530, %v2533
  %v2537 = vadd.f32 %v2531, %v2534
  %v2538 = vtanh.pop %v2535
  %v2539 = vtanh.pop %v2536
  %v2540 = vtanh.pop %v2537
  %v2541 = vmul.f32 %v2526, %v2538
  %v2542 = vmul.f32 %v2527, %v2539
  %v2543 = vmul.f32 %v2528, %v2540
  %v2544 = vadd.f32 %v2309, %v2541
  %v2545 = vadd.f32 %v2310, %v2542
  %v2546 = vadd.f32 %v2311, %v2543
  %v2547 = vmul.f32 %v2544, 0.125
  %v2548 = vmul.f32 %v2545, 0.125
  %v2549 = vmul.f32 %v2546, 0.125
  %v2550 = vld [vmem:[%s4] sm:$0xff]
  %v2551 = vld [vmem:[%s4 + $0x8] sm:$0xff]
  %v2552 = vld [vmem:[%s4 + $0x10] sm:$0xff]
  %v2553 = vld [vmem:[%s4 + $0x18] sm:$0xff]
  %v2554 = vld [vmem:[%s4 + $0x20] sm:$0xff]
  %v2555 = vld [vmem:[%s4 + $0x28] sm:$0xff]
  %v2556 = vld [vmem:[%s4 + $0x30] sm:$0xff]
  %v2557 = vld [vmem:[%s4 + $0x38] sm:$0xff]
  %v2558 = vld [vmem:[%s4 + $0x40] sm:$0xff]
  %v2559 = vld [vmem:[%s4 + $0x48] sm:$0xff]
  %v2560 = vld [vmem:[%s4 + $0x50] sm:$0xff]
  %v2561 = vld [vmem:[%s4 + $0x58] sm:$0xff]
  %v2562 = vld [vmem:[%s4 + $0x60] sm:$0xff]
  %v2563 = vld [vmem:[%s4 + $0x68] sm:$0xff]
  %v2564 = vld [vmem:[%s4 + $0x70] sm:$0xff]
  %v2565 = vld [vmem:[%s4 + $0x78] sm:$0xff]
  %2566 = vmatprep.subr.mxu0 0.0
  %2567 = vmatpush1.msra.mxu0 %v2550
  %2568 = vmatprep.subr.mxu0 0.0
  %2569 = vmatpush1.msra.mxu0 %v2551
  %2570 = vmatprep.subr.mxu0 0.0
  %2571 = vmatpush1.msra.mxu0 %v2552
  %2572 = vmatprep.subr.mxu0 0.0
  %2573 = vmatpush1.msra.mxu0 %v2553
  %2574 = vmatprep.subr.mxu0 0.0
  %2575 = vmatpush1.msra.mxu0 %v2554
  %2576 = vmatprep.subr.mxu0 0.0
  %2577 = vmatpush1.msra.mxu0 %v2555
  %2578 = vmatprep.subr.mxu0 0.0
  %2579 = vmatpush1.msra.mxu0 %v2556
  %2580 = vmatprep.subr.mxu0 0.0
  %2581 = vmatpush1.msra.mxu0 %v2557
  %2582 = vmatprep.subr.mxu0 0.0
  %2583 = vmatpush1.msra.mxu0 %v2558
  %2584 = vmatprep.subr.mxu0 0.0
  %2585 = vmatpush1.msra.mxu0 %v2559
  %2586 = vmatprep.subr.mxu0 0.0
  %2587 = vmatpush1.msra.mxu0 %v2560
  %2588 = vmatprep.subr.mxu0 0.0
  %2589 = vmatpush1.msra.mxu0 %v2561
  %2590 = vmatprep.subr.mxu0 0.0
  %2591 = vmatpush1.msra.mxu0 %v2562
  %2592 = vmatprep.subr.mxu0 0.0
  %2593 = vmatpush1.msra.mxu0 %v2563
  %2594 = vmatprep.subr.mxu0 0.0
  %2595 = vmatpush1.msra.mxu0 %v2564
  %2596 = vmatprep.subr.mxu0 0.0
  %2597 = vmatpush1.msra.mxu0 %v2565
  %2598 = vmatprep.subr.mxu0 0.0
  %2599 = vmatpush1.msra.mxu0 0.0
  %2600 = vmatprep.subr.mxu0 0.0
  %2601 = vmatpush1.msra.mxu0 0.0
  %2602 = vmatprep.subr.mxu0 0.0
  %2603 = vmatpush1.msra.mxu0 0.0
  %2604 = vmatprep.subr.mxu0 0.0
  %2605 = vmatpush1.msra.mxu0 0.0
  %2606 = vmatprep.subr.mxu0 0.0
  %2607 = vmatpush1.msra.mxu0 0.0
  %2608 = vmatprep.subr.mxu0 0.0
  %2609 = vmatpush1.msra.mxu0 0.0
  %2610 = vmatprep.subr.mxu0 0.0
  %2611 = vmatpush1.msra.mxu0 0.0
  %2612 = vmatprep.subr.mxu0 0.0
  %2613 = vmatpush1.msra.mxu0 0.0
  %2614 = vmatprep.subr.mxu0 0.0
  %2615 = vmatpush1.msra.mxu0 0.0
  %2616 = vmatprep.subr.mxu0 0.0
  %2617 = vmatpush1.msra.mxu0 0.0
  %2618 = vmatprep.subr.mxu0 0.0
  %2619 = vmatpush1.msra.mxu0 0.0
  %2620 = vmatprep.subr.mxu0 0.0
  %2621 = vmatpush1.msra.mxu0 0.0
  %2622 = vmatprep.subr.mxu0 0.0
  %2623 = vmatpush1.msra.mxu0 0.0
  %2624 = vmatprep.subr.mxu0 0.0
  %2625 = vmatpush1.msra.mxu0 0.0
  %2626 = vmatprep.subr.mxu0 0.0
  %2627 = vmatpush1.msra.mxu0 0.0
  %2628 = vmatprep.subr.mxu0 0.0
  %2629 = vmatpush1.msra.mxu0 0.0
  %2630 = vmatprep.mubr.f32.mxu0 0.0
  %2631 = vmatmul.mubr.f32.gmra.mrb[0].mxu0 %v2547
  %v2632 = vpop.f32.mrb[0].mxu0
  %v2633 = vadd.f32 0.0, %v2632
  %v2634 = vpop.f32.mrb[0].mxu0
  %2635 = vmatprep.mubr.f32.mxu0 0.0
  %2636 = vmatmul.mubr.f32.gmra.mrb[0].mxu0 %v2548
  %v2637 = vpop.f32.mrb[0].mxu0
  %v2638 = vadd.f32 0.0, %v2637
  %v2639 = vpop.f32.mrb[0].mxu0
  %2640 = vmatprep.mubr.f32.mxu0 0.0
  %2641 = vmatmul.mubr.f32.gmra.mrb[0].mxu0 %v2549
  %v2642 = vpop.f32.mrb[0].mxu0
  %v2643 = vadd.f32 0.0, %v2642
  %v2644 = vpop.f32.mrb[0].mxu0
  %2645 = vdwg.mxu0
  %v2646 = vld [vmem:[#allocation2] sm:$0x1]
  %2648 = vrot.lane.b32.xlu0 %v2638, 127
  %v2649 = vpop.permute.xlu0 %2648
  %v2651 = vadd.f32 %v2633, %v2649
  %v2653 = vlaneseq
  %v2654 = vshrl.u32 %v2653, 7
  %v2655 = vsub.s32 0, %v2654
  %v2656 = vrot.slane %v2646, %v2655
  %v2658 = vadd.f32 %v2651, %v2656
  %v2659 = vmax.f32 %v2658, 0.0
  %2661 = vrot.lane.b32.xlu0 %v2643, 127
  %v2662 = vpop.permute.xlu0 %2661
  %v2664 = vadd.f32 %v2633, %v2662
  %v2665 = vadd.f32 %v2664, %v2656
  %v2666 = vmax.f32 %v2665, 0.0
  %v2667 = vsub.f32 %v2659, %v2666
  %vm2668 = vcmask 7168
  %2669 = vst.msk [vmem:[%s6] sm:$0xff] %vm2668, %v2667
  // Predicated region
  $region26: #{ranking_model_forward.1} parent=0 // pred_check
    _
  $region27: #{ranking_model_forward.1} parent=0 // pred_check_branch
    %2671 = sbr.rel (0) target = $region29
  $region28: #{ranking_model_forward.1} parent=0 // pred_region
    _
  $region29: #{ranking_model_forward.1} parent=0 // pred_fallthru
    _
  // Predicated region
  $region30: #{ranking_model_forward.1} parent=0 // pred_check
    _
  $region31: #{ranking_model_forward.1} parent=0 // pred_check_branch
    %2673 = sbr.rel (0) target = $region33
  $region32: #{ranking_model_forward.1} parent=0 // pred_region
    _
  $region33: #{ranking_model_forward.1} parent=0 // pred_fallthru
    _

</llo_original>
